<compile_context>
chip_gen: v7x
topology: tpu7x:2x2x1
jax: 0.10.0
libtpu: 0.0.40
codegen_flags: <defaults>
</compile_context>

<pallas_src>
import functools

import numpy as np
import jax
import jax.numpy as jnp
from jax.experimental import pallas as pl
from jax.experimental.pallas import tpu as pltpu

G = 8                              # |D4| = 8
LANES = 128                        # channel padding for lane-dense stores
VMEM_LIMIT = 48 * 1024 * 1024      # < 64 MiB physical on v7x; plenty of slack on v5e/v6e


# ----------------------------------------------------------------------------
# D4 / p4m filter transform (numpy, build-time glue)
# ----------------------------------------------------------------------------
def _d4_compose(a, b):
    m1, r1 = a
    m2, r2 = b
    return ((m1 + m2) % 2, (((-1) ** m2) * r1 + r2) % 4)


def _d4_inverse(a):
    m, r = a
    return (m, (-((-1) ** m) * r) % 4)


def _d4_act(a, p):
    m, r = a
    u, v = p
    for _ in range(r % 4):
        u, v = -v, u
    if m:
        v = -v
    return (u, v)


def build_p4m_conv_weight(w_np):
    """(Cout, Cin, 8, k, k) group filter -> (k, k, Cin*8, Cout*8) conv filter."""
    Cout, Cin, g, k, _ = w_np.shape
    assert g == G
    elems = [(m, r) for m in range(2) for r in range(4)]
    idx = {e: j for j, e in enumerate(elems)}
    out = np.empty((k, k, Cin * G, Cout * G), dtype=w_np.dtype)
    for s_i, s in enumerate(elems):
        s_inv = _d4_inverse(s)
        for t_i, t in enumerate(elems):
            tp = idx[_d4_compose(s_inv, t)]
            for ui in range(k):
                for vi in range(k):
                    du, dv = 2 * ui - (k - 1), 2 * vi - (k - 1)
                    du2, dv2 = _d4_act(s_inv, (du, dv))
                    up = (du2 + (k - 1)) // 2
                    vp = (dv2 + (k - 1)) // 2
                    out[ui, vi, t_i::G, s_i::G] = w_np[:, :, tp, up, vp].T
    return out


# ----------------------------------------------------------------------------
# helpers
# ----------------------------------------------------------------------------
def _round_up(x, m):
    return (x + m - 1) // m * m


def _largest_divisor_leq(n, cap):
    cap = max(1, min(n, cap))
    for d in range(cap, 0, -1):
        if n % d == 0:
            return d
    return 1


def _pick_tc(cin_p, cout_p, k, budget=12 << 20):
    """Largest multiple-of-128 divisor of cout_p whose (k,k,cin_p,TC) bf16
    weight block stays under `budget` bytes, so it stays VMEM-resident."""
    nl = cout_p // LANES
    for m in range(nl, 0, -1):
        if nl % m == 0 and k * k * cin_p * m * LANES * 2 <= budget:
            return m * LANES
    return LANES


# ----------------------------------------------------------------------------
# tiled conv kernel (resident input image + weights, fused input BN+ReLU,
# fused partial BN statistics off the f32 accumulator)
# ----------------------------------------------------------------------------
def _conv_kernel(*refs, k, stride, pad, TH, Wo, fuse_in, use_scratch):
    """Grid point = (Cout tile, image, out-row tile)  -- grid (CT, N, RT).

    refs:
      x:        (1, H, W, cin_p)  bf16 unpadded image (resident across rt)
      w:        (k, k, cin_p, TC) bf16 filter tile (resident across n, rt)
      [sx, bx]: (1, cin_p)        f32 folded BN scale/shift of the previous layer
      y:        (1, TH, Wo, TC)   bf16 conv output tile
      psum/psq: (1, 1, 1, TC)     f32 per-(image,row-tile) channel sums of y
      [xpad]:   (Hp, Wp, cin_p)   f32 VMEM scratch: padded (+BN+ReLU) image
    """
    if fuse_in:
        x_ref, w_ref, sx_ref, bx_ref = refs[:4]
        rest = refs[4:]
    else:
        x_ref, w_ref = refs[:2]
        rest = refs[2:]
    if use_scratch:
        y_ref, ps_ref, pq_ref, xpad_ref = rest
    else:
        y_ref, ps_ref, pq_ref = rest
        xpad_ref = None

    rt = pl.program_id(2)
    H, W = x_ref.shape[1], x_ref.shape[2]
    TC = y_ref.shape[-1]

    if use_scratch:
        # Build the spatially padded (and optionally BN+ReLU transformed) image
        # once per (Cout-tile, image); every row tile reuses it, so neither the
        # halo padding nor the fused BN ever round-trips HBM or is recomputed,
        # and no border mask is needed (the halo is written as zeros).
        # TODO(synk): a bf16 scratch would halve the scratch traffic once
        #             packed sub-lane-offset stores are verified on all targets.
        @pl.when(rt == 0)
        def _prep():
            if pad > 0:
                xpad_ref[...] = jnp.zeros_like(xpad_ref)
            v = x_ref[0].astype(jnp.float32)
            if fuse_in:
                cinp = v.shape[-1]
                v = (v * sx_ref[...].reshape(1, 1, cinp)
                     + bx_ref[...].reshape(1, 1, cinp))
                v = jnp.maximum(v, 0.0)
            xpad_ref[pad:pad + H, pad:pad + W, :] = v

    h_in = (TH - 1) * stride + k
    row0 = pl.multiple_of(rt * (TH * stride), TH * stride)
    if use_scratch:
        xs = xpad_ref[pl.ds(row0, h_in), :, :].astype(jnp.bfloat16)
    else:
        xs = x_ref[0, pl.ds(row0, h_in), :, :]

    # 2-D conv as k*k shifted matmuls on the MXU, chained f32 accumulation (so
    # Mosaic can keep the running sum in the MXU result buffer on v7x).
    # TODO(synk): for a 3x3 stride=2 conv the strided tap slices still force a
    #             relayout per tap; pre-decimated phase copies would remove them.
    acc = None
    for dy in range(k):
        for dx in range(k):
            patch = xs[dy:dy + (TH - 1) * stride + 1:stride,
                       dx:dx + (Wo - 1) * stride + 1:stride, :]
            part = jnp.dot(patch.reshape(TH * Wo, patch.shape[-1]), w_ref[dy, dx],
                           preferred_element_type=jnp.float32)
            acc = part if acc is None else acc + part

    y_ref[...] = acc.reshape(1, TH, Wo, TC).astype(y_ref.dtype)
    # partial BatchNorm statistics straight off the f32 accumulator: the
    # following BN never re-reads y from HBM.
    ps_ref[...] = jnp.sum(acc, axis=0).reshape(1, 1, 1, TC)
    pq_ref[...] = jnp.sum(acc * acc, axis=0).reshape(1, 1, 1, TC)


def conv2d_p4m(x, w, *, k, stride, pad, in_scale=None, in_shift=None):
    """x: (N, H, W, cin_p) bf16 (spatially UNpadded); w: (k,k,cin_p,cout_p) bf16.

    Returns (y, psum, psq):
      y          (N, Ho, Wo, cout_p) bf16
      psum, psq  (N, RT, 1, cout_p)  f32 partial channel sums / sums of squares
    If in_scale/in_shift are given, relu(x*scale+shift) (the previous layer's
    folded BN + ReLU) is applied once per image inside the kernel.
    """
    N, H, W, cin_p = x.shape
    cout_p = w.shape[-1]
    Hp, Wp = H + 2 * pad, W + 2 * pad
    Ho = (Hp - k) // stride + 1
    Wo = (Wp - k) // stride + 1

    fuse_in = in_scale is not None
    use_scratch = fuse_in or pad > 0

    TC = _pick_tc(cin_p, cout_p, k)
    CT = cout_p // TC
    # row tile: keep the f32 accumulator / output block around <= 2 MiB
    TH = _largest_divisor_leq(Ho, max(1, (2 * 1024 * 1024) // max(1, Wo * TC * 4)))
    RT = Ho // TH

    kernel = functools.partial(_conv_kernel, k=k, stride=stride, pad=pad, TH=TH,
                               Wo=Wo, fuse_in=fuse_in, use_scratch=use_scratch)

    # x block index depends only on the image -> fetched once per image.
    # w block index depends only on the Cout tile (CT outermost) -> resident.
    in_specs = [pl.BlockSpec((1, H, W, cin_p), lambda ct, n, rt: (n, 0, 0, 0)),
                pl.BlockSpec((k, k, cin_p, TC), lambda ct, n, rt: (0, 0, 0, ct))]
    args = [x, w]
    if fuse_in:
        assert in_shift is not None
        in_specs += [pl.BlockSpec((1, cin_p), lambda ct, n, rt: (0, 0)),
                     pl.BlockSpec((1, cin_p), lambda ct, n, rt: (0, 0))]
        args += [in_scale, in_shift]

    out_shape = (jax.ShapeDtypeStruct((N, Ho, Wo, cout_p), jnp.bfloat16),
                 jax.ShapeDtypeStruct((N, RT, 1, cout_p), jnp.float32),
                 jax.ShapeDtypeStruct((N, RT, 1, cout_p), jnp.float32))
    out_specs = (pl.BlockSpec((1, TH, Wo, TC), lambda ct, n, rt: (n, rt, 0, ct)),
                 pl.BlockSpec((1, 1, 1, TC), lambda ct, n, rt: (n, rt, 0, ct)),
                 pl.BlockSpec((1, 1, 1, TC), lambda ct, n, rt: (n, rt, 0, ct)))

    scratch = [pltpu.VMEM((Hp, Wp, cin_p), jnp.float32)] if use_scratch else []

    return pl.pallas_call(
        kernel,
        out_shape=out_shape,
        grid=(CT, N, RT),
        in_specs=in_specs,
        out_specs=out_specs,
        scratch_shapes=scratch,
        compiler_params=pltpu.CompilerParams(
            dimension_semantics=("parallel", "parallel", "arbitrary"),
            vmem_limit_bytes=VMEM_LIMIT),
    )(*args)


# ----------------------------------------------------------------------------
# BN glue (tiny reductions over the per-tile partial sums; per-channel folds)
# ----------------------------------------------------------------------------
def bn_from_partial(psum, psq, planes, count):
    s = jnp.sum(psum, axis=(0, 1, 2))[: planes * G].reshape(planes, G).sum(-1)
    q = jnp.sum(psq, axis=(0, 1, 2))[: planes * G].reshape(planes, G).sum(-1)
    mean = s / count
    # TODO(synk): E[x^2]-E[x]^2 in f32 can lose precision for large activations;
    #             a shifted / Welford-style combine would be more robust.
    var = jnp.maximum(q / count - mean * mean, 0.0)   # biased variance (PyTorch)
    return mean, var


def bn_fold(mean, var, gamma, beta, c_pad, eps=1e-5):
    scale = gamma / jnp.sqrt(var + eps)
    shift = beta - mean * scale
    n_real = gamma.shape[0] * G
    sc = jnp.zeros((c_pad,), jnp.float32).at[:n_real].set(jnp.repeat(scale, G))
    sh = jnp.zeros((c_pad,), jnp.float32).at[:n_real].set(jnp.repeat(shift, G))
    return sc.reshape(1, c_pad), sh.reshape(1, c_pad)


# ----------------------------------------------------------------------------
# residual BN-apply + add + ReLU kernels (row-tiled, lane-dense bf16 output)
# ----------------------------------------------------------------------------
def _bn_add_relu_kernel(y_ref, s_ref, b_ref, z_ref, o_ref):
    v = (y_ref[...].astype(jnp.float32) * s_ref[...] + b_ref[...]
         + z_ref[...].astype(jnp.float32))
    o_ref[...] = jnp.maximum(v, 0.0).astype(o_ref.dtype)


def _bn_add_bn_relu_kernel(y_ref, sy_ref, by_ref, z_ref, sz_ref, bz_ref, o_ref):
    v = (y_ref[...].astype(jnp.float32) * sy_ref[...] + by_ref[...]
         + z_ref[...].astype(jnp.float32) * sz_ref[...] + bz_ref[...])
    o_ref[...] = jnp.maximum(v, 0.0).astype(o_ref.dtype)


def residual_out(y, s_y, b_y, z, s_z=None, b_z=None):
    N, H, W, Cp = y.shape
    TH = _largest_divisor_leq(H, max(1, (2 * 1024 * 1024) // max(1, W * Cp * 4)))
    row = pl.BlockSpec((1, TH, W, Cp), lambda n, r: (n, r, 0, 0))
    vec = pl.BlockSpec((1, Cp), lambda n, r: (0, 0))
    if s_z is None:
        kernel = _bn_add_relu_kernel
        args, specs = (y, s_y, b_y, z), [row, vec, vec, row]
    else:
        kernel = _bn_add_bn_relu_kernel
        args, specs = (y, s_y, b_y, z, s_z, b_z), [row, vec, vec, row, vec, vec]
    return pl.pallas_call(
        kernel,
        out_shape=jax.ShapeDtypeStruct((N, H, W, Cp), jnp.bfloat16),
        grid=(N, H // TH),
        in_specs=specs,
        out_specs=row,
        compiler_params=pltpu.CompilerParams(
            dimension_semantics=("parallel", "parallel"),
            vmem_limit_bytes=VMEM_LIMIT),
    )(*args)


# ----------------------------------------------------------------------------
# P4MBasicBlock forward
# ----------------------------------------------------------------------------
def p4m_basic_block_fwd(x, params, *, stride=1):
    """x: (N, Cin, 8, H, W) f32 -> (N, planes, 8, Ho, Wo) f32."""
    N, Cin, g, H, W = x.shape
    assert g == G
    planes = params["gamma1"].shape[0]
    cin8, cout8 = Cin * G, planes * G
    cin_p = _round_up(cin8, LANES)
    cout_p = _round_up(cout8, LANES)

    # channels-last, bf16, lane-padded channels (no spatial padding: the 1-px
    # halo is built inside the conv kernel).
    xk = jnp.transpose(x, (0, 3, 4, 1, 2)).reshape(N, H, W, cin8).astype(jnp.bfloat16)
    if cin_p > cin8:
        xk = jnp.pad(xk, ((0, 0), (0, 0), (0, 0), (0, cin_p - cin8)))

    # ---- conv1 (+ fused partial BN1 stats) --------------------------------
    y1, p1s, p1q = conv2d_p4m(xk, params["w1c"], k=3, stride=stride, pad=1)
    Ho, Wo = y1.shape[1], y1.shape[2]
    count = float(N * Ho * Wo * G)
    m1, v1 = bn_from_partial(p1s, p1q, planes, count)
    sc1, sh1 = bn_fold(m1, v1, params["gamma1"], params["beta1"], cout_p)

    # ---- conv2 with BN1-apply + ReLU fused into its per-image input prep ---
    y2, p2s, p2q = conv2d_p4m(y1, params["w2c"], k=3, stride=1, pad=1,
                              in_scale=sc1, in_shift=sh1)
    m2, v2 = bn_from_partial(p2s, p2q, planes, count)
    sc2, sh2 = bn_fold(m2, v2, params["gamma2"], params["beta2"], cout_p)

    # ---- shortcut + BN2-apply + add + ReLU ---------------------------------
    if "wscc" in params:
        xs = xk if stride == 1 else xk[:, ::stride, ::stride, :]  # pre-decimate for 1x1 conv
        ysc, pss, psq = conv2d_p4m(xs, params["wscc"], k=1, stride=1, pad=0)
        msc, vsc = bn_from_partial(pss, psq, planes, count)
        scs, shs = bn_fold(msc, vsc, params["gamma_sc"], params["beta_sc"], cout_p)
        out = residual_out(y2, sc2, sh2, ysc, scs, shs)
    else:
        assert stride == 1 and cin8 == cout8, "identity shortcut shape mismatch"
        out = residual_out(y2, sc2, sh2, xk)

    # Layout conversion back to (N, planes, 8, Ho, Wo) happens once, at the
    # block boundary (inside a network the padded channels-last bf16 tensor
    # could be fed straight into the next block instead).
    out = out[..., :cout8].reshape(N, Ho, Wo, planes, G).transpose(0, 3, 4, 1, 2)
    return out.astype(jnp.float32)


# ----------------------------------------------------------------------------
# parameters
# ----------------------------------------------------------------------------
def _prep_weight(w_np, cin_p, cout_p):
    wk = build_p4m_conv_weight(w_np)                      # (k, k, Cin*8, Cout*8)
    k = wk.shape[0]
    full = np.zeros((k, k, cin_p, cout_p), np.float32)
    full[:, :, :wk.shape[2], :wk.shape[3]] = wk
    return jnp.asarray(full, dtype=jnp.bfloat16)


def init_params(key, in_planes, planes, stride):
    ks = jax.random.split(key, 8)
    cin_p = _round_up(in_planes * G, LANES)
    cout_p = _round_up(planes * G, LANES)

    def conv_w(k, cout, cin, ksize):
        fan = cin * G * ksize * ksize
        return np.asarray(jax.random.normal(k, (cout, cin, G, ksize, ksize),
                                            jnp.float32)) * (2.0 / fan) ** 0.5

    params = {
        "w1c": _prep_weight(conv_w(ks[0], planes, in_planes, 3), cin_p, cout_p),
        "w2c": _prep_weight(conv_w(ks[1], planes, planes, 3), cout_p, cout_p),
        "gamma1": jax.random.uniform(ks[2], (planes,), jnp.float32, 0.5, 1.5),
        "beta1": 0.1 * jax.random.normal(ks[3], (planes,), jnp.float32),
        "gamma2": jax.random.uniform(ks[4], (planes,), jnp.float32, 0.5, 1.5),
        "beta2": 0.1 * jax.random.normal(ks[5], (planes,), jnp.float32),
    }
    if stride != 1 or in_planes != planes:
        params["wscc"] = _prep_weight(conv_w(ks[6], planes, in_planes, 1),
                                      cin_p, cout_p)
        params["gamma_sc"] = jax.random.uniform(ks[7], (planes,), jnp.float32, 0.5, 1.5)
        params["beta_sc"] = jnp.zeros((planes,), jnp.float32)
    return params


# ----------------------------------------------------------------------------
# pure-JAX reference (mirrors the kernel's bf16 storage precision)
# ----------------------------------------------------------------------------
def _reference_fwd(x, params, *, stride):
    N, Cin, g, H, W = x.shape
    planes = params["gamma1"].shape[0]
    cin8, cout8 = Cin * G, planes * G
    xk = jnp.transpose(x, (0, 3, 4, 1, 2)).reshape(N, H, W, cin8).astype(jnp.bfloat16)

    def conv(inp_bf, w_bf, s, p):
        return jax.lax.conv_general_dilated(
            inp_bf.astype(jnp.float32), w_bf.astype(jnp.float32),
            window_strides=(s, s), padding=((p, p), (p, p)),
            dimension_numbers=("NHWC", "HWIO", "NHWC"))

    def bn_sb(y_f32, gamma, beta):
        yc = y_f32.reshape(-1, planes, G)
        mean = jnp.mean(yc, axis=(0, 2))
        var = jnp.maximum(jnp.mean(yc * yc, axis=(0, 2)) - mean * mean, 0.0)
        scale = gamma / jnp.sqrt(var + 1e-5)
        shift = beta - mean * scale
        return jnp.repeat(scale, G), jnp.repeat(shift, G)

    w1 = params["w1c"][:, :, :cin8, :cout8]
    w2 = params["w2c"][:, :, :cout8, :cout8]

    y1 = conv(xk, w1, stride, 1)
    s1, b1 = bn_sb(y1, params["gamma1"], params["beta1"])
    h = jnp.maximum(y1.astype(jnp.bfloat16).astype(jnp.float32) * s1 + b1, 0.0)
    y2 = conv(h.astype(jnp.bfloat16), w2, 1, 1)
    s2, b2 = bn_sb(y2, params["gamma2"], params["beta2"])

    if "wscc" in params:
        wsc = params["wscc"][:, :, :cin8, :cout8]
        ysc = conv(xk, wsc, stride, 0)
        ss, bs = bn_sb(ysc, params["gamma_sc"], params["beta_sc"])
        short = ysc.astype(jnp.bfloat16).astype(jnp.float32) * ss + bs
    else:
        short = xk.astype(jnp.float32)
    out = jnp.maximum(y2.astype(jnp.bfloat16).astype(jnp.float32) * s2 + b2 + short, 0.0)
    Ho, Wo = out.shape[1], out.shape[2]
    return out.reshape(N, Ho, Wo, planes, G).transpose(0, 3, 4, 1, 2)


if __name__ == "__main__":
    key = jax.random.PRNGKey(0)
    kx, kp = jax.random.split(key)

    N, in_planes, planes, H, W, stride = 2, 4, 8, 8, 8, 1
    x = jax.random.normal(kx, (N, in_planes, G, H, W), jnp.float32)
    params = init_params(kp, in_planes, planes, stride)

    fwd = jax.jit(functools.partial(p4m_basic_block_fwd, stride=stride))
    out = jax.block_until_ready(fwd(x, params))

    assert out.shape == (N, planes, G, H, W), out.shape
    assert bool(jnp.isfinite(out).all())
    assert bool((out >= 0.0).all())          # final ReLU

    ref = jax.jit(functools.partial(_reference_fwd, stride=stride))(x, params)
    np.testing.assert_allclose(np.asarray(out), np.asarray(ref),
                               rtol=5e-2, atol=5e-2)
    print("KERNEL_OK")
</pallas_src>

<mosaic_0001>
module attributes {stable_mosaic.version = 11 : i64} {
  func.func @_conv_kernel(%arg0: i32, %arg1: i32, %arg2: i32, %arg3: memref<1x8x8x128xbf16, #tpu.memory_space<vmem>>, %arg4: memref<1x1x128x128xbf16, #tpu.memory_space<vmem>>, %arg5: memref<1x8x8x128xbf16, #tpu.memory_space<vmem>>, %arg6: memref<1x1x1x128xf32, #tpu.memory_space<vmem>>, %arg7: memref<1x1x1x128xf32, #tpu.memory_space<vmem>>) attributes {dimension_semantics = [#tpu.dimension_semantics<parallel>, #tpu.dimension_semantics<parallel>, #tpu.dimension_semantics<arbitrary>], iteration_bounds = array<i64: 1, 2, 1>, scalar_prefetch = 0 : i64, scratch_operands = 0 : i64, tpu.core_type = #tpu.core_type<tc>, window_params = [{transform_indices = @transform_0, window_bounds = array<i64: 1, 8, 8, 128>}, {transform_indices = @transform_1, window_bounds = array<i64: 1, 1, 128, 128>}, {transform_indices = @transform_2, window_bounds = array<i64: 1, 8, 8, 128>}, {transform_indices = @transform_3, window_bounds = array<i64: 1, 1, 1, 128>}, {transform_indices = @transform_4, window_bounds = array<i64: 1, 1, 1, 128>}]} {
    %c8_i32 = arith.constant 8 : i32
    %0 = arith.muli %arg2, %c8_i32 : i32
    %1 = tpu.assume_multiple %0, 8 : i32
    %c0 = arith.constant 0 : index
    %2 = arith.index_cast %1 : i32 to index
    %c0_0 = arith.constant 0 : index
    %c0_1 = arith.constant 0 : index
    %3 = vector.load %arg3[%c0, %2, %c0_0, %c0_1] : memref<1x8x8x128xbf16, #tpu.memory_space<vmem>>, vector<1x8x8x128xbf16>
    %4 = vector.shape_cast %3 : vector<1x8x8x128xbf16> to vector<8x8x128xbf16>
    %5 = vector.shape_cast %4 : vector<8x8x128xbf16> to vector<64x128xbf16>
    %c0_2 = arith.constant 0 : index
    %c0_3 = arith.constant 0 : index
    %c0_4 = arith.constant 0 : index
    %c0_5 = arith.constant 0 : index
    %6 = vector.load %arg4[%c0_2, %c0_3, %c0_4, %c0_5] : memref<1x1x128x128xbf16, #tpu.memory_space<vmem>>, vector<1x1x128x128xbf16>
    %7 = vector.shape_cast %6 : vector<1x1x128x128xbf16> to vector<128x128xbf16>
    %cst = arith.constant dense<0.000000e+00> : vector<64x128xf32>
    %8 = tpu.matmul %5, %7, %cst {dimension_numbers = #tpu.dot_dimension_numbers<[1], [0], [0], [1], [0, 0, 1, 1], [], []>} : vector<64x128xbf16>, vector<128x128xbf16>, vector<64x128xf32> -> vector<64x128xf32>
    %9 = vector.shape_cast %8 : vector<64x128xf32> to vector<1x8x8x128xf32>
    %10 = arith.truncf %9 : vector<1x8x8x128xf32> to vector<1x8x8x128xbf16>
    %c0_6 = arith.constant 0 : index
    %c0_7 = arith.constant 0 : index
    %c0_8 = arith.constant 0 : index
    %c0_9 = arith.constant 0 : index
    %11 = vector.load %arg5[%c0_6, %c0_7, %c0_8, %c0_9] : memref<1x8x8x128xbf16, #tpu.memory_space<vmem>>, vector<1x8x8x128xbf16>
    tpu.vector_store %arg5[%c0_6, %c0_7, %c0_8, %c0_9], %10 {strides = array<i32>} : memref<1x8x8x128xbf16, #tpu.memory_space<vmem>>, vector<1x8x8x128xbf16>,
    %cst_10 = arith.constant dense<0.000000e+00> : vector<128xf32>
    %12 = vector.multi_reduction <add>, %8, %cst_10 [0] : vector<64x128xf32> to vector<128xf32>
    %13 = vector.shape_cast %12 : vector<128xf32> to vector<1x1x1x128xf32>
    %c0_11 = arith.constant 0 : index
    %c0_12 = arith.constant 0 : index
    %c0_13 = arith.constant 0 : index
    %c0_14 = arith.constant 0 : index
    %14 = vector.load %arg6[%c0_11, %c0_12, %c0_13, %c0_14] : memref<1x1x1x128xf32, #tpu.memory_space<vmem>>, vector<1x1x1x128xf32>
    tpu.vector_store %arg6[%c0_11, %c0_12, %c0_13, %c0_14], %13 {strides = array<i32>} : memref<1x1x1x128xf32, #tpu.memory_space<vmem>>, vector<1x1x1x128xf32>,
    %15 = arith.mulf %8, %8 : vector<64x128xf32>
    %cst_15 = arith.constant dense<0.000000e+00> : vector<128xf32>
    %16 = vector.multi_reduction <add>, %15, %cst_15 [0] : vector<64x128xf32> to vector<128xf32>
    %17 = vector.shape_cast %16 : vector<128xf32> to vector<1x1x1x128xf32>
    %c0_16 = arith.constant 0 : index
    %c0_17 = arith.constant 0 : index
    %c0_18 = arith.constant 0 : index
    %c0_19 = arith.constant 0 : index
    %18 = vector.load %arg7[%c0_16, %c0_17, %c0_18, %c0_19] : memref<1x1x1x128xf32, #tpu.memory_space<vmem>>, vector<1x1x1x128xf32>
    tpu.vector_store %arg7[%c0_16, %c0_17, %c0_18, %c0_19], %17 {strides = array<i32>} : memref<1x1x1x128xf32, #tpu.memory_space<vmem>>, vector<1x1x1x128xf32>,
    return
  }
  func.func @transform_0(%arg0: i32, %arg1: i32, %arg2: i32) -> (i32, i32, i32, i32) {
    %c0_i32 = arith.constant 0 : i32
    %c0_i32_0 = arith.constant 0 : i32
    %c0_i32_1 = arith.constant 0 : i32
    %c0_i32_2 = arith.constant 0 : i32
    return %arg1, %c0_i32, %c0_i32_0, %c0_i32_1 : i32, i32, i32, i32
  }
  func.func @transform_1(%arg0: i32, %arg1: i32, %arg2: i32) -> (i32, i32, i32, i32) {
    %c0_i32 = arith.constant 0 : i32
    %c0_i32_0 = arith.constant 0 : i32
    %c0_i32_1 = arith.constant 0 : i32
    %c0_i32_2 = arith.constant 0 : i32
    return %c0_i32, %c0_i32_0, %c0_i32_1, %arg0 : i32, i32, i32, i32
  }
  func.func @transform_2(%arg0: i32, %arg1: i32, %arg2: i32) -> (i32, i32, i32, i32) {
    %c0_i32 = arith.constant 0 : i32
    %c0_i32_0 = arith.constant 0 : i32
    return %arg1, %arg2, %c0_i32, %arg0 : i32, i32, i32, i32
  }
  func.func @transform_3(%arg0: i32, %arg1: i32, %arg2: i32) -> (i32, i32, i32, i32) {
    %c0_i32 = arith.constant 0 : i32
    %c0_i32_0 = arith.constant 0 : i32
    return %arg1, %arg2, %c0_i32, %arg0 : i32, i32, i32, i32
  }
  func.func @transform_4(%arg0: i32, %arg1: i32, %arg2: i32) -> (i32, i32, i32, i32) {
    %c0_i32 = arith.constant 0 : i32
    %c0_i32_0 = arith.constant 0 : i32
    return %arg1, %arg2, %c0_i32, %arg0 : i32, i32, i32, i32
  }
}

module attributes {stable_mosaic.version = 11 : i64} {
  func.func @_conv_kernel(%arg0: i32, %arg1: i32, %arg2: i32, %arg3: memref<1x8x8x128xbf16, #tpu.memory_space<vmem>>, %arg4: memref<3x3x128x128xbf16, #tpu.memory_space<vmem>>, %arg5: memref<1x8x8x128xbf16, #tpu.memory_space<vmem>>, %arg6: memref<1x1x1x128xf32, #tpu.memory_space<vmem>>, %arg7: memref<1x1x1x128xf32, #tpu.memory_space<vmem>>, %arg8: memref<10x10x128xf32, #tpu.memory_space<vmem>>) attributes {dimension_semantics = [#tpu.dimension_semantics<parallel>, #tpu.dimension_semantics<parallel>, #tpu.dimension_semantics<arbitrary>], iteration_bounds = array<i64: 1, 2, 1>, scalar_prefetch = 0 : i64, scratch_operands = 1 : i64, tpu.core_type = #tpu.core_type<tc>, window_params = [{transform_indices = @transform_0, window_bounds = array<i64: 1, 8, 8, 128>}, {transform_indices = @transform_1, window_bounds = array<i64: 3, 3, 128, 128>}, {transform_indices = @transform_2, window_bounds = array<i64: 1, 8, 8, 128>}, {transform_indices = @transform_3, window_bounds = array<i64: 1, 1, 1, 128>}, {transform_indices = @transform_4, window_bounds = array<i64: 1, 1, 1, 128>}]} {
    %c0_i32 = arith.constant 0 : i32
    %0 = arith.cmpi eq, %arg2, %c0_i32 : i32
    %1 = arith.extui %0 : i1 to i32
    %c0_i32_0 = arith.constant 0 : i32
    %2 = arith.cmpi ne, %1, %c0_i32_0 : i32
    scf.if %2 {
      %cst_58 = arith.constant 0.000000e+00 : f32
      %71 = vector.broadcast %cst_58 : f32 to vector<10x10x128xf32>
      %c0_59 = arith.constant 0 : index
      %c0_60 = arith.constant 0 : index
      %c0_61 = arith.constant 0 : index
      %72 = vector.load %arg8[%c0_59, %c0_60, %c0_61] : memref<10x10x128xf32, #tpu.memory_space<vmem>>, vector<10x10x128xf32>
      tpu.vector_store %arg8[%c0_59, %c0_60, %c0_61], %71 {strides = array<i32>} : memref<10x10x128xf32, #tpu.memory_space<vmem>>, vector<10x10x128xf32>,
      %c0_62 = arith.constant 0 : index
      %c0_63 = arith.constant 0 : index
      %c0_64 = arith.constant 0 : index
      %c0_65 = arith.constant 0 : index
      %73 = vector.load %arg3[%c0_62, %c0_63, %c0_64, %c0_65] : memref<1x8x8x128xbf16, #tpu.memory_space<vmem>>, vector<1x8x8x128xbf16>
      %74 = vector.shape_cast %73 : vector<1x8x8x128xbf16> to vector<8x8x128xbf16>
      %75 = arith.extf %74 : vector<8x8x128xbf16> to vector<8x8x128xf32>
      %c1_66 = arith.constant 1 : index
      %c1_67 = arith.constant 1 : index
      %c0_68 = arith.constant 0 : index
      %76 = vector.load %arg8[%c1_66, %c1_67, %c0_68] : memref<10x10x128xf32, #tpu.memory_space<vmem>>, vector<8x8x128xf32>
      tpu.vector_store %arg8[%c1_66, %c1_67, %c0_68], %75 {strides = array<i32>} : memref<10x10x128xf32, #tpu.memory_space<vmem>>, vector<8x8x128xf32>,
    } else {
    }
    %c8_i32 = arith.constant 8 : i32
    %3 = arith.muli %arg2, %c8_i32 : i32
    %4 = tpu.assume_multiple %3, 8 : i32
    %5 = arith.index_cast %4 : i32 to index
    %c0 = arith.constant 0 : index
    %c0_1 = arith.constant 0 : index
    %6 = vector.load %arg8[%5, %c0, %c0_1] : memref<10x10x128xf32, #tpu.memory_space<vmem>>, vector<10x10x128xf32>
    %7 = arith.truncf %6 : vector<10x10x128xf32> to vector<10x10x128xbf16>
    %8 = vector.extract_strided_slice %7 {offsets = [0, 0, 0], sizes = [8, 8, 128], strides = [1, 1, 1]} : vector<10x10x128xbf16> to vector<8x8x128xbf16>
    %9 = vector.shape_cast %8 : vector<8x8x128xbf16> to vector<64x128xbf16>
    %c0_2 = arith.constant 0 : index
    %c0_3 = arith.constant 0 : index
    %c0_4 = arith.constant 0 : index
    %c0_5 = arith.constant 0 : index
    %10 = vector.load %arg4[%c0_2, %c0_3, %c0_4, %c0_5] : memref<3x3x128x128xbf16, #tpu.memory_space<vmem>>, vector<1x1x128x128xbf16>
    %11 = vector.shape_cast %10 : vector<1x1x128x128xbf16> to vector<128x128xbf16>
    %cst = arith.constant dense<0.000000e+00> : vector<64x128xf32>
    %12 = tpu.matmul %9, %11, %cst {dimension_numbers = #tpu.dot_dimension_numbers<[1], [0], [0], [1], [0, 0, 1, 1], [], []>} : vector<64x128xbf16>, vector<128x128xbf16>, vector<64x128xf32> -> vector<64x128xf32>
    %13 = vector.extract_strided_slice %7 {offsets = [0, 1, 0], sizes = [8, 8, 128], strides = [1, 1, 1]} : vector<10x10x128xbf16> to vector<8x8x128xbf16>
    %14 = vector.shape_cast %13 : vector<8x8x128xbf16> to vector<64x128xbf16>
    %c0_6 = arith.constant 0 : index
    %c1 = arith.constant 1 : index
    %c0_7 = arith.constant 0 : index
    %c0_8 = arith.constant 0 : index
    %15 = vector.load %arg4[%c0_6, %c1, %c0_7, %c0_8] : memref<3x3x128x128xbf16, #tpu.memory_space<vmem>>, vector<1x1x128x128xbf16>
    %16 = vector.shape_cast %15 : vector<1x1x128x128xbf16> to vector<128x128xbf16>
    %cst_9 = arith.constant dense<0.000000e+00> : vector<64x128xf32>
    %17 = tpu.matmul %14, %16, %cst_9 {dimension_numbers = #tpu.dot_dimension_numbers<[1], [0], [0], [1], [0, 0, 1, 1], [], []>} : vector<64x128xbf16>, vector<128x128xbf16>, vector<64x128xf32> -> vector<64x128xf32>
    %18 = arith.addf %12, %17 : vector<64x128xf32>
    %19 = vector.extract_strided_slice %7 {offsets = [0, 2, 0], sizes = [8, 8, 128], strides = [1, 1, 1]} : vector<10x10x128xbf16> to vector<8x8x128xbf16>
    %20 = vector.shape_cast %19 : vector<8x8x128xbf16> to vector<64x128xbf16>
    %c0_10 = arith.constant 0 : index
    %c2 = arith.constant 2 : index
    %c0_11 = arith.constant 0 : index
    %c0_12 = arith.constant 0 : index
    %21 = vector.load %arg4[%c0_10, %c2, %c0_11, %c0_12] : memref<3x3x128x128xbf16, #tpu.memory_space<vmem>>, vector<1x1x128x128xbf16>
    %22 = vector.shape_cast %21 : vector<1x1x128x128xbf16> to vector<128x128xbf16>
    %cst_13 = arith.constant dense<0.000000e+00> : vector<64x128xf32>
    %23 = tpu.matmul %20, %22, %cst_13 {dimension_numbers = #tpu.dot_dimension_numbers<[1], [0], [0], [1], [0, 0, 1, 1], [], []>} : vector<64x128xbf16>, vector<128x128xbf16>, vector<64x128xf32> -> vector<64x128xf32>
    %24 = arith.addf %18, %23 : vector<64x128xf32>
    %25 = vector.extract_strided_slice %7 {offsets = [1, 0, 0], sizes = [8, 8, 128], strides = [1, 1, 1]} : vector<10x10x128xbf16> to vector<8x8x128xbf16>
    %26 = vector.shape_cast %25 : vector<8x8x128xbf16> to vector<64x128xbf16>
    %c1_14 = arith.constant 1 : index
    %c0_15 = arith.constant 0 : index
    %c0_16 = arith.constant 0 : index
    %c0_17 = arith.constant 0 : index
    %27 = vector.load %arg4[%c1_14, %c0_15, %c0_16, %c0_17] : memref<3x3x128x128xbf16, #tpu.memory_space<vmem>>, vector<1x1x128x128xbf16>
    %28 = vector.shape_cast %27 : vector<1x1x128x128xbf16> to vector<128x128xbf16>
    %cst_18 = arith.constant dense<0.000000e+00> : vector<64x128xf32>
    %29 = tpu.matmul %26, %28, %cst_18 {dimension_numbers = #tpu.dot_dimension_numbers<[1], [0], [0], [1], [0, 0, 1, 1], [], []>} : vector<64x128xbf16>, vector<128x128xbf16>, vector<64x128xf32> -> vector<64x128xf32>
    %30 = arith.addf %24, %29 : vector<64x128xf32>
    %31 = vector.extract_strided_slice %7 {offsets = [1, 1, 0], sizes = [8, 8, 128], strides = [1, 1, 1]} : vector<10x10x128xbf16> to vector<8x8x128xbf16>
    %32 = vector.shape_cast %31 : vector<8x8x128xbf16> to vector<64x128xbf16>
    %c1_19 = arith.constant 1 : index
    %c1_20 = arith.constant 1 : index
    %c0_21 = arith.constant 0 : index
    %c0_22 = arith.constant 0 : index
    %33 = vector.load %arg4[%c1_19, %c1_20, %c0_21, %c0_22] : memref<3x3x128x128xbf16, #tpu.memory_space<vmem>>, vector<1x1x128x128xbf16>
    %34 = vector.shape_cast %33 : vector<1x1x128x128xbf16> to vector<128x128xbf16>
    %cst_23 = arith.constant dense<0.000000e+00> : vector<64x128xf32>
    %35 = tpu.matmul %32, %34, %cst_23 {dimension_numbers = #tpu.dot_dimension_numbers<[1], [0], [0], [1], [0, 0, 1, 1], [], []>} : vector<64x128xbf16>, vector<128x128xbf16>, vector<64x128xf32> -> vector<64x128xf32>
    %36 = arith.addf %30, %35 : vector<64x128xf32>
    %37 = vector.extract_strided_slice %7 {offsets = [1, 2, 0], sizes = [8, 8, 128], strides = [1, 1, 1]} : vector<10x10x128xbf16> to vector<8x8x128xbf16>
    %38 = vector.shape_cast %37 : vector<8x8x128xbf16> to vector<64x128xbf16>
    %c1_24 = arith.constant 1 : index
    %c2_25 = arith.constant 2 : index
    %c0_26 = arith.constant 0 : index
    %c0_27 = arith.constant 0 : index
    %39 = vector.load %arg4[%c1_24, %c2_25, %c0_26, %c0_27] : memref<3x3x128x128xbf16, #tpu.memory_space<vmem>>, vector<1x1x128x128xbf16>
    %40 = vector.shape_cast %39 : vector<1x1x128x128xbf16> to vector<128x128xbf16>
    %cst_28 = arith.constant dense<0.000000e+00> : vector<64x128xf32>
    %41 = tpu.matmul %38, %40, %cst_28 {dimension_numbers = #tpu.dot_dimension_numbers<[1], [0], [0], [1], [0, 0, 1, 1], [], []>} : vector<64x128xbf16>, vector<128x128xbf16>, vector<64x128xf32> -> vector<64x128xf32>
    %42 = arith.addf %36, %41 : vector<64x128xf32>
    %43 = vector.extract_strided_slice %7 {offsets = [2, 0, 0], sizes = [8, 8, 128], strides = [1, 1, 1]} : vector<10x10x128xbf16> to vector<8x8x128xbf16>
    %44 = vector.shape_cast %43 : vector<8x8x128xbf16> to vector<64x128xbf16>
    %c2_29 = arith.constant 2 : index
    %c0_30 = arith.constant 0 : index
    %c0_31 = arith.constant 0 : index
    %c0_32 = arith.constant 0 : index
    %45 = vector.load %arg4[%c2_29, %c0_30, %c0_31, %c0_32] : memref<3x3x128x128xbf16, #tpu.memory_space<vmem>>, vector<1x1x128x128xbf16>
    %46 = vector.shape_cast %45 : vector<1x1x128x128xbf16> to vector<128x128xbf16>
    %cst_33 = arith.constant dense<0.000000e+00> : vector<64x128xf32>
    %47 = tpu.matmul %44, %46, %cst_33 {dimension_numbers = #tpu.dot_dimension_numbers<[1], [0], [0], [1], [0, 0, 1, 1], [], []>} : vector<64x128xbf16>, vector<128x128xbf16>, vector<64x128xf32> -> vector<64x128xf32>
    %48 = arith.addf %42, %47 : vector<64x128xf32>
    %49 = vector.extract_strided_slice %7 {offsets = [2, 1, 0], sizes = [8, 8, 128], strides = [1, 1, 1]} : vector<10x10x128xbf16> to vector<8x8x128xbf16>
    %50 = vector.shape_cast %49 : vector<8x8x128xbf16> to vector<64x128xbf16>
    %c2_34 = arith.constant 2 : index
    %c1_35 = arith.constant 1 : index
    %c0_36 = arith.constant 0 : index
    %c0_37 = arith.constant 0 : index
    %51 = vector.load %arg4[%c2_34, %c1_35, %c0_36, %c0_37] : memref<3x3x128x128xbf16, #tpu.memory_space<vmem>>, vector<1x1x128x128xbf16>
    %52 = vector.shape_cast %51 : vector<1x1x128x128xbf16> to vector<128x128xbf16>
    %cst_38 = arith.constant dense<0.000000e+00> : vector<64x128xf32>
    %53 = tpu.matmul %50, %52, %cst_38 {dimension_numbers = #tpu.dot_dimension_numbers<[1], [0], [0], [1], [0, 0, 1, 1], [], []>} : vector<64x128xbf16>, vector<128x128xbf16>, vector<64x128xf32> -> vector<64x128xf32>
    %54 = arith.addf %48, %53 : vector<64x128xf32>
    %55 = vector.extract_strided_slice %7 {offsets = [2, 2, 0], sizes = [8, 8, 128], strides = [1, 1, 1]} : vector<10x10x128xbf16> to vector<8x8x128xbf16>
    %56 = vector.shape_cast %55 : vector<8x8x128xbf16> to vector<64x128xbf16>
    %c2_39 = arith.constant 2 : index
    %c2_40 = arith.constant 2 : index
    %c0_41 = arith.constant 0 : index
    %c0_42 = arith.constant 0 : index
    %57 = vector.load %arg4[%c2_39, %c2_40, %c0_41, %c0_42] : memref<3x3x128x128xbf16, #tpu.memory_space<vmem>>, vector<1x1x128x128xbf16>
    %58 = vector.shape_cast %57 : vector<1x1x128x128xbf16> to vector<128x128xbf16>
    %cst_43 = arith.constant dense<0.000000e+00> : vector<64x128xf32>
    %59 = tpu.matmul %56, %58, %cst_43 {dimension_numbers = #tpu.dot_dimension_numbers<[1], [0], [0], [1], [0, 0, 1, 1], [], []>} : vector<64x128xbf16>, vector<128x128xbf16>, vector<64x128xf32> -> vector<64x128xf32>
    %60 = arith.addf %54, %59 : vector<64x128xf32>
    %61 = vector.shape_cast %60 : vector<64x128xf32> to vector<1x8x8x128xf32>
    %62 = arith.truncf %61 : vector<1x8x8x128xf32> to vector<1x8x8x128xbf16>
    %c0_44 = arith.constant 0 : index
    %c0_45 = arith.constant 0 : index
    %c0_46 = arith.constant 0 : index
    %c0_47 = arith.constant 0 : index
    %63 = vector.load %arg5[%c0_44, %c0_45, %c0_46, %c0_47] : memref<1x8x8x128xbf16, #tpu.memory_space<vmem>>, vector<1x8x8x128xbf16>
    tpu.vector_store %arg5[%c0_44, %c0_45, %c0_46, %c0_47], %62 {strides = array<i32>} : memref<1x8x8x128xbf16, #tpu.memory_space<vmem>>, vector<1x8x8x128xbf16>,
    %cst_48 = arith.constant dense<0.000000e+00> : vector<128xf32>
    %64 = vector.multi_reduction <add>, %60, %cst_48 [0] : vector<64x128xf32> to vector<128xf32>
    %65 = vector.shape_cast %64 : vector<128xf32> to vector<1x1x1x128xf32>
    %c0_49 = arith.constant 0 : index
    %c0_50 = arith.constant 0 : index
    %c0_51 = arith.constant 0 : index
    %c0_52 = arith.constant 0 : index
    %66 = vector.load %arg6[%c0_49, %c0_50, %c0_51, %c0_52] : memref<1x1x1x128xf32, #tpu.memory_space<vmem>>, vector<1x1x1x128xf32>
    tpu.vector_store %arg6[%c0_49, %c0_50, %c0_51, %c0_52], %65 {strides = array<i32>} : memref<1x1x1x128xf32, #tpu.memory_space<vmem>>, vector<1x1x1x128xf32>,
    %67 = arith.mulf %60, %60 : vector<64x128xf32>
    %cst_53 = arith.constant dense<0.000000e+00> : vector<128xf32>
    %68 = vector.multi_reduction <add>, %67, %cst_53 [0] : vector<64x128xf32> to vector<128xf32>
    %69 = vector.shape_cast %68 : vector<128xf32> to vector<1x1x1x128xf32>
    %c0_54 = arith.constant 0 : index
    %c0_55 = arith.constant 0 : index
    %c0_56 = arith.constant 0 : index
    %c0_57 = arith.constant 0 : index
    %70 = vector.load %arg7[%c0_54, %c0_55, %c0_56, %c0_57] : memref<1x1x1x128xf32, #tpu.memory_space<vmem>>, vector<1x1x1x128xf32>
    tpu.vector_store %arg7[%c0_54, %c0_55, %c0_56, %c0_57], %69 {strides = array<i32>} : memref<1x1x1x128xf32, #tpu.memory_space<vmem>>, vector<1x1x1x128xf32>,
    return
  }
  func.func @transform_0(%arg0: i32, %arg1: i32, %arg2: i32) -> (i32, i32, i32, i32) {
    %c0_i32 = arith.constant 0 : i32
    %c0_i32_0 = arith.constant 0 : i32
    %c0_i32_1 = arith.constant 0 : i32
    %c0_i32_2 = arith.constant 0 : i32
    return %arg1, %c0_i32, %c0_i32_0, %c0_i32_1 : i32, i32, i32, i32
  }
  func.func @transform_1(%arg0: i32, %arg1: i32, %arg2: i32) -> (i32, i32, i32, i32) {
    %c0_i32 = arith.constant 0 : i32
    %c0_i32_0 = arith.constant 0 : i32
    %c0_i32_1 = arith.constant 0 : i32
    %c0_i32_2 = arith.constant 0 : i32
    return %c0_i32, %c0_i32_0, %c0_i32_1, %arg0 : i32, i32, i32, i32
  }
  func.func @transform_2(%arg0: i32, %arg1: i32, %arg2: i32) -> (i32, i32, i32, i32) {
    %c0_i32 = arith.constant 0 : i32
    %c0_i32_0 = arith.constant 0 : i32
    return %arg1, %arg2, %c0_i32, %arg0 : i32, i32, i32, i32
  }
  func.func @transform_3(%arg0: i32, %arg1: i32, %arg2: i32) -> (i32, i32, i32, i32) {
    %c0_i32 = arith.constant 0 : i32
    %c0_i32_0 = arith.constant 0 : i32
    return %arg1, %arg2, %c0_i32, %arg0 : i32, i32, i32, i32
  }
  func.func @transform_4(%arg0: i32, %arg1: i32, %arg2: i32) -> (i32, i32, i32, i32) {
    %c0_i32 = arith.constant 0 : i32
    %c0_i32_0 = arith.constant 0 : i32
    return %arg1, %arg2, %c0_i32, %arg0 : i32, i32, i32, i32
  }
}

module attributes {stable_mosaic.version = 11 : i64} {
  func.func @_conv_kernel(%arg0: i32, %arg1: i32, %arg2: i32, %arg3: memref<1x8x8x128xbf16, #tpu.memory_space<vmem>>, %arg4: memref<3x3x128x128xbf16, #tpu.memory_space<vmem>>, %arg5: memref<1x128xf32, #tpu.memory_space<vmem>>, %arg6: memref<1x128xf32, #tpu.memory_space<vmem>>, %arg7: memref<1x8x8x128xbf16, #tpu.memory_space<vmem>>, %arg8: memref<1x1x1x128xf32, #tpu.memory_space<vmem>>, %arg9: memref<1x1x1x128xf32, #tpu.memory_space<vmem>>, %arg10: memref<10x10x128xf32, #tpu.memory_space<vmem>>) attributes {dimension_semantics = [#tpu.dimension_semantics<parallel>, #tpu.dimension_semantics<parallel>, #tpu.dimension_semantics<arbitrary>], iteration_bounds = array<i64: 1, 2, 1>, scalar_prefetch = 0 : i64, scratch_operands = 1 : i64, tpu.core_type = #tpu.core_type<tc>, window_params = [{transform_indices = @transform_0, window_bounds = array<i64: 1, 8, 8, 128>}, {transform_indices = @transform_1, window_bounds = array<i64: 3, 3, 128, 128>}, {pipeline_mode = #tpu.pipeline_mode<synchronous>, transform_indices = @transform_2, window_bounds = array<i64: 1, 128>}, {pipeline_mode = #tpu.pipeline_mode<synchronous>, transform_indices = @transform_3, window_bounds = array<i64: 1, 128>}, {transform_indices = @transform_4, window_bounds = array<i64: 1, 8, 8, 128>}, {transform_indices = @transform_5, window_bounds = array<i64: 1, 1, 1, 128>}, {transform_indices = @transform_6, window_bounds = array<i64: 1, 1, 1, 128>}]} {
    %c0_i32 = arith.constant 0 : i32
    %0 = arith.cmpi eq, %arg2, %c0_i32 : i32
    %1 = arith.extui %0 : i1 to i32
    %c0_i32_0 = arith.constant 0 : i32
    %2 = arith.cmpi ne, %1, %c0_i32_0 : i32
    scf.if %2 {
      %cst_58 = arith.constant 0.000000e+00 : f32
      %71 = vector.broadcast %cst_58 : f32 to vector<10x10x128xf32>
      %c0_59 = arith.constant 0 : index
      %c0_60 = arith.constant 0 : index
      %c0_61 = arith.constant 0 : index
      %72 = vector.load %arg10[%c0_59, %c0_60, %c0_61] : memref<10x10x128xf32, #tpu.memory_space<vmem>>, vector<10x10x128xf32>
      tpu.vector_store %arg10[%c0_59, %c0_60, %c0_61], %71 {strides = array<i32>} : memref<10x10x128xf32, #tpu.memory_space<vmem>>, vector<10x10x128xf32>,
      %c0_62 = arith.constant 0 : index
      %c0_63 = arith.constant 0 : index
      %c0_64 = arith.constant 0 : index
      %c0_65 = arith.constant 0 : index
      %73 = vector.load %arg3[%c0_62, %c0_63, %c0_64, %c0_65] : memref<1x8x8x128xbf16, #tpu.memory_space<vmem>>, vector<1x8x8x128xbf16>
      %74 = vector.shape_cast %73 : vector<1x8x8x128xbf16> to vector<8x8x128xbf16>
      %75 = arith.extf %74 : vector<8x8x128xbf16> to vector<8x8x128xf32>
      %c0_66 = arith.constant 0 : index
      %c0_67 = arith.constant 0 : index
      %76 = vector.load %arg5[%c0_66, %c0_67] : memref<1x128xf32, #tpu.memory_space<vmem>>, vector<1x128xf32>
      %77 = vector.shape_cast %76 : vector<1x128xf32> to vector<1x1x128xf32>
      %78 = vector.broadcast %77 : vector<1x1x128xf32> to vector<8x8x128xf32>
      %79 = arith.mulf %75, %78 : vector<8x8x128xf32>
      %c0_68 = arith.constant 0 : index
      %c0_69 = arith.constant 0 : index
      %80 = vector.load %arg6[%c0_68, %c0_69] : memref<1x128xf32, #tpu.memory_space<vmem>>, vector<1x128xf32>
      %81 = vector.shape_cast %80 : vector<1x128xf32> to vector<1x1x128xf32>
      %82 = vector.broadcast %81 : vector<1x1x128xf32> to vector<8x8x128xf32>
      %83 = arith.addf %79, %82 : vector<8x8x128xf32>
      %cst_70 = arith.constant 0.000000e+00 : f32
      %84 = vector.broadcast %cst_70 : f32 to vector<8x8x128xf32>
      %85 = arith.maximumf %83, %84 : vector<8x8x128xf32>
      %c1_71 = arith.constant 1 : index
      %c1_72 = arith.constant 1 : index
      %c0_73 = arith.constant 0 : index
      %86 = vector.load %arg10[%c1_71, %c1_72, %c0_73] : memref<10x10x128xf32, #tpu.memory_space<vmem>>, vector<8x8x128xf32>
      tpu.vector_store %arg10[%c1_71, %c1_72, %c0_73], %85 {strides = array<i32>} : memref<10x10x128xf32, #tpu.memory_space<vmem>>, vector<8x8x128xf32>,
    } else {
    }
    %c8_i32 = arith.constant 8 : i32
    %3 = arith.muli %arg2, %c8_i32 : i32
    %4 = tpu.assume_multiple %3, 8 : i32
    %5 = arith.index_cast %4 : i32 to index
    %c0 = arith.constant 0 : index
    %c0_1 = arith.constant 0 : index
    %6 = vector.load %arg10[%5, %c0, %c0_1] : memref<10x10x128xf32, #tpu.memory_space<vmem>>, vector<10x10x128xf32>
    %7 = arith.truncf %6 : vector<10x10x128xf32> to vector<10x10x128xbf16>
    %8 = vector.extract_strided_slice %7 {offsets = [0, 0, 0], sizes = [8, 8, 128], strides = [1, 1, 1]} : vector<10x10x128xbf16> to vector<8x8x128xbf16>
    %9 = vector.shape_cast %8 : vector<8x8x128xbf16> to vector<64x128xbf16>
    %c0_2 = arith.constant 0 : index
    %c0_3 = arith.constant 0 : index
    %c0_4 = arith.constant 0 : index
    %c0_5 = arith.constant 0 : index
    %10 = vector.load %arg4[%c0_2, %c0_3, %c0_4, %c0_5] : memref<3x3x128x128xbf16, #tpu.memory_space<vmem>>, vector<1x1x128x128xbf16>
    %11 = vector.shape_cast %10 : vector<1x1x128x128xbf16> to vector<128x128xbf16>
    %cst = arith.constant dense<0.000000e+00> : vector<64x128xf32>
    %12 = tpu.matmul %9, %11, %cst {dimension_numbers = #tpu.dot_dimension_numbers<[1], [0], [0], [1], [0, 0, 1, 1], [], []>} : vector<64x128xbf16>, vector<128x128xbf16>, vector<64x128xf32> -> vector<64x128xf32>
    %13 = vector.extract_strided_slice %7 {offsets = [0, 1, 0], sizes = [8, 8, 128], strides = [1, 1, 1]} : vector<10x10x128xbf16> to vector<8x8x128xbf16>
    %14 = vector.shape_cast %13 : vector<8x8x128xbf16> to vector<64x128xbf16>
    %c0_6 = arith.constant 0 : index
    %c1 = arith.constant 1 : index
    %c0_7 = arith.constant 0 : index
    %c0_8 = arith.constant 0 : index
    %15 = vector.load %arg4[%c0_6, %c1, %c0_7, %c0_8] : memref<3x3x128x128xbf16, #tpu.memory_space<vmem>>, vector<1x1x128x128xbf16>
    %16 = vector.shape_cast %15 : vector<1x1x128x128xbf16> to vector<128x128xbf16>
    %cst_9 = arith.constant dense<0.000000e+00> : vector<64x128xf32>
    %17 = tpu.matmul %14, %16, %cst_9 {dimension_numbers = #tpu.dot_dimension_numbers<[1], [0], [0], [1], [0, 0, 1, 1], [], []>} : vector<64x128xbf16>, vector<128x128xbf16>, vector<64x128xf32> -> vector<64x128xf32>
    %18 = arith.addf %12, %17 : vector<64x128xf32>
    %19 = vector.extract_strided_slice %7 {offsets = [0, 2, 0], sizes = [8, 8, 128], strides = [1, 1, 1]} : vector<10x10x128xbf16> to vector<8x8x128xbf16>
    %20 = vector.shape_cast %19 : vector<8x8x128xbf16> to vector<64x128xbf16>
    %c0_10 = arith.constant 0 : index
    %c2 = arith.constant 2 : index
    %c0_11 = arith.constant 0 : index
    %c0_12 = arith.constant 0 : index
    %21 = vector.load %arg4[%c0_10, %c2, %c0_11, %c0_12] : memref<3x3x128x128xbf16, #tpu.memory_space<vmem>>, vector<1x1x128x128xbf16>
    %22 = vector.shape_cast %21 : vector<1x1x128x128xbf16> to vector<128x128xbf16>
    %cst_13 = arith.constant dense<0.000000e+00> : vector<64x128xf32>
    %23 = tpu.matmul %20, %22, %cst_13 {dimension_numbers = #tpu.dot_dimension_numbers<[1], [0], [0], [1], [0, 0, 1, 1], [], []>} : vector<64x128xbf16>, vector<128x128xbf16>, vector<64x128xf32> -> vector<64x128xf32>
    %24 = arith.addf %18, %23 : vector<64x128xf32>
    %25 = vector.extract_strided_slice %7 {offsets = [1, 0, 0], sizes = [8, 8, 128], strides = [1, 1, 1]} : vector<10x10x128xbf16> to vector<8x8x128xbf16>
    %26 = vector.shape_cast %25 : vector<8x8x128xbf16> to vector<64x128xbf16>
    %c1_14 = arith.constant 1 : index
    %c0_15 = arith.constant 0 : index
    %c0_16 = arith.constant 0 : index
    %c0_17 = arith.constant 0 : index
    %27 = vector.load %arg4[%c1_14, %c0_15, %c0_16, %c0_17] : memref<3x3x128x128xbf16, #tpu.memory_space<vmem>>, vector<1x1x128x128xbf16>
    %28 = vector.shape_cast %27 : vector<1x1x128x128xbf16> to vector<128x128xbf16>
    %cst_18 = arith.constant dense<0.000000e+00> : vector<64x128xf32>
    %29 = tpu.matmul %26, %28, %cst_18 {dimension_numbers = #tpu.dot_dimension_numbers<[1], [0], [0], [1], [0, 0, 1, 1], [], []>} : vector<64x128xbf16>, vector<128x128xbf16>, vector<64x128xf32> -> vector<64x128xf32>
    %30 = arith.addf %24, %29 : vector<64x128xf32>
    %31 = vector.extract_strided_slice %7 {offsets = [1, 1, 0], sizes = [8, 8, 128], strides = [1, 1, 1]} : vector<10x10x128xbf16> to vector<8x8x128xbf16>
    %32 = vector.shape_cast %31 : vector<8x8x128xbf16> to vector<64x128xbf16>
    %c1_19 = arith.constant 1 : index
    %c1_20 = arith.constant 1 : index
    %c0_21 = arith.constant 0 : index
    %c0_22 = arith.constant 0 : index
    %33 = vector.load %arg4[%c1_19, %c1_20, %c0_21, %c0_22] : memref<3x3x128x128xbf16, #tpu.memory_space<vmem>>, vector<1x1x128x128xbf16>
    %34 = vector.shape_cast %33 : vector<1x1x128x128xbf16> to vector<128x128xbf16>
    %cst_23 = arith.constant dense<0.000000e+00> : vector<64x128xf32>
    %35 = tpu.matmul %32, %34, %cst_23 {dimension_numbers = #tpu.dot_dimension_numbers<[1], [0], [0], [1], [0, 0, 1, 1], [], []>} : vector<64x128xbf16>, vector<128x128xbf16>, vector<64x128xf32> -> vector<64x128xf32>
    %36 = arith.addf %30, %35 : vector<64x128xf32>
    %37 = vector.extract_strided_slice %7 {offsets = [1, 2, 0], sizes = [8, 8, 128], strides = [1, 1, 1]} : vector<10x10x128xbf16> to vector<8x8x128xbf16>
    %38 = vector.shape_cast %37 : vector<8x8x128xbf16> to vector<64x128xbf16>
    %c1_24 = arith.constant 1 : index
    %c2_25 = arith.constant 2 : index
    %c0_26 = arith.constant 0 : index
    %c0_27 = arith.constant 0 : index
    %39 = vector.load %arg4[%c1_24, %c2_25, %c0_26, %c0_27] : memref<3x3x128x128xbf16, #tpu.memory_space<vmem>>, vector<1x1x128x128xbf16>
    %40 = vector.shape_cast %39 : vector<1x1x128x128xbf16> to vector<128x128xbf16>
    %cst_28 = arith.constant dense<0.000000e+00> : vector<64x128xf32>
    %41 = tpu.matmul %38, %40, %cst_28 {dimension_numbers = #tpu.dot_dimension_numbers<[1], [0], [0], [1], [0, 0, 1, 1], [], []>} : vector<64x128xbf16>, vector<128x128xbf16>, vector<64x128xf32> -> vector<64x128xf32>
    %42 = arith.addf %36, %41 : vector<64x128xf32>
    %43 = vector.extract_strided_slice %7 {offsets = [2, 0, 0], sizes = [8, 8, 128], strides = [1, 1, 1]} : vector<10x10x128xbf16> to vector<8x8x128xbf16>
    %44 = vector.shape_cast %43 : vector<8x8x128xbf16> to vector<64x128xbf16>
    %c2_29 = arith.constant 2 : index
    %c0_30 = arith.constant 0 : index
    %c0_31 = arith.constant 0 : index
    %c0_32 = arith.constant 0 : index
    %45 = vector.load %arg4[%c2_29, %c0_30, %c0_31, %c0_32] : memref<3x3x128x128xbf16, #tpu.memory_space<vmem>>, vector<1x1x128x128xbf16>
    %46 = vector.shape_cast %45 : vector<1x1x128x128xbf16> to vector<128x128xbf16>
    %cst_33 = arith.constant dense<0.000000e+00> : vector<64x128xf32>
    %47 = tpu.matmul %44, %46, %cst_33 {dimension_numbers = #tpu.dot_dimension_numbers<[1], [0], [0], [1], [0, 0, 1, 1], [], []>} : vector<64x128xbf16>, vector<128x128xbf16>, vector<64x128xf32> -> vector<64x128xf32>
    %48 = arith.addf %42, %47 : vector<64x128xf32>
    %49 = vector.extract_strided_slice %7 {offsets = [2, 1, 0], sizes = [8, 8, 128], strides = [1, 1, 1]} : vector<10x10x128xbf16> to vector<8x8x128xbf16>
    %50 = vector.shape_cast %49 : vector<8x8x128xbf16> to vector<64x128xbf16>
    %c2_34 = arith.constant 2 : index
    %c1_35 = arith.constant 1 : index
    %c0_36 = arith.constant 0 : index
    %c0_37 = arith.constant 0 : index
    %51 = vector.load %arg4[%c2_34, %c1_35, %c0_36, %c0_37] : memref<3x3x128x128xbf16, #tpu.memory_space<vmem>>, vector<1x1x128x128xbf16>
    %52 = vector.shape_cast %51 : vector<1x1x128x128xbf16> to vector<128x128xbf16>
    %cst_38 = arith.constant dense<0.000000e+00> : vector<64x128xf32>
    %53 = tpu.matmul %50, %52, %cst_38 {dimension_numbers = #tpu.dot_dimension_numbers<[1], [0], [0], [1], [0, 0, 1, 1], [], []>} : vector<64x128xbf16>, vector<128x128xbf16>, vector<64x128xf32> -> vector<64x128xf32>
    %54 = arith.addf %48, %53 : vector<64x128xf32>
    %55 = vector.extract_strided_slice %7 {offsets = [2, 2, 0], sizes = [8, 8, 128], strides = [1, 1, 1]} : vector<10x10x128xbf16> to vector<8x8x128xbf16>
    %56 = vector.shape_cast %55 : vector<8x8x128xbf16> to vector<64x128xbf16>
    %c2_39 = arith.constant 2 : index
    %c2_40 = arith.constant 2 : index
    %c0_41 = arith.constant 0 : index
    %c0_42 = arith.constant 0 : index
    %57 = vector.load %arg4[%c2_39, %c2_40, %c0_41, %c0_42] : memref<3x3x128x128xbf16, #tpu.memory_space<vmem>>, vector<1x1x128x128xbf16>
    %58 = vector.shape_cast %57 : vector<1x1x128x128xbf16> to vector<128x128xbf16>
    %cst_43 = arith.constant dense<0.000000e+00> : vector<64x128xf32>
    %59 = tpu.matmul %56, %58, %cst_43 {dimension_numbers = #tpu.dot_dimension_numbers<[1], [0], [0], [1], [0, 0, 1, 1], [], []>} : vector<64x128xbf16>, vector<128x128xbf16>, vector<64x128xf32> -> vector<64x128xf32>
    %60 = arith.addf %54, %59 : vector<64x128xf32>
    %61 = vector.shape_cast %60 : vector<64x128xf32> to vector<1x8x8x128xf32>
    %62 = arith.truncf %61 : vector<1x8x8x128xf32> to vector<1x8x8x128xbf16>
    %c0_44 = arith.constant 0 : index
    %c0_45 = arith.constant 0 : index
    %c0_46 = arith.constant 0 : index
    %c0_47 = arith.constant 0 : index
    %63 = vector.load %arg7[%c0_44, %c0_45, %c0_46, %c0_47] : memref<1x8x8x128xbf16, #tpu.memory_space<vmem>>, vector<1x8x8x128xbf16>
    tpu.vector_store %arg7[%c0_44, %c0_45, %c0_46, %c0_47], %62 {strides = array<i32>} : memref<1x8x8x128xbf16, #tpu.memory_space<vmem>>, vector<1x8x8x128xbf16>,
    %cst_48 = arith.constant dense<0.000000e+00> : vector<128xf32>
    %64 = vector.multi_reduction <add>, %60, %cst_48 [0] : vector<64x128xf32> to vector<128xf32>
    %65 = vector.shape_cast %64 : vector<128xf32> to vector<1x1x1x128xf32>
    %c0_49 = arith.constant 0 : index
    %c0_50 = arith.constant 0 : index
    %c0_51 = arith.constant 0 : index
    %c0_52 = arith.constant 0 : index
    %66 = vector.load %arg8[%c0_49, %c0_50, %c0_51, %c0_52] : memref<1x1x1x128xf32, #tpu.memory_space<vmem>>, vector<1x1x1x128xf32>
    tpu.vector_store %arg8[%c0_49, %c0_50, %c0_51, %c0_52], %65 {strides = array<i32>} : memref<1x1x1x128xf32, #tpu.memory_space<vmem>>, vector<1x1x1x128xf32>,
    %67 = arith.mulf %60, %60 : vector<64x128xf32>
    %cst_53 = arith.constant dense<0.000000e+00> : vector<128xf32>
    %68 = vector.multi_reduction <add>, %67, %cst_53 [0] : vector<64x128xf32> to vector<128xf32>
    %69 = vector.shape_cast %68 : vector<128xf32> to vector<1x1x1x128xf32>
    %c0_54 = arith.constant 0 : index
    %c0_55 = arith.constant 0 : index
    %c0_56 = arith.constant 0 : index
    %c0_57 = arith.constant 0 : index
    %70 = vector.load %arg9[%c0_54, %c0_55, %c0_56, %c0_57] : memref<1x1x1x128xf32, #tpu.memory_space<vmem>>, vector<1x1x1x128xf32>
    tpu.vector_store %arg9[%c0_54, %c0_55, %c0_56, %c0_57], %69 {strides = array<i32>} : memref<1x1x1x128xf32, #tpu.memory_space<vmem>>, vector<1x1x1x128xf32>,
    return
  }
  func.func @transform_0(%arg0: i32, %arg1: i32, %arg2: i32) -> (i32, i32, i32, i32) {
    %c0_i32 = arith.constant 0 : i32
    %c0_i32_0 = arith.constant 0 : i32
    %c0_i32_1 = arith.constant 0 : i32
    %c0_i32_2 = arith.constant 0 : i32
    return %arg1, %c0_i32, %c0_i32_0, %c0_i32_1 : i32, i32, i32, i32
  }
  func.func @transform_1(%arg0: i32, %arg1: i32, %arg2: i32) -> (i32, i32, i32, i32) {
    %c0_i32 = arith.constant 0 : i32
    %c0_i32_0 = arith.constant 0 : i32
    %c0_i32_1 = arith.constant 0 : i32
    %c0_i32_2 = arith.constant 0 : i32
    return %c0_i32, %c0_i32_0, %c0_i32_1, %arg0 : i32, i32, i32, i32
  }
  func.func @transform_2(%arg0: i32, %arg1: i32, %arg2: i32) -> (i32, i32) {
    %c0_i32 = arith.constant 0 : i32
    %c0_i32_0 = arith.constant 0 : i32
    %c0_i32_1 = arith.constant 0 : i32
    return %c0_i32, %c0_i32_0 : i32, i32
  }
  func.func @transform_3(%arg0: i32, %arg1: i32, %arg2: i32) -> (i32, i32) {
    %c0_i32 = arith.constant 0 : i32
    %c0_i32_0 = arith.constant 0 : i32
    %c0_i32_1 = arith.constant 0 : i32
    return %c0_i32, %c0_i32_0 : i32, i32
  }
  func.func @transform_4(%arg0: i32, %arg1: i32, %arg2: i32) -> (i32, i32, i32, i32) {
    %c0_i32 = arith.constant 0 : i32
    %c0_i32_0 = arith.constant 0 : i32
    return %arg1, %arg2, %c0_i32, %arg0 : i32, i32, i32, i32
  }
  func.func @transform_5(%arg0: i32, %arg1: i32, %arg2: i32) -> (i32, i32, i32, i32) {
    %c0_i32 = arith.constant 0 : i32
    %c0_i32_0 = arith.constant 0 : i32
    return %arg1, %arg2, %c0_i32, %arg0 : i32, i32, i32, i32
  }
  func.func @transform_6(%arg0: i32, %arg1: i32, %arg2: i32) -> (i32, i32, i32, i32) {
    %c0_i32 = arith.constant 0 : i32
    %c0_i32_0 = arith.constant 0 : i32
    return %arg1, %arg2, %c0_i32, %arg0 : i32, i32, i32, i32
  }
}

module attributes {stable_mosaic.version = 11 : i64} {
  func.func @_bn_add_bn_relu_kernel(%arg0: i32, %arg1: i32, %arg2: memref<1x8x8x128xbf16, #tpu.memory_space<vmem>>, %arg3: memref<1x128xf32, #tpu.memory_space<vmem>>, %arg4: memref<1x128xf32, #tpu.memory_space<vmem>>, %arg5: memref<1x8x8x128xbf16, #tpu.memory_space<vmem>>, %arg6: memref<1x128xf32, #tpu.memory_space<vmem>>, %arg7: memref<1x128xf32, #tpu.memory_space<vmem>>, %arg8: memref<1x8x8x128xbf16, #tpu.memory_space<vmem>>) attributes {dimension_semantics = [#tpu.dimension_semantics<parallel>, #tpu.dimension_semantics<parallel>], iteration_bounds = array<i64: 2, 1>, scalar_prefetch = 0 : i64, scratch_operands = 0 : i64, tpu.core_type = #tpu.core_type<tc>, window_params = [{transform_indices = @transform_0, window_bounds = array<i64: 1, 8, 8, 128>}, {pipeline_mode = #tpu.pipeline_mode<synchronous>, transform_indices = @transform_1, window_bounds = array<i64: 1, 128>}, {pipeline_mode = #tpu.pipeline_mode<synchronous>, transform_indices = @transform_2, window_bounds = array<i64: 1, 128>}, {transform_indices = @transform_3, window_bounds = array<i64: 1, 8, 8, 128>}, {pipeline_mode = #tpu.pipeline_mode<synchronous>, transform_indices = @transform_4, window_bounds = array<i64: 1, 128>}, {pipeline_mode = #tpu.pipeline_mode<synchronous>, transform_indices = @transform_5, window_bounds = array<i64: 1, 128>}, {transform_indices = @transform_6, window_bounds = array<i64: 1, 8, 8, 128>}]} {
    %c0 = arith.constant 0 : index
    %c0_0 = arith.constant 0 : index
    %c0_1 = arith.constant 0 : index
    %c0_2 = arith.constant 0 : index
    %0 = vector.load %arg2[%c0, %c0_0, %c0_1, %c0_2] : memref<1x8x8x128xbf16, #tpu.memory_space<vmem>>, vector<1x8x8x128xbf16>
    %1 = arith.extf %0 : vector<1x8x8x128xbf16> to vector<1x8x8x128xf32>
    %c0_3 = arith.constant 0 : index
    %c0_4 = arith.constant 0 : index
    %2 = vector.load %arg3[%c0_3, %c0_4] : memref<1x128xf32, #tpu.memory_space<vmem>>, vector<1x128xf32>
    %3 = vector.shape_cast %2 : vector<1x128xf32> to vector<1x1x1x128xf32>
    %4 = vector.broadcast %3 : vector<1x1x1x128xf32> to vector<1x8x8x128xf32>
    %5 = arith.mulf %1, %4 : vector<1x8x8x128xf32>
    %c0_5 = arith.constant 0 : index
    %c0_6 = arith.constant 0 : index
    %6 = vector.load %arg4[%c0_5, %c0_6] : memref<1x128xf32, #tpu.memory_space<vmem>>, vector<1x128xf32>
    %7 = vector.shape_cast %6 : vector<1x128xf32> to vector<1x1x1x128xf32>
    %8 = vector.broadcast %7 : vector<1x1x1x128xf32> to vector<1x8x8x128xf32>
    %9 = arith.addf %5, %8 : vector<1x8x8x128xf32>
    %c0_7 = arith.constant 0 : index
    %c0_8 = arith.constant 0 : index
    %c0_9 = arith.constant 0 : index
    %c0_10 = arith.constant 0 : index
    %10 = vector.load %arg5[%c0_7, %c0_8, %c0_9, %c0_10] : memref<1x8x8x128xbf16, #tpu.memory_space<vmem>>, vector<1x8x8x128xbf16>
    %11 = arith.extf %10 : vector<1x8x8x128xbf16> to vector<1x8x8x128xf32>
    %c0_11 = arith.constant 0 : index
    %c0_12 = arith.constant 0 : index
    %12 = vector.load %arg6[%c0_11, %c0_12] : memref<1x128xf32, #tpu.memory_space<vmem>>, vector<1x128xf32>
    %13 = vector.shape_cast %12 : vector<1x128xf32> to vector<1x1x1x128xf32>
    %14 = vector.broadcast %13 : vector<1x1x1x128xf32> to vector<1x8x8x128xf32>
    %15 = arith.mulf %11, %14 : vector<1x8x8x128xf32>
    %16 = arith.addf %9, %15 : vector<1x8x8x128xf32>
    %c0_13 = arith.constant 0 : index
    %c0_14 = arith.constant 0 : index
    %17 = vector.load %arg7[%c0_13, %c0_14] : memref<1x128xf32, #tpu.memory_space<vmem>>, vector<1x128xf32>
    %18 = vector.shape_cast %17 : vector<1x128xf32> to vector<1x1x1x128xf32>
    %19 = vector.broadcast %18 : vector<1x1x1x128xf32> to vector<1x8x8x128xf32>
    %20 = arith.addf %16, %19 : vector<1x8x8x128xf32>
    %cst = arith.constant 0.000000e+00 : f32
    %21 = vector.broadcast %cst : f32 to vector<1x8x8x128xf32>
    %22 = arith.maximumf %20, %21 : vector<1x8x8x128xf32>
    %23 = arith.truncf %22 : vector<1x8x8x128xf32> to vector<1x8x8x128xbf16>
    %c0_15 = arith.constant 0 : index
    %c0_16 = arith.constant 0 : index
    %c0_17 = arith.constant 0 : index
    %c0_18 = arith.constant 0 : index
    %24 = vector.load %arg8[%c0_15, %c0_16, %c0_17, %c0_18] : memref<1x8x8x128xbf16, #tpu.memory_space<vmem>>, vector<1x8x8x128xbf16>
    tpu.vector_store %arg8[%c0_15, %c0_16, %c0_17, %c0_18], %23 {strides = array<i32>} : memref<1x8x8x128xbf16, #tpu.memory_space<vmem>>, vector<1x8x8x128xbf16>,
    return
  }
  func.func @transform_0(%arg0: i32, %arg1: i32) -> (i32, i32, i32, i32) {
    %c0_i32 = arith.constant 0 : i32
    %c0_i32_0 = arith.constant 0 : i32
    %c0_i32_1 = arith.constant 0 : i32
    return %arg0, %arg1, %c0_i32, %c0_i32_0 : i32, i32, i32, i32
  }
  func.func @transform_1(%arg0: i32, %arg1: i32) -> (i32, i32) {
    %c0_i32 = arith.constant 0 : i32
    %c0_i32_0 = arith.constant 0 : i32
    %c0_i32_1 = arith.constant 0 : i32
    return %c0_i32, %c0_i32_0 : i32, i32
  }
  func.func @transform_2(%arg0: i32, %arg1: i32) -> (i32, i32) {
    %c0_i32 = arith.constant 0 : i32
    %c0_i32_0 = arith.constant 0 : i32
    %c0_i32_1 = arith.constant 0 : i32
    return %c0_i32, %c0_i32_0 : i32, i32
  }
  func.func @transform_3(%arg0: i32, %arg1: i32) -> (i32, i32, i32, i32) {
    %c0_i32 = arith.constant 0 : i32
    %c0_i32_0 = arith.constant 0 : i32
    %c0_i32_1 = arith.constant 0 : i32
    return %arg0, %arg1, %c0_i32, %c0_i32_0 : i32, i32, i32, i32
  }
  func.func @transform_4(%arg0: i32, %arg1: i32) -> (i32, i32) {
    %c0_i32 = arith.constant 0 : i32
    %c0_i32_0 = arith.constant 0 : i32
    %c0_i32_1 = arith.constant 0 : i32
    return %c0_i32, %c0_i32_0 : i32, i32
  }
  func.func @transform_5(%arg0: i32, %arg1: i32) -> (i32, i32) {
    %c0_i32 = arith.constant 0 : i32
    %c0_i32_0 = arith.constant 0 : i32
    %c0_i32_1 = arith.constant 0 : i32
    return %c0_i32, %c0_i32_0 : i32, i32
  }
  func.func @transform_6(%arg0: i32, %arg1: i32) -> (i32, i32, i32, i32) {
    %c0_i32 = arith.constant 0 : i32
    %c0_i32_0 = arith.constant 0 : i32
    %c0_i32_1 = arith.constant 0 : i32
    return %arg0, %arg1, %c0_i32, %c0_i32_0 : i32, i32, i32, i32
  }
}

</mosaic_0001>

<llo_original>
// kernel: p4m_basic_block_fwd.6
$region0: #{p4m_basic_block_fwd.6}
  #allocation0 [shape = 'u32[]', space=smem, size = 0x4, offset = 0x4, fixed_abs, tag = 'smem constant byte address 0x4 - core index']
  #allocation1 [shape = 'u32[144,128]{1,0:T(1,128)}', space=vmem, size = 0x12000, scoped, tag = 'internal scratch']
  %s0 = inlined_call_operand.vmem [shape: bf16[2,8,8,128], index: 0, kind: input, shape index: {}]
  %s1 = inlined_call_operand.vmem [shape: bf16[1,1,128,128], index: 1, kind: input, shape index: {}]
  %s2 = inlined_call_operand.vmem [shape: bf16[2,8,8,128], index: 2, kind: output, shape index: {0}]
  %s3 = inlined_call_operand.vmem [shape: f32[2,1,1,128], index: 3, kind: output, shape index: {1}]
  %s4 = inlined_call_operand.vmem [shape: f32[2,1,1,128], index: 4, kind: output, shape index: {2}]
  %5 = xla_tuple %s2, %s3, %s4
  %s6 = sld [smem:[#allocation0]]
  $region57: #{p4m_basic_block_fwd.6} parent=0
    _
  %s8 = ssub.s32 1, %s6
  %s9 = scalar_select 0, %s8, %s6
  loop: start=0, step=1, limit=4
  $region2: #{p4m_basic_block_fwd.6} parent=0 // loop_pre_header
    _
  $region3: #{p4m_basic_block_fwd.6} parent=0 // loop_header
    %s11 = sphi 0, %s15
    %p12 = scmp.ge.s32.totalorder %s11, 4
    %s18 = sphi 0, %s37
    %s19 = sphi 0, %s33
    %s20 = sphi 0, %s29
    %s21 = sphi 0, %s18
    %s22 = sphi 0, %s19
    %s23 = sphi 0, %s20
    %s24 = sphi 0, %s21
    %s25 = sphi 0, %s22
    %s26 = sphi 0, %s23
    %s40 = sphi 0, %s42
    %s43 = sphi 0, %s40
    %s44 = sphi 0, %s43
    %s60 = sphi 0, %s44
    %s66 = sphi 0, %s68
    %s69 = sphi 0, %s66
    %s70 = sphi 0, %s69
    %s86 = sphi 0, %s70
    %s96 = sphi 0, %s98
    %s99 = sphi 0, %s96
    %s100 = sphi 0, %s99
    %s116 = sphi 0, %s100
    %s126 = sphi 0, %s128
    %s129 = sphi 0, %s126
    %s130 = sphi 0, %s129
    %s146 = sphi 0, %s130
    %s156 = sphi 0, %s158
    %s159 = sphi 0, %s156
    %s160 = sphi 0, %s159
    %s176 = sphi 0, %s160
  $region4: #{p4m_basic_block_fwd.6} parent=0 // loop_header_branch
    %14 = sbr.rel (%p12) target = $region8
  $region5: #{p4m_basic_block_fwd.6} parent=0 // loop_body
    %s16 = ssub.s32 %s11, 1
    %s17 = ssub.s32 %s11, 2
    %s27 = sadd.s32 1, %s20
    %p28 = scmp.ge.s32.totalorder %s27, 1
    %s29 = scalar_select %p28, 0, %s27
    %s30 = sadd.s32 1, %s19
    %s31 = scalar_select %p28, %s30, %s19
    %p32 = scmp.ge.s32.totalorder %s31, 2
    %s33 = scalar_select %p32, 0, %s31
    %s34 = sadd.s32 1, %s18
    %s35 = scalar_select %p32, %s34, %s18
    %p36 = scmp.ge.s32.totalorder %s35, 1
    %s37 = scalar_select %p36, 0, %s35
    %s38 = ssub.s32 %s19, %s33
    %p39 = scmp.eq.s32.totalorder %s38, 0
    %s41 = sadd.s32 %s40, 1
    %s42 = scalar_select %p39, %s40, %s41
    %p45 = pneg %p39
    %p46 = scmp.eq.s32.totalorder %s11, 1
    %p47 = por %p45, %p46
    %p48 = scmp.ne.s32.totalorder %s40, %s43
    %p49 = scmp.eq.s32.totalorder %s11, 0
    %p50 = por %p48, %p49
    %p51 = scmp.ne.s32.totalorder %s40, %s43
    %p52 = scmp.eq.s32.totalorder %s16, 1
    %p53 = por %p51, %p52
    %p54 = scmp.ne.s32.totalorder %s43, %s44
    %p55 = scmp.eq.s32.totalorder %s16, 0
    %p56 = por %p54, %p55
    %p57 = scmp.ne.s32.totalorder %s43, %s44
    %p58 = scmp.eq.s32.totalorder %s17, 1
    %p59 = por %p57, %p58
    %p61 = scmp.ne.s32.totalorder %s44, %s60
    %p62 = scmp.eq.s32.totalorder %s17, 0
    %p63 = por %p61, %p62
    %s64 = ssub.s32 %s18, %s37
    %p65 = scmp.eq.s32.totalorder %s64, 0
    %s67 = sadd.s32 %s66, 1
    %s68 = scalar_select %p65, %s66, %s67
    %p71 = pneg %p65
    %p72 = scmp.eq.s32.totalorder %s11, 1
    %p73 = por %p71, %p72
    %p74 = scmp.ne.s32.totalorder %s66, %s69
    %p75 = scmp.eq.s32.totalorder %s11, 0
    %p76 = por %p74, %p75
    %p77 = scmp.ne.s32.totalorder %s66, %s69
    %p78 = scmp.eq.s32.totalorder %s16, 1
    %p79 = por %p77, %p78
    %p80 = scmp.ne.s32.totalorder %s69, %s70
    %p81 = scmp.eq.s32.totalorder %s16, 0
    %p82 = por %p80, %p81
    %p83 = scmp.ne.s32.totalorder %s69, %s70
    %p84 = scmp.eq.s32.totalorder %s17, 1
    %p85 = por %p83, %p84
    %p87 = scmp.ne.s32.totalorder %s70, %s86
    %p88 = scmp.eq.s32.totalorder %s17, 0
    %p89 = por %p87, %p88
    %s90 = ssub.s32 %s19, %s33
    %s91 = ssub.s32 %s20, %s29
    %s92 = sor.u32 %s90, %s91
    %s93 = ssub.s32 %s18, %s37
    %s94 = sor.u32 %s92, %s93
    %p95 = scmp.eq.s32.totalorder %s94, 0
    %s97 = sadd.s32 %s96, 1
    %s98 = scalar_select %p95, %s96, %s97
    %p101 = pneg %p95
    %p102 = scmp.eq.s32.totalorder %s11, 1
    %p103 = por %p101, %p102
    %p104 = scmp.ne.s32.totalorder %s96, %s99
    %p105 = scmp.eq.s32.totalorder %s11, 0
    %p106 = por %p104, %p105
    %p107 = scmp.ne.s32.totalorder %s96, %s99
    %p108 = scmp.eq.s32.totalorder %s16, 1
    %p109 = por %p107, %p108
    %p110 = scmp.ne.s32.totalorder %s99, %s100
    %p111 = scmp.eq.s32.totalorder %s16, 0
    %p112 = por %p110, %p111
    %p113 = scmp.ne.s32.totalorder %s99, %s100
    %p114 = scmp.eq.s32.totalorder %s17, 1
    %p115 = por %p113, %p114
    %p117 = scmp.ne.s32.totalorder %s100, %s116
    %p118 = scmp.eq.s32.totalorder %s17, 0
    %p119 = por %p117, %p118
    %s120 = ssub.s32 %s19, %s33
    %s121 = ssub.s32 %s20, %s29
    %s122 = sor.u32 %s120, %s121
    %s123 = ssub.s32 %s18, %s37
    %s124 = sor.u32 %s122, %s123
    %p125 = scmp.eq.s32.totalorder %s124, 0
    %s127 = sadd.s32 %s126, 1
    %s128 = scalar_select %p125, %s126, %s127
    %p131 = pneg %p125
    %p132 = scmp.eq.s32.totalorder %s11, 1
    %p133 = por %p131, %p132
    %p134 = scmp.ne.s32.totalorder %s126, %s129
    %p135 = scmp.eq.s32.totalorder %s11, 0
    %p136 = por %p134, %p135
    %p137 = scmp.ne.s32.totalorder %s126, %s129
    %p138 = scmp.eq.s32.totalorder %s16, 1
    %p139 = por %p137, %p138
    %p140 = scmp.ne.s32.totalorder %s129, %s130
    %p141 = scmp.eq.s32.totalorder %s16, 0
    %p142 = por %p140, %p141
    %p143 = scmp.ne.s32.totalorder %s129, %s130
    %p144 = scmp.eq.s32.totalorder %s17, 1
    %p145 = por %p143, %p144
    %p147 = scmp.ne.s32.totalorder %s130, %s146
    %p148 = scmp.eq.s32.totalorder %s17, 0
    %p149 = por %p147, %p148
    %s150 = ssub.s32 %s19, %s33
    %s151 = ssub.s32 %s20, %s29
    %s152 = sor.u32 %s150, %s151
    %s153 = ssub.s32 %s18, %s37
    %s154 = sor.u32 %s152, %s153
    %p155 = scmp.eq.s32.totalorder %s154, 0
    %s157 = sadd.s32 %s156, 1
    %s158 = scalar_select %p155, %s156, %s157
    %p161 = pneg %p155
    %p162 = scmp.eq.s32.totalorder %s11, 1
    %p163 = por %p161, %p162
    %p164 = scmp.ne.s32.totalorder %s156, %s159
    %p165 = scmp.eq.s32.totalorder %s11, 0
    %p166 = por %p164, %p165
    %p167 = scmp.ne.s32.totalorder %s156, %s159
    %p168 = scmp.eq.s32.totalorder %s16, 1
    %p169 = por %p167, %p168
    %p170 = scmp.ne.s32.totalorder %s159, %s160
    %p171 = scmp.eq.s32.totalorder %s16, 0
    %p172 = por %p170, %p171
    %p173 = scmp.ne.s32.totalorder %s159, %s160
    %p174 = scmp.eq.s32.totalorder %s17, 1
    %p175 = por %p173, %p174
    %p177 = scmp.ne.s32.totalorder %s160, %s176
    %p178 = scmp.eq.s32.totalorder %s17, 0
    %p179 = por %p177, %p178
    %p180 = scmp.le.s32.totalorder 1, %s11
    %p181 = scmp.lt.s32.totalorder %s11, 3
    %p182 = pnand %p180, %p181
    %p183 = pneg %p182
    // Predicated region
    $region9: #{p4m_basic_block_fwd.6} parent=5 // pred_check
      _
    $region10: #{p4m_basic_block_fwd.6} parent=5 // pred_check_branch
      %185 = sbr.rel (%p182) target = $region12
    $region11: #{p4m_basic_block_fwd.6} parent=5 // pred_region
      %s186 = ssub.s32 %s11, 1
      // Predicated region
      $region13: #{p4m_basic_block_fwd.6} parent=11 // pred_check
        %p187 = pneg %p82
      $region14: #{p4m_basic_block_fwd.6} parent=11 // pred_check_branch
        %189 = sbr.rel (%p187) target = $region16
      $region15: #{p4m_basic_block_fwd.6} parent=11 // pred_region
        %p190 = scmp.lt.s32.totalorder %s21, 0
        %s191 = scalar_select %p190, %s21, 0
        %s192 = smul.addr %s191, 4
        %s193 = scalar_lea.vmem %s1, %s192
      $region16: #{p4m_basic_block_fwd.6} parent=11 // pred_fallthru
        _
    $region12: #{p4m_basic_block_fwd.6} parent=5 // pred_fallthru
      _
    %p194 = scmp.lt.s32.totalorder %s11, 2
    // Predicated region
    $region17: #{p4m_basic_block_fwd.6} parent=5 // pred_check
      %p195 = pneg %p194
    $region18: #{p4m_basic_block_fwd.6} parent=5 // pred_check_branch
      %197 = sbr.rel (%p195) target = $region20
    $region19: #{p4m_basic_block_fwd.6} parent=5 // pred_region
      // Predicated region
      $region21: #{p4m_basic_block_fwd.6} parent=19 // pred_check
        %p198 = pneg %p50
      $region22: #{p4m_basic_block_fwd.6} parent=19 // pred_check_branch
        %200 = sbr.rel (%p198) target = $region24
      $region23: #{p4m_basic_block_fwd.6} parent=19 // pred_region
        %p201 = scmp.lt.s32.totalorder %s19, 1
        %s202 = scalar_select %p201, %s19, 1
        %s203 = smul.addr %s202, 8
        %s204 = smul.addr %s203, 4
        %s205 = scalar_lea.vmem %s0, %s204
      $region24: #{p4m_basic_block_fwd.6} parent=19 // pred_fallthru
        _
    $region20: #{p4m_basic_block_fwd.6} parent=5 // pred_fallthru
      _
    %p206 = scmp.le.s32.totalorder 1, %s11
    %p207 = scmp.lt.s32.totalorder %s11, 3
    %p208 = pnand %p206, %p207
    %p209 = pneg %p208
    // Predicated region
    $region25: #{p4m_basic_block_fwd.6} parent=5 // pred_check
      _
    $region26: #{p4m_basic_block_fwd.6} parent=5 // pred_check_branch
      %211 = sbr.rel (%p208) target = $region28
    $region27: #{p4m_basic_block_fwd.6} parent=5 // pred_region
      %s212 = ssub.s32 %s11, 1
      %p213 = scmp.lt.s32.totalorder %s22, 1
      %s214 = scalar_select %p213, %s22, 1
      %s215 = smul.addr %s214, 8
      %s216 = smul.addr %s215, 4
      %s217 = scalar_lea.vmem %s0, %s216
      %p218 = pneg %p56
      %p219 = pneg %p53
      %p220 = scmp.lt.s32.totalorder %s21, 0
      %s221 = scalar_select %p220, %s21, 0
      %s222 = smul.addr %s221, 4
      %s223 = scalar_lea.vmem %s1, %s222
      %p224 = pneg %p82
      %p225 = pneg %p79
      %p226 = pneg %p112
      %p227 = pneg %p109
      %s228 = smul.u32 8, %s23
      %p229 = scmp.lt.s32.totalorder %s22, 1
      %s230 = scalar_select %p229, %s22, 1
      %p231 = scmp.lt.s32.totalorder %s228, 7
      %s232 = scalar_select %p231, %s228, 7
      %p233 = scmp.lt.s32.totalorder %s21, 0
      %s234 = scalar_select %p233, %s21, 0
      %s235 = sadd.s32 %s234, %s232
      %s236 = smul.addr %s230, 8
      %s237 = sadd.s32 %s235, %s236
      %s238 = smul.addr %s237, 4
      %s239 = scalar_lea.vmem %s2, %s238
      %p240 = pneg %p142
      %p241 = pneg %p139
      %p242 = scmp.lt.s32.totalorder %s22, 1
      %s243 = scalar_select %p242, %s22, 1
      %p244 = scmp.lt.s32.totalorder %s23, 0
      %s245 = scalar_select %p244, %s23, 0
      %p246 = scmp.lt.s32.totalorder %s21, 0
      %s247 = scalar_select %p246, %s21, 0
      %s248 = sadd.s32 %s247, %s245
      %s249 = sadd.s32 %s248, %s243
      %s250 = scalar_lea.vmem %s3, %s249
      %p251 = pneg %p172
      %p252 = pneg %p169
      %p253 = scmp.lt.s32.totalorder %s22, 1
      %s254 = scalar_select %p253, %s22, 1
      %p255 = scmp.lt.s32.totalorder %s23, 0
      %s256 = scalar_select %p255, %s23, 0
      %p257 = scmp.lt.s32.totalorder %s21, 0
      %s258 = scalar_select %p257, %s21, 0
      %s259 = sadd.s32 %s258, %s256
      %s260 = sadd.s32 %s259, %s254
      %s261 = scalar_lea.vmem %s4, %s260
      %p262 = scmp.lt.s32.totalorder %s22, 1
      %s263 = scalar_select %p262, %s22, 1
      %s264 = smul.addr %s263, 8
      %s265 = smul.addr %s264, 4
      %s266 = scalar_lea.vmem %s0, %s265
      %p267 = scmp.lt.s32.totalorder %s21, 0
      %s268 = scalar_select %p267, %s21, 0
      %s269 = smul.addr %s268, 4
      %s270 = scalar_lea.vmem %s1, %s269
      %s271 = smul.u32 8, %s23
      %p272 = scmp.lt.s32.totalorder %s22, 1
      %s273 = scalar_select %p272, %s22, 1
      %p274 = scmp.lt.s32.totalorder %s271, 7
      %s275 = scalar_select %p274, %s271, 7
      %p276 = scmp.lt.s32.totalorder %s21, 0
      %s277 = scalar_select %p276, %s21, 0
      %s278 = sadd.s32 %s277, %s275
      %s279 = smul.addr %s273, 8
      %s280 = sadd.s32 %s278, %s279
      %s281 = smul.addr %s280, 4
      %s282 = scalar_lea.vmem %s2, %s281
      %s283 = smul.u32 8, %s23
      %p284 = scmp.lt.s32.totalorder %s22, 1
      %s285 = scalar_select %p284, %s22, 1
      %p286 = scmp.lt.s32.totalorder %s23, 0
      %s287 = scalar_select %p286, %s23, 0
      %p288 = scmp.lt.s32.totalorder %s21, 0
      %s289 = scalar_select %p288, %s21, 0
      %s290 = sadd.s32 %s289, %s287
      %s291 = sadd.s32 %s290, %s285
      %s292 = scalar_lea.vmem %s3, %s291
      %p293 = scmp.lt.s32.totalorder %s22, 1
      %s294 = scalar_select %p293, %s22, 1
      %p295 = scmp.lt.s32.totalorder %s23, 0
      %s296 = scalar_select %p295, %s23, 0
      %p297 = scmp.lt.s32.totalorder %s21, 0
      %s298 = scalar_select %p297, %s21, 0
      %s299 = sadd.s32 %s298, %s296
      %s300 = sadd.s32 %s299, %s294
      %s301 = scalar_lea.vmem %s4, %s300
      %s303 = smul.u32 %s23, 8
      %s304 = smul.addr %s303, 4
      %s305 = scalar_lea.vmem %s266, %s304
      %v306 = vld [vmem:[%s305] sm:$0xf]
      %v307 = vld [vmem:[%s305 + $0x4] sm:$0xf]
      %v308 = vld [vmem:[%s305 + $0x8] sm:$0xf]
      %v309 = vld [vmem:[%s305 + $0xc] sm:$0xf]
      %v310 = vld [vmem:[%s305 + $0x10] sm:$0xf]
      %v311 = vld [vmem:[%s305 + $0x14] sm:$0xf]
      %v312 = vld [vmem:[%s305 + $0x18] sm:$0xf]
      %v313 = vld [vmem:[%s305 + $0x1c] sm:$0xf]
      %v314 = vld [vmem:[%s270] sm:$0xf]
      %v315 = vld [vmem:[%s270 + $0x4] sm:$0xf]
      %v316 = vld [vmem:[%s270 + $0x8] sm:$0xf]
      %v317 = vld [vmem:[%s270 + $0xc] sm:$0xf]
      %v318 = vld [vmem:[%s270 + $0x10] sm:$0xf]
      %v319 = vld [vmem:[%s270 + $0x14] sm:$0xf]
      %v320 = vld [vmem:[%s270 + $0x18] sm:$0xf]
      %v321 = vld [vmem:[%s270 + $0x1c] sm:$0xf]
      %v322 = vld [vmem:[%s270 + $0x20] sm:$0xf]
      %v323 = vld [vmem:[%s270 + $0x24] sm:$0xf]
      %v324 = vld [vmem:[%s270 + $0x28] sm:$0xf]
      %v325 = vld [vmem:[%s270 + $0x2c] sm:$0xf]
      %v326 = vld [vmem:[%s270 + $0x30] sm:$0xf]
      %v327 = vld [vmem:[%s270 + $0x34] sm:$0xf]
      %v328 = vld [vmem:[%s270 + $0x38] sm:$0xf]
      %v329 = vld [vmem:[%s270 + $0x3c] sm:$0xf]
      %v338 = vunpack.c.l.b16 %v306
      %v339 = vunpack.c.l.b16 %v307
      %v340 = vunpack.c.l.b16 %v308
      %v341 = vunpack.c.l.b16 %v309
      %v342 = vunpack.c.l.b16 %v310
      %v343 = vunpack.c.l.b16 %v311
      %v344 = vunpack.c.l.b16 %v312
      %v345 = vunpack.c.l.b16 %v313
      %v346 = vpack.c.b16 %v339, %v338
      %v347 = vpack.c.b16 %v341, %v340
      %v348 = vpack.c.b16 %v343, %v342
      %v349 = vpack.c.b16 %v345, %v344
      %v370 = vunpack.c.l.b16 %v314
      %v371 = vunpack.c.l.b16 %v315
      %v372 = vunpack.c.l.b16 %v316
      %v373 = vunpack.c.l.b16 %v317
      %v374 = vunpack.c.l.b16 %v318
      %v375 = vunpack.c.l.b16 %v319
      %v376 = vunpack.c.l.b16 %v320
      %v377 = vunpack.c.l.b16 %v321
      %v378 = vunpack.c.l.b16 %v322
      %v379 = vunpack.c.l.b16 %v323
      %v380 = vunpack.c.l.b16 %v324
      %v381 = vunpack.c.l.b16 %v325
      %v382 = vunpack.c.l.b16 %v326
      %v383 = vunpack.c.l.b16 %v327
      %v384 = vunpack.c.l.b16 %v328
      %v385 = vunpack.c.l.b16 %v329
      %v386 = vpack.c.b16 %v371, %v370
      %v387 = vpack.c.b16 %v373, %v372
      %v388 = vpack.c.b16 %v375, %v374
      %v389 = vpack.c.b16 %v377, %v376
      %v390 = vpack.c.b16 %v379, %v378
      %v391 = vpack.c.b16 %v381, %v380
      %v392 = vpack.c.b16 %v383, %v382
      %v393 = vpack.c.b16 %v385, %v384
      %402 = vmatprep.subr.bf16.mxu0 0
      %403 = vmatpush1.bf16.msra.mxu0 %v386
      %404 = vmatprep.subr.bf16.mxu0 0
      %405 = vmatpush1.bf16.msra.mxu0 %v387
      %406 = vmatprep.subr.bf16.mxu0 0
      %407 = vmatpush1.bf16.msra.mxu0 %v388
      %408 = vmatprep.subr.bf16.mxu0 0
      %409 = vmatpush1.bf16.msra.mxu0 %v389
      %410 = vmatprep.subr.bf16.mxu0 0
      %411 = vmatpush1.bf16.msra.mxu0 %v390
      %412 = vmatprep.subr.bf16.mxu0 0
      %413 = vmatpush1.bf16.msra.mxu0 %v391
      %414 = vmatprep.subr.bf16.mxu0 0
      %415 = vmatpush1.bf16.msra.mxu0 %v392
      %416 = vmatprep.subr.bf16.mxu0 0
      %417 = vmatpush1.bf16.msra.mxu0 %v393
      %418 = vmatprep.subr.bf16.mxu0 0
      %419 = vmatpush1.bf16.msra.mxu0 0
      %420 = vmatprep.subr.bf16.mxu0 0
      %421 = vmatpush1.bf16.msra.mxu0 0
      %422 = vmatprep.subr.bf16.mxu0 0
      %423 = vmatpush1.bf16.msra.mxu0 0
      %424 = vmatprep.subr.bf16.mxu0 0
      %425 = vmatpush1.bf16.msra.mxu0 0
      %426 = vmatprep.subr.bf16.mxu0 0
      %427 = vmatpush1.bf16.msra.mxu0 0
      %428 = vmatprep.subr.bf16.mxu0 0
      %429 = vmatpush1.bf16.msra.mxu0 0
      %430 = vmatprep.subr.bf16.mxu0 0
      %431 = vmatpush1.bf16.msra.mxu0 0
      %432 = vmatprep.subr.bf16.mxu0 0
      %433 = vmatpush1.bf16.msra.mxu0 0
      %434 = vmatprep.mubr.bf16.mxu0 0
      %435 = vmatmul.mubr.bf16.gmra.mrb[0].mxu0 %v346
      %v436 = vpop.f32.mrb[0].mxu0
      %v437 = vadd.f32 0.0, %v436
      %v438 = vpop.f32.mrb[0].mxu0
      %v439 = vpop.f32.mrb[0].mxu0
      %v440 = vadd.f32 0.0, %v439
      %v441 = vpop.f32.mrb[0].mxu0
      %442 = vmatprep.mubr.bf16.mxu0 0
      %443 = vmatmul.mubr.bf16.gmra.mrb[0].mxu0 %v347
      %v444 = vpop.f32.mrb[0].mxu0
      %v445 = vadd.f32 0.0, %v444
      %v446 = vpop.f32.mrb[0].mxu0
      %v447 = vpop.f32.mrb[0].mxu0
      %v448 = vadd.f32 0.0, %v447
      %v449 = vpop.f32.mrb[0].mxu0
      %450 = vmatprep.mubr.bf16.mxu0 0
      %451 = vmatmul.mubr.bf16.gmra.mrb[0].mxu0 %v348
      %v452 = vpop.f32.mrb[0].mxu0
      %v453 = vadd.f32 0.0, %v452
      %v454 = vpop.f32.mrb[0].mxu0
      %v455 = vpop.f32.mrb[0].mxu0
      %v456 = vadd.f32 0.0, %v455
      %v457 = vpop.f32.mrb[0].mxu0
      %458 = vmatprep.mubr.bf16.mxu0 0
      %459 = vmatmul.mubr.bf16.gmra.mrb[0].mxu0 %v349
      %v460 = vpop.f32.mrb[0].mxu0
      %v461 = vadd.f32 0.0, %v460
      %v462 = vpop.f32.mrb[0].mxu0
      %v463 = vpop.f32.mrb[0].mxu0
      %v464 = vadd.f32 0.0, %v463
      %v465 = vpop.f32.mrb[0].mxu0
      %466 = vdwg.mxu0
      %v467 = vpack.c.bf16 %v437, %v437
      %v468 = vpack.c.bf16 %v440, %v440
      %v469 = vpack.c.bf16 %v445, %v445
      %v470 = vpack.c.bf16 %v448, %v448
      %v471 = vpack.c.bf16 %v453, %v453
      %v472 = vpack.c.bf16 %v456, %v456
      %v473 = vpack.c.bf16 %v461, %v461
      %v474 = vpack.c.bf16 %v464, %v464
      %475 = vst [vmem:[%s282] sm:$0xf] %v467
      %476 = vst [vmem:[%s282 + $0x4] sm:$0xf] %v468
      %477 = vst [vmem:[%s282 + $0x8] sm:$0xf] %v469
      %478 = vst [vmem:[%s282 + $0xc] sm:$0xf] %v470
      %479 = vst [vmem:[%s282 + $0x10] sm:$0xf] %v471
      %480 = vst [vmem:[%s282 + $0x14] sm:$0xf] %v472
      %481 = vst [vmem:[%s282 + $0x18] sm:$0xf] %v473
      %482 = vst [vmem:[%s282 + $0x1c] sm:$0xf] %v474
      %v483 = vadd.f32 %v437, %v440
      %v484 = vadd.f32 %v483, %v445
      %v485 = vadd.f32 %v484, %v448
      %v486 = vadd.f32 %v485, %v453
      %v487 = vadd.f32 %v486, %v456
      %v488 = vadd.f32 %v487, %v461
      %v489 = vadd.f32 %v488, %v464
      %v490 = vrot.slane %v489, 4
      %v491 = vadd.f32 %v489, %v490
      %v492 = vrot.slane %v491, 2
      %v493 = vadd.f32 %v491, %v492
      %v494 = vrot.slane %v493, 1
      %v495 = vadd.f32 %v493, %v494
      %496 = vst [vmem:[%s292] sm:$0x1] %v495
      %v497 = vmul.f32 %v437, %v437
      %v498 = vmul.f32 %v440, %v440
      %v499 = vmul.f32 %v445, %v445
      %v500 = vmul.f32 %v448, %v448
      %v501 = vmul.f32 %v453, %v453
      %v502 = vmul.f32 %v456, %v456
      %v503 = vmul.f32 %v461, %v461
      %v504 = vmul.f32 %v464, %v464
      %v505 = vadd.f32 %v497, %v498
      %v506 = vadd.f32 %v505, %v499
      %v507 = vadd.f32 %v506, %v500
      %v508 = vadd.f32 %v507, %v501
      %v509 = vadd.f32 %v508, %v502
      %v510 = vadd.f32 %v509, %v503
      %v511 = vadd.f32 %v510, %v504
      %v512 = vrot.slane %v511, 4
      %v513 = vadd.f32 %v511, %v512
      %v514 = vrot.slane %v513, 2
      %v515 = vadd.f32 %v513, %v514
      %v516 = vrot.slane %v515, 1
      %v517 = vadd.f32 %v515, %v516
      %518 = vst [vmem:[%s301] sm:$0x1] %v517
      %s519 = smul.u32 8, %s23
      %p520 = scmp.lt.s32.totalorder %s22, 1
      %s521 = scalar_select %p520, %s22, 1
      %p522 = scmp.lt.s32.totalorder %s519, 7
      %s523 = scalar_select %p522, %s519, 7
      %p524 = scmp.lt.s32.totalorder %s21, 0
      %s525 = scalar_select %p524, %s21, 0
      %s526 = sadd.s32 %s525, %s523
      %s527 = smul.addr %s521, 8
      %s528 = sadd.s32 %s526, %s527
      %s529 = smul.addr %s528, 4
      %s530 = scalar_lea.vmem %s2, %s529
      %p531 = scmp.lt.s32.totalorder %s22, 1
      %s532 = scalar_select %p531, %s22, 1
      %p533 = scmp.lt.s32.totalorder %s23, 0
      %s534 = scalar_select %p533, %s23, 0
      %p535 = scmp.lt.s32.totalorder %s21, 0
      %s536 = scalar_select %p535, %s21, 0
      %s537 = sadd.s32 %s536, %s534
      %s538 = sadd.s32 %s537, %s532
      %s539 = scalar_lea.vmem %s3, %s538
      %p540 = scmp.lt.s32.totalorder %s22, 1
      %s541 = scalar_select %p540, %s22, 1
      %p542 = scmp.lt.s32.totalorder %s23, 0
      %s543 = scalar_select %p542, %s23, 0
      %p544 = scmp.lt.s32.totalorder %s21, 0
      %s545 = scalar_select %p544, %s21, 0
      %s546 = sadd.s32 %s545, %s543
      %s547 = sadd.s32 %s546, %s541
      %s548 = scalar_lea.vmem %s4, %s547
      // Predicated region
      $region29: #{p4m_basic_block_fwd.6} parent=27 // pred_check
        %p549 = pneg %p109
      $region30: #{p4m_basic_block_fwd.6} parent=27 // pred_check_branch
        %551 = sbr.rel (%p549) target = $region32
      $region31: #{p4m_basic_block_fwd.6} parent=27 // pred_region
        %s552 = smul.u32 8, %s23
      $region32: #{p4m_basic_block_fwd.6} parent=27 // pred_fallthru
        _
      // Predicated region
      $region33: #{p4m_basic_block_fwd.6} parent=27 // pred_check
        %p553 = pneg %p139
      $region34: #{p4m_basic_block_fwd.6} parent=27 // pred_check_branch
        %555 = sbr.rel (%p553) target = $region36
      $region35: #{p4m_basic_block_fwd.6} parent=27 // pred_region
        _
      $region36: #{p4m_basic_block_fwd.6} parent=27 // pred_fallthru
        _
      // Predicated region
      $region37: #{p4m_basic_block_fwd.6} parent=27 // pred_check
        %p556 = pneg %p169
      $region38: #{p4m_basic_block_fwd.6} parent=27 // pred_check_branch
        %558 = sbr.rel (%p556) target = $region40
      $region39: #{p4m_basic_block_fwd.6} parent=27 // pred_region
        _
      $region40: #{p4m_basic_block_fwd.6} parent=27 // pred_fallthru
        _
    $region28: #{p4m_basic_block_fwd.6} parent=5 // pred_fallthru
      _
    %p559 = scmp.le.s32.totalorder 2, %s11
    // Predicated region
    $region41: #{p4m_basic_block_fwd.6} parent=5 // pred_check
      %p560 = pneg %p559
    $region42: #{p4m_basic_block_fwd.6} parent=5 // pred_check_branch
      %562 = sbr.rel (%p560) target = $region44
    $region43: #{p4m_basic_block_fwd.6} parent=5 // pred_region
      %s563 = ssub.s32 %s11, 2
      // Predicated region
      $region45: #{p4m_basic_block_fwd.6} parent=43 // pred_check
        %p564 = pneg %p115
      $region46: #{p4m_basic_block_fwd.6} parent=43 // pred_check_branch
        %566 = sbr.rel (%p564) target = $region48
      $region47: #{p4m_basic_block_fwd.6} parent=43 // pred_region
        %s567 = smul.u32 8, %s26
        %p568 = scmp.lt.s32.totalorder %s25, 1
        %s569 = scalar_select %p568, %s25, 1
        %p570 = scmp.lt.s32.totalorder %s567, 7
        %s571 = scalar_select %p570, %s567, 7
        %p572 = scmp.lt.s32.totalorder %s24, 0
        %s573 = scalar_select %p572, %s24, 0
        %s574 = sadd.s32 %s573, %s571
        %s575 = smul.addr %s569, 8
        %s576 = sadd.s32 %s574, %s575
        %s577 = smul.addr %s576, 4
        %s578 = scalar_lea.vmem %s2, %s577
      $region48: #{p4m_basic_block_fwd.6} parent=43 // pred_fallthru
        _
      // Predicated region
      $region49: #{p4m_basic_block_fwd.6} parent=43 // pred_check
        %p579 = pneg %p145
      $region50: #{p4m_basic_block_fwd.6} parent=43 // pred_check_branch
        %581 = sbr.rel (%p579) target = $region52
      $region51: #{p4m_basic_block_fwd.6} parent=43 // pred_region
        %p582 = scmp.lt.s32.totalorder %s25, 1
        %s583 = scalar_select %p582, %s25, 1
        %p584 = scmp.lt.s32.totalorder %s26, 0
        %s585 = scalar_select %p584, %s26, 0
        %p586 = scmp.lt.s32.totalorder %s24, 0
        %s587 = scalar_select %p586, %s24, 0
        %s588 = sadd.s32 %s587, %s585
        %s589 = sadd.s32 %s588, %s583
        %s590 = scalar_lea.vmem %s3, %s589
      $region52: #{p4m_basic_block_fwd.6} parent=43 // pred_fallthru
        _
      // Predicated region
      $region53: #{p4m_basic_block_fwd.6} parent=43 // pred_check
        %p591 = pneg %p175
      $region54: #{p4m_basic_block_fwd.6} parent=43 // pred_check_branch
        %593 = sbr.rel (%p591) target = $region56
      $region55: #{p4m_basic_block_fwd.6} parent=43 // pred_region
        %p594 = scmp.lt.s32.totalorder %s25, 1
        %s595 = scalar_select %p594, %s25, 1
        %p596 = scmp.lt.s32.totalorder %s26, 0
        %s597 = scalar_select %p596, %s26, 0
        %p598 = scmp.lt.s32.totalorder %s24, 0
        %s599 = scalar_select %p598, %s24, 0
        %s600 = sadd.s32 %s599, %s597
        %s601 = sadd.s32 %s600, %s595
        %s602 = scalar_lea.vmem %s4, %s601
      $region56: #{p4m_basic_block_fwd.6} parent=43 // pred_fallthru
        _
    $region44: #{p4m_basic_block_fwd.6} parent=5 // pred_fallthru
      _
  $region6: #{p4m_basic_block_fwd.6} parent=0 // loop_footer
    %s15 = sadd.s32 1, %s11
  $region7: #{p4m_basic_block_fwd.6} parent=0 // loop_footer_branch
    %10 = sbr.rel target = $region3
  $region8: #{p4m_basic_block_fwd.6} parent=0 // loop_exit
    _

// kernel: p4m_basic_block_fwd.7
$region0: #{p4m_basic_block_fwd.7}
  #allocation0 [shape = 'u32[]', space=smem, size = 0x4, offset = 0x4, fixed_abs, tag = 'smem constant byte address 0x4 - core index']
  #allocation1 [shape = 'u32[144,128]{1,0:T(1,128)}', space=vmem, size = 0x12000, scoped, tag = 'internal scratch']
  %s0 = inlined_call_operand.vmem [shape: bf16[2,8,8,128], index: 0, kind: input, shape index: {}]
  %s1 = inlined_call_operand.vmem [shape: f32[1,128], index: 1, kind: input, shape index: {}]
  %s2 = inlined_call_operand.vmem [shape: f32[1,128], index: 2, kind: input, shape index: {}]
  %s3 = inlined_call_operand.vmem [shape: bf16[2,8,8,128], index: 3, kind: input, shape index: {}]
  %s4 = inlined_call_operand.vmem [shape: f32[1,128], index: 4, kind: input, shape index: {}]
  %s5 = inlined_call_operand.vmem [shape: f32[1,128], index: 5, kind: input, shape index: {}]
  %s6 = inlined_call_operand.vmem [shape: bf16[2,8,8,128], index: 6, kind: output, shape index: {}]
  %s7 = sld [smem:[#allocation0]]
  $region57: #{p4m_basic_block_fwd.7} parent=0
    _
  %s9 = ssub.s32 1, %s7
  %s10 = scalar_select 0, %s9, %s7
  loop: start=0, step=1, limit=4
  $region2: #{p4m_basic_block_fwd.7} parent=0 // loop_pre_header
    _
  $region3: #{p4m_basic_block_fwd.7} parent=0 // loop_header
    %s12 = sphi 0, %s16
    %p13 = scmp.ge.s32.totalorder %s12, 4
    %s19 = sphi 0, %s31
    %s20 = sphi 0, %s27
    %s21 = sphi 0, %s19
    %s22 = sphi 0, %s20
    %s23 = sphi 0, %s21
    %s24 = sphi 0, %s22
    %s36 = sphi 0, %s38
    %s39 = sphi 0, %s36
    %s40 = sphi 0, %s39
    %s56 = sphi 0, %s40
    %s60 = sphi 0, %s60
    %s62 = sphi 0, %s60
    %s63 = sphi 0, %s62
    %s77 = sphi 0, %s63
    %s81 = sphi 0, %s81
    %s83 = sphi 0, %s81
    %s84 = sphi 0, %s83
    %s98 = sphi 0, %s84
    %s106 = sphi 0, %s108
    %s109 = sphi 0, %s106
    %s110 = sphi 0, %s109
    %s126 = sphi 0, %s110
    %s130 = sphi 0, %s130
    %s132 = sphi 0, %s130
    %s133 = sphi 0, %s132
    %s147 = sphi 0, %s133
    %s151 = sphi 0, %s151
    %s153 = sphi 0, %s151
    %s154 = sphi 0, %s153
    %s168 = sphi 0, %s154
    %s176 = sphi 0, %s178
    %s179 = sphi 0, %s176
    %s180 = sphi 0, %s179
    %s196 = sphi 0, %s180
  $region4: #{p4m_basic_block_fwd.7} parent=0 // loop_header_branch
    %15 = sbr.rel (%p13) target = $region8
  $region5: #{p4m_basic_block_fwd.7} parent=0 // loop_body
    %s17 = ssub.s32 %s12, 1
    %s18 = ssub.s32 %s12, 2
    %s25 = sadd.s32 1, %s20
    %p26 = scmp.ge.s32.totalorder %s25, 1
    %s27 = scalar_select %p26, 0, %s25
    %s28 = sadd.s32 1, %s19
    %s29 = scalar_select %p26, %s28, %s19
    %p30 = scmp.ge.s32.totalorder %s29, 2
    %s31 = scalar_select %p30, 0, %s29
    %s32 = ssub.s32 %s19, %s31
    %s33 = ssub.s32 %s20, %s27
    %s34 = sor.u32 %s32, %s33
    %p35 = scmp.eq.s32.totalorder %s34, 0
    %s37 = sadd.s32 %s36, 1
    %s38 = scalar_select %p35, %s36, %s37
    %p41 = pneg %p35
    %p42 = scmp.eq.s32.totalorder %s12, 1
    %p43 = por %p41, %p42
    %p44 = scmp.ne.s32.totalorder %s36, %s39
    %p45 = scmp.eq.s32.totalorder %s12, 0
    %p46 = por %p44, %p45
    %p47 = scmp.ne.s32.totalorder %s36, %s39
    %p48 = scmp.eq.s32.totalorder %s17, 1
    %p49 = por %p47, %p48
    %p50 = scmp.ne.s32.totalorder %s39, %s40
    %p51 = scmp.eq.s32.totalorder %s17, 0
    %p52 = por %p50, %p51
    %p53 = scmp.ne.s32.totalorder %s39, %s40
    %p54 = scmp.eq.s32.totalorder %s18, 1
    %p55 = por %p53, %p54
    %p57 = scmp.ne.s32.totalorder %s40, %s56
    %p58 = scmp.eq.s32.totalorder %s18, 0
    %p59 = por %p57, %p58
    %s61 = sadd.s32 %s60, 1
    %p64 = scmp.eq.s32.totalorder %s12, 1
    %p65 = scmp.ne.s32.totalorder %s60, %s62
    %p66 = scmp.eq.s32.totalorder %s12, 0
    %p67 = por %p65, %p66
    %p68 = scmp.ne.s32.totalorder %s60, %s62
    %p69 = scmp.eq.s32.totalorder %s17, 1
    %p70 = por %p68, %p69
    %p71 = scmp.ne.s32.totalorder %s62, %s63
    %p72 = scmp.eq.s32.totalorder %s17, 0
    %p73 = por %p71, %p72
    %p74 = scmp.ne.s32.totalorder %s62, %s63
    %p75 = scmp.eq.s32.totalorder %s18, 1
    %p76 = por %p74, %p75
    %p78 = scmp.ne.s32.totalorder %s63, %s77
    %p79 = scmp.eq.s32.totalorder %s18, 0
    %p80 = por %p78, %p79
    %s82 = sadd.s32 %s81, 1
    %p85 = scmp.eq.s32.totalorder %s12, 1
    %p86 = scmp.ne.s32.totalorder %s81, %s83
    %p87 = scmp.eq.s32.totalorder %s12, 0
    %p88 = por %p86, %p87
    %p89 = scmp.ne.s32.totalorder %s81, %s83
    %p90 = scmp.eq.s32.totalorder %s17, 1
    %p91 = por %p89, %p90
    %p92 = scmp.ne.s32.totalorder %s83, %s84
    %p93 = scmp.eq.s32.totalorder %s17, 0
    %p94 = por %p92, %p93
    %p95 = scmp.ne.s32.totalorder %s83, %s84
    %p96 = scmp.eq.s32.totalorder %s18, 1
    %p97 = por %p95, %p96
    %p99 = scmp.ne.s32.totalorder %s84, %s98
    %p100 = scmp.eq.s32.totalorder %s18, 0
    %p101 = por %p99, %p100
    %s102 = ssub.s32 %s19, %s31
    %s103 = ssub.s32 %s20, %s27
    %s104 = sor.u32 %s102, %s103
    %p105 = scmp.eq.s32.totalorder %s104, 0
    %s107 = sadd.s32 %s106, 1
    %s108 = scalar_select %p105, %s106, %s107
    %p111 = pneg %p105
    %p112 = scmp.eq.s32.totalorder %s12, 1
    %p113 = por %p111, %p112
    %p114 = scmp.ne.s32.totalorder %s106, %s109
    %p115 = scmp.eq.s32.totalorder %s12, 0
    %p116 = por %p114, %p115
    %p117 = scmp.ne.s32.totalorder %s106, %s109
    %p118 = scmp.eq.s32.totalorder %s17, 1
    %p119 = por %p117, %p118
    %p120 = scmp.ne.s32.totalorder %s109, %s110
    %p121 = scmp.eq.s32.totalorder %s17, 0
    %p122 = por %p120, %p121
    %p123 = scmp.ne.s32.totalorder %s109, %s110
    %p124 = scmp.eq.s32.totalorder %s18, 1
    %p125 = por %p123, %p124
    %p127 = scmp.ne.s32.totalorder %s110, %s126
    %p128 = scmp.eq.s32.totalorder %s18, 0
    %p129 = por %p127, %p128
    %s131 = sadd.s32 %s130, 1
    %p134 = scmp.eq.s32.totalorder %s12, 1
    %p135 = scmp.ne.s32.totalorder %s130, %s132
    %p136 = scmp.eq.s32.totalorder %s12, 0
    %p137 = por %p135, %p136
    %p138 = scmp.ne.s32.totalorder %s130, %s132
    %p139 = scmp.eq.s32.totalorder %s17, 1
    %p140 = por %p138, %p139
    %p141 = scmp.ne.s32.totalorder %s132, %s133
    %p142 = scmp.eq.s32.totalorder %s17, 0
    %p143 = por %p141, %p142
    %p144 = scmp.ne.s32.totalorder %s132, %s133
    %p145 = scmp.eq.s32.totalorder %s18, 1
    %p146 = por %p144, %p145
    %p148 = scmp.ne.s32.totalorder %s133, %s147
    %p149 = scmp.eq.s32.totalorder %s18, 0
    %p150 = por %p148, %p149
    %s152 = sadd.s32 %s151, 1
    %p155 = scmp.eq.s32.totalorder %s12, 1
    %p156 = scmp.ne.s32.totalorder %s151, %s153
    %p157 = scmp.eq.s32.totalorder %s12, 0
    %p158 = por %p156, %p157
    %p159 = scmp.ne.s32.totalorder %s151, %s153
    %p160 = scmp.eq.s32.totalorder %s17, 1
    %p161 = por %p159, %p160
    %p162 = scmp.ne.s32.totalorder %s153, %s154
    %p163 = scmp.eq.s32.totalorder %s17, 0
    %p164 = por %p162, %p163
    %p165 = scmp.ne.s32.totalorder %s153, %s154
    %p166 = scmp.eq.s32.totalorder %s18, 1
    %p167 = por %p165, %p166
    %p169 = scmp.ne.s32.totalorder %s154, %s168
    %p170 = scmp.eq.s32.totalorder %s18, 0
    %p171 = por %p169, %p170
    %s172 = ssub.s32 %s19, %s31
    %s173 = ssub.s32 %s20, %s27
    %s174 = sor.u32 %s172, %s173
    %p175 = scmp.eq.s32.totalorder %s174, 0
    %s177 = sadd.s32 %s176, 1
    %s178 = scalar_select %p175, %s176, %s177
    %p181 = pneg %p175
    %p182 = scmp.eq.s32.totalorder %s12, 1
    %p183 = por %p181, %p182
    %p184 = scmp.ne.s32.totalorder %s176, %s179
    %p185 = scmp.eq.s32.totalorder %s12, 0
    %p186 = por %p184, %p185
    %p187 = scmp.ne.s32.totalorder %s176, %s179
    %p188 = scmp.eq.s32.totalorder %s17, 1
    %p189 = por %p187, %p188
    %p190 = scmp.ne.s32.totalorder %s179, %s180
    %p191 = scmp.eq.s32.totalorder %s17, 0
    %p192 = por %p190, %p191
    %p193 = scmp.ne.s32.totalorder %s179, %s180
    %p194 = scmp.eq.s32.totalorder %s18, 1
    %p195 = por %p193, %p194
    %p197 = scmp.ne.s32.totalorder %s180, %s196
    %p198 = scmp.eq.s32.totalorder %s18, 0
    %p199 = por %p197, %p198
    %p200 = scmp.le.s32.totalorder 1, %s12
    %p201 = scmp.lt.s32.totalorder %s12, 3
    %p202 = pnand %p200, %p201
    %p203 = pneg %p202
    // Predicated region
    $region9: #{p4m_basic_block_fwd.7} parent=5 // pred_check
      _
    $region10: #{p4m_basic_block_fwd.7} parent=5 // pred_check_branch
      %205 = sbr.rel (%p202) target = $region12
    $region11: #{p4m_basic_block_fwd.7} parent=5 // pred_region
      %s206 = ssub.s32 %s12, 1
      // Predicated region
      $region13: #{p4m_basic_block_fwd.7} parent=11 // pred_check
        %p207 = pneg %p73
      $region14: #{p4m_basic_block_fwd.7} parent=11 // pred_check_branch
        %209 = sbr.rel (%p207) target = $region16
      $region15: #{p4m_basic_block_fwd.7} parent=11 // pred_region
        _
      $region16: #{p4m_basic_block_fwd.7} parent=11 // pred_fallthru
        _
      // Predicated region
      $region17: #{p4m_basic_block_fwd.7} parent=11 // pred_check
        %p210 = pneg %p94
      $region18: #{p4m_basic_block_fwd.7} parent=11 // pred_check_branch
        %212 = sbr.rel (%p210) target = $region20
      $region19: #{p4m_basic_block_fwd.7} parent=11 // pred_region
        _
      $region20: #{p4m_basic_block_fwd.7} parent=11 // pred_fallthru
        _
      // Predicated region
      $region21: #{p4m_basic_block_fwd.7} parent=11 // pred_check
        %p213 = pneg %p143
      $region22: #{p4m_basic_block_fwd.7} parent=11 // pred_check_branch
        %215 = sbr.rel (%p213) target = $region24
      $region23: #{p4m_basic_block_fwd.7} parent=11 // pred_region
        _
      $region24: #{p4m_basic_block_fwd.7} parent=11 // pred_fallthru
        _
      // Predicated region
      $region25: #{p4m_basic_block_fwd.7} parent=11 // pred_check
        %p216 = pneg %p164
      $region26: #{p4m_basic_block_fwd.7} parent=11 // pred_check_branch
        %218 = sbr.rel (%p216) target = $region28
      $region27: #{p4m_basic_block_fwd.7} parent=11 // pred_region
        _
      $region28: #{p4m_basic_block_fwd.7} parent=11 // pred_fallthru
        _
    $region12: #{p4m_basic_block_fwd.7} parent=5 // pred_fallthru
      _
    %p219 = scmp.lt.s32.totalorder %s12, 2
    // Predicated region
    $region29: #{p4m_basic_block_fwd.7} parent=5 // pred_check
      %p220 = pneg %p219
    $region30: #{p4m_basic_block_fwd.7} parent=5 // pred_check_branch
      %222 = sbr.rel (%p220) target = $region32
    $region31: #{p4m_basic_block_fwd.7} parent=5 // pred_region
      // Predicated region
      $region33: #{p4m_basic_block_fwd.7} parent=31 // pred_check
        %p223 = pneg %p46
      $region34: #{p4m_basic_block_fwd.7} parent=31 // pred_check_branch
        %225 = sbr.rel (%p223) target = $region36
      $region35: #{p4m_basic_block_fwd.7} parent=31 // pred_region
        %s226 = smul.u32 8, %s20
        %p227 = scmp.lt.s32.totalorder %s19, 1
        %s228 = scalar_select %p227, %s19, 1
        %p229 = scmp.lt.s32.totalorder %s226, 7
        %s230 = scalar_select %p229, %s226, 7
        %s231 = smul.addr %s228, 8
        %s232 = sadd.s32 %s230, %s231
        %s233 = smul.addr %s232, 4
        %s234 = scalar_lea.vmem %s0, %s233
        %s235 = smul.u32 8, %s20
      $region36: #{p4m_basic_block_fwd.7} parent=31 // pred_fallthru
        _
      // Predicated region
      $region37: #{p4m_basic_block_fwd.7} parent=31 // pred_check
        %p236 = pneg %p116
      $region38: #{p4m_basic_block_fwd.7} parent=31 // pred_check_branch
        %238 = sbr.rel (%p236) target = $region40
      $region39: #{p4m_basic_block_fwd.7} parent=31 // pred_region
        %s239 = smul.u32 8, %s20
        %p240 = scmp.lt.s32.totalorder %s19, 1
        %s241 = scalar_select %p240, %s19, 1
        %p242 = scmp.lt.s32.totalorder %s239, 7
        %s243 = scalar_select %p242, %s239, 7
        %s244 = smul.addr %s241, 8
        %s245 = sadd.s32 %s243, %s244
        %s246 = smul.addr %s245, 4
        %s247 = scalar_lea.vmem %s3, %s246
        %s248 = smul.u32 8, %s20
      $region40: #{p4m_basic_block_fwd.7} parent=31 // pred_fallthru
        _
    $region32: #{p4m_basic_block_fwd.7} parent=5 // pred_fallthru
      _
    %p249 = scmp.le.s32.totalorder 1, %s12
    %p250 = scmp.lt.s32.totalorder %s12, 3
    %p251 = pnand %p249, %p250
    %p252 = pneg %p251
    // Predicated region
    $region41: #{p4m_basic_block_fwd.7} parent=5 // pred_check
      _
    $region42: #{p4m_basic_block_fwd.7} parent=5 // pred_check_branch
      %254 = sbr.rel (%p251) target = $region44
    $region43: #{p4m_basic_block_fwd.7} parent=5 // pred_region
      %s255 = ssub.s32 %s12, 1
      %s256 = smul.u32 8, %s22
      %p257 = scmp.lt.s32.totalorder %s21, 1
      %s258 = scalar_select %p257, %s21, 1
      %p259 = scmp.lt.s32.totalorder %s256, 7
      %s260 = scalar_select %p259, %s256, 7
      %s261 = smul.addr %s258, 8
      %s262 = sadd.s32 %s260, %s261
      %s263 = smul.addr %s262, 4
      %s264 = scalar_lea.vmem %s0, %s263
      %p265 = pneg %p52
      %p266 = pneg %p49
      %p267 = pneg %p73
      %p268 = pneg %p70
      %p269 = pneg %p94
      %p270 = pneg %p91
      %s271 = smul.u32 8, %s22
      %p272 = scmp.lt.s32.totalorder %s21, 1
      %s273 = scalar_select %p272, %s21, 1
      %p274 = scmp.lt.s32.totalorder %s271, 7
      %s275 = scalar_select %p274, %s271, 7
      %s276 = smul.addr %s273, 8
      %s277 = sadd.s32 %s275, %s276
      %s278 = smul.addr %s277, 4
      %s279 = scalar_lea.vmem %s3, %s278
      %p280 = pneg %p122
      %p281 = pneg %p119
      %p282 = pneg %p143
      %p283 = pneg %p140
      %p284 = pneg %p164
      %p285 = pneg %p161
      %p286 = pneg %p192
      %p287 = pneg %p189
      %s288 = smul.u32 8, %s22
      %p289 = scmp.lt.s32.totalorder %s21, 1
      %s290 = scalar_select %p289, %s21, 1
      %p291 = scmp.lt.s32.totalorder %s288, 7
      %s292 = scalar_select %p291, %s288, 7
      %s293 = smul.addr %s290, 8
      %s294 = sadd.s32 %s292, %s293
      %s295 = smul.addr %s294, 4
      %s296 = scalar_lea.vmem %s6, %s295
      %s297 = smul.u32 8, %s22
      %p298 = scmp.lt.s32.totalorder %s21, 1
      %s299 = scalar_select %p298, %s21, 1
      %p300 = scmp.lt.s32.totalorder %s297, 7
      %s301 = scalar_select %p300, %s297, 7
      %s302 = smul.addr %s299, 8
      %s303 = sadd.s32 %s301, %s302
      %s304 = smul.addr %s303, 4
      %s305 = scalar_lea.vmem %s0, %s304
      %s306 = smul.u32 8, %s22
      %s307 = smul.u32 8, %s22
      %p308 = scmp.lt.s32.totalorder %s21, 1
      %s309 = scalar_select %p308, %s21, 1
      %p310 = scmp.lt.s32.totalorder %s307, 7
      %s311 = scalar_select %p310, %s307, 7
      %s312 = smul.addr %s309, 8
      %s313 = sadd.s32 %s311, %s312
      %s314 = smul.addr %s313, 4
      %s315 = scalar_lea.vmem %s3, %s314
      %s316 = smul.u32 8, %s22
      %s317 = smul.u32 8, %s22
      %p318 = scmp.lt.s32.totalorder %s21, 1
      %s319 = scalar_select %p318, %s21, 1
      %p320 = scmp.lt.s32.totalorder %s317, 7
      %s321 = scalar_select %p320, %s317, 7
      %s322 = smul.addr %s319, 8
      %s323 = sadd.s32 %s321, %s322
      %s324 = smul.addr %s323, 4
      %s325 = scalar_lea.vmem %s6, %s324
      %s326 = smul.u32 8, %s22
      %v327 = vld [vmem:[%s305] sm:$0xf]
      %v328 = vld [vmem:[%s305 + $0x4] sm:$0xf]
      %v329 = vld [vmem:[%s305 + $0x8] sm:$0xf]
      %v330 = vld [vmem:[%s305 + $0xc] sm:$0xf]
      %v331 = vld [vmem:[%s305 + $0x10] sm:$0xf]
      %v332 = vld [vmem:[%s305 + $0x14] sm:$0xf]
      %v333 = vld [vmem:[%s305 + $0x18] sm:$0xf]
      %v334 = vld [vmem:[%s305 + $0x1c] sm:$0xf]
      %v335 = vunpack.c.l.bf16 %v327
      %v336 = vunpack.c.l.bf16 %v328
      %v337 = vunpack.c.l.bf16 %v329
      %v338 = vunpack.c.l.bf16 %v330
      %v339 = vunpack.c.l.bf16 %v331
      %v340 = vunpack.c.l.bf16 %v332
      %v341 = vunpack.c.l.bf16 %v333
      %v342 = vunpack.c.l.bf16 %v334
      %v343 = vld [vmem:[%s1] sm:$0x1]
      %v345 = vlaneseq
      %v346 = vshrl.u32 %v345, 7
      %v347 = vsub.s32 0, %v346
      %v348 = vrot.slane %v343, %v347
      %v350 = vmul.f32 %v335, %v348
      %v351 = vmul.f32 %v336, %v348
      %v352 = vmul.f32 %v337, %v348
      %v353 = vmul.f32 %v338, %v348
      %v354 = vmul.f32 %v339, %v348
      %v355 = vmul.f32 %v340, %v348
      %v356 = vmul.f32 %v341, %v348
      %v357 = vmul.f32 %v342, %v348
      %v358 = vld [vmem:[%s2] sm:$0x1]
      %v360 = vlaneseq
      %v361 = vshrl.u32 %v360, 7
      %v362 = vsub.s32 0, %v361
      %v363 = vrot.slane %v358, %v362
      %v365 = vadd.f32 %v350, %v363
      %v366 = vadd.f32 %v351, %v363
      %v367 = vadd.f32 %v352, %v363
      %v368 = vadd.f32 %v353, %v363
      %v369 = vadd.f32 %v354, %v363
      %v370 = vadd.f32 %v355, %v363
      %v371 = vadd.f32 %v356, %v363
      %v372 = vadd.f32 %v357, %v363
      %v373 = vld [vmem:[%s315] sm:$0xf]
      %v374 = vld [vmem:[%s315 + $0x4] sm:$0xf]
      %v375 = vld [vmem:[%s315 + $0x8] sm:$0xf]
      %v376 = vld [vmem:[%s315 + $0xc] sm:$0xf]
      %v377 = vld [vmem:[%s315 + $0x10] sm:$0xf]
      %v378 = vld [vmem:[%s315 + $0x14] sm:$0xf]
      %v379 = vld [vmem:[%s315 + $0x18] sm:$0xf]
      %v380 = vld [vmem:[%s315 + $0x1c] sm:$0xf]
      %v381 = vunpack.c.l.bf16 %v373
      %v382 = vunpack.c.l.bf16 %v374
      %v383 = vunpack.c.l.bf16 %v375
      %v384 = vunpack.c.l.bf16 %v376
      %v385 = vunpack.c.l.bf16 %v377
      %v386 = vunpack.c.l.bf16 %v378
      %v387 = vunpack.c.l.bf16 %v379
      %v388 = vunpack.c.l.bf16 %v380
      %v389 = vld [vmem:[%s4] sm:$0x1]
      %v391 = vlaneseq
      %v392 = vshrl.u32 %v391, 7
      %v393 = vsub.s32 0, %v392
      %v394 = vrot.slane %v389, %v393
      %v396 = vmul.f32 %v381, %v394
      %v397 = vmul.f32 %v382, %v394
      %v398 = vmul.f32 %v383, %v394
      %v399 = vmul.f32 %v384, %v394
      %v400 = vmul.f32 %v385, %v394
      %v401 = vmul.f32 %v386, %v394
      %v402 = vmul.f32 %v387, %v394
      %v403 = vmul.f32 %v388, %v394
      %v404 = vadd.f32 %v365, %v396
      %v405 = vadd.f32 %v366, %v397
      %v406 = vadd.f32 %v367, %v398
      %v407 = vadd.f32 %v368, %v399
      %v408 = vadd.f32 %v369, %v400
      %v409 = vadd.f32 %v370, %v401
      %v410 = vadd.f32 %v371, %v402
      %v411 = vadd.f32 %v372, %v403
      %v412 = vld [vmem:[%s5] sm:$0x1]
      %v414 = vlaneseq
      %v415 = vshrl.u32 %v414, 7
      %v416 = vsub.s32 0, %v415
      %v417 = vrot.slane %v412, %v416
      %v419 = vadd.f32 %v404, %v417
      %v420 = vadd.f32 %v405, %v417
      %v421 = vadd.f32 %v406, %v417
      %v422 = vadd.f32 %v407, %v417
      %v423 = vadd.f32 %v408, %v417
      %v424 = vadd.f32 %v409, %v417
      %v425 = vadd.f32 %v410, %v417
      %v426 = vadd.f32 %v411, %v417
      %v427 = vmax.f32 %v419, 0.0
      %v428 = vmax.f32 %v420, 0.0
      %v429 = vmax.f32 %v421, 0.0
      %v430 = vmax.f32 %v422, 0.0
      %v431 = vmax.f32 %v423, 0.0
      %v432 = vmax.f32 %v424, 0.0
      %v433 = vmax.f32 %v425, 0.0
      %v434 = vmax.f32 %v426, 0.0
      %v435 = vpack.c.bf16 %v427, %v427
      %v436 = vpack.c.bf16 %v428, %v428
      %v437 = vpack.c.bf16 %v429, %v429
      %v438 = vpack.c.bf16 %v430, %v430
      %v439 = vpack.c.bf16 %v431, %v431
      %v440 = vpack.c.bf16 %v432, %v432
      %v441 = vpack.c.bf16 %v433, %v433
      %v442 = vpack.c.bf16 %v434, %v434
      %443 = vst [vmem:[%s325] sm:$0xf] %v435
      %444 = vst [vmem:[%s325 + $0x4] sm:$0xf] %v436
      %445 = vst [vmem:[%s325 + $0x8] sm:$0xf] %v437
      %446 = vst [vmem:[%s325 + $0xc] sm:$0xf] %v438
      %447 = vst [vmem:[%s325 + $0x10] sm:$0xf] %v439
      %448 = vst [vmem:[%s325 + $0x14] sm:$0xf] %v440
      %449 = vst [vmem:[%s325 + $0x18] sm:$0xf] %v441
      %450 = vst [vmem:[%s325 + $0x1c] sm:$0xf] %v442
      %s451 = smul.u32 8, %s22
      %p452 = scmp.lt.s32.totalorder %s21, 1
      %s453 = scalar_select %p452, %s21, 1
      %p454 = scmp.lt.s32.totalorder %s451, 7
      %s455 = scalar_select %p454, %s451, 7
      %s456 = smul.addr %s453, 8
      %s457 = sadd.s32 %s455, %s456
      %s458 = smul.addr %s457, 4
      %s459 = scalar_lea.vmem %s6, %s458
      // Predicated region
      $region45: #{p4m_basic_block_fwd.7} parent=43 // pred_check
        %p460 = pneg %p189
      $region46: #{p4m_basic_block_fwd.7} parent=43 // pred_check_branch
        %462 = sbr.rel (%p460) target = $region48
      $region47: #{p4m_basic_block_fwd.7} parent=43 // pred_region
        %s463 = smul.u32 8, %s22
      $region48: #{p4m_basic_block_fwd.7} parent=43 // pred_fallthru
        _
    $region44: #{p4m_basic_block_fwd.7} parent=5 // pred_fallthru
      _
    %p464 = scmp.le.s32.totalorder 2, %s12
    // Predicated region
    $region49: #{p4m_basic_block_fwd.7} parent=5 // pred_check
      %p465 = pneg %p464
    $region50: #{p4m_basic_block_fwd.7} parent=5 // pred_check_branch
      %467 = sbr.rel (%p465) target = $region52
    $region51: #{p4m_basic_block_fwd.7} parent=5 // pred_region
      %s468 = ssub.s32 %s12, 2
      // Predicated region
      $region53: #{p4m_basic_block_fwd.7} parent=51 // pred_check
        %p469 = pneg %p195
      $region54: #{p4m_basic_block_fwd.7} parent=51 // pred_check_branch
        %471 = sbr.rel (%p469) target = $region56
      $region55: #{p4m_basic_block_fwd.7} parent=51 // pred_region
        %s472 = smul.u32 8, %s24
        %p473 = scmp.lt.s32.totalorder %s23, 1
        %s474 = scalar_select %p473, %s23, 1
        %p475 = scmp.lt.s32.totalorder %s472, 7
        %s476 = scalar_select %p475, %s472, 7
        %s477 = smul.addr %s474, 8
        %s478 = sadd.s32 %s476, %s477
        %s479 = smul.addr %s478, 4
        %s480 = scalar_lea.vmem %s6, %s479
      $region56: #{p4m_basic_block_fwd.7} parent=51 // pred_fallthru
        _
    $region52: #{p4m_basic_block_fwd.7} parent=5 // pred_fallthru
      _
  $region6: #{p4m_basic_block_fwd.7} parent=0 // loop_footer
    %s16 = sadd.s32 1, %s12
  $region7: #{p4m_basic_block_fwd.7} parent=0 // loop_footer_branch
    %11 = sbr.rel target = $region3
  $region8: #{p4m_basic_block_fwd.7} parent=0 // loop_exit
    _

// kernel: p4m_basic_block_fwd.4
$region0: #{p4m_basic_block_fwd.4}
  #allocation0 [shape = 'u32[]', space=smem, size = 0x4, offset = 0x4, fixed_abs, tag = 'smem constant byte address 0x4 - core index']
  #allocation1 [shape = 'u32[144,128]{1,0:T(1,128)}', space=vmem, size = 0x12000, scoped, tag = 'internal scratch']
  #allocation2 [shape = 'f32[10,10,128]{2,1,0:T(8,128)}', space=vmem, size = 0x14000, scoped, tag = 'scratch operand']
  %s0 = inlined_call_operand.vmem [shape: bf16[2,8,8,128], index: 0, kind: input, shape index: {}]
  %s1 = inlined_call_operand.vmem [shape: bf16[3,3,128,128], index: 1, kind: input, shape index: {}]
  %s2 = inlined_call_operand.vmem [shape: bf16[2,8,8,128], index: 2, kind: output, shape index: {0}]
  %s3 = inlined_call_operand.vmem [shape: f32[2,1,1,128], index: 3, kind: output, shape index: {1}]
  %s4 = inlined_call_operand.vmem [shape: f32[2,1,1,128], index: 4, kind: output, shape index: {2}]
  %5 = xla_tuple %s2, %s3, %s4
  %s6 = sld [smem:[#allocation0]]
  $region61: #{p4m_basic_block_fwd.4} parent=0
    _
  %s8 = ssub.s32 1, %s6
  %s9 = scalar_select 0, %s8, %s6
  loop: start=0, step=1, limit=4
  $region2: #{p4m_basic_block_fwd.4} parent=0 // loop_pre_header
    _
  $region3: #{p4m_basic_block_fwd.4} parent=0 // loop_header
    %s11 = sphi 0, %s15
    %p12 = scmp.ge.s32.totalorder %s11, 4
    %s18 = sphi 0, %s37
    %s19 = sphi 0, %s33
    %s20 = sphi 0, %s29
    %s21 = sphi 0, %s18
    %s22 = sphi 0, %s19
    %s23 = sphi 0, %s20
    %s24 = sphi 0, %s21
    %s25 = sphi 0, %s22
    %s26 = sphi 0, %s23
    %s40 = sphi 0, %s42
    %s43 = sphi 0, %s40
    %s44 = sphi 0, %s43
    %s60 = sphi 0, %s44
    %s66 = sphi 0, %s68
    %s69 = sphi 0, %s66
    %s70 = sphi 0, %s69
    %s86 = sphi 0, %s70
    %s96 = sphi 0, %s98
    %s99 = sphi 0, %s96
    %s100 = sphi 0, %s99
    %s116 = sphi 0, %s100
    %s126 = sphi 0, %s128
    %s129 = sphi 0, %s126
    %s130 = sphi 0, %s129
    %s146 = sphi 0, %s130
    %s156 = sphi 0, %s158
    %s159 = sphi 0, %s156
    %s160 = sphi 0, %s159
    %s176 = sphi 0, %s160
  $region4: #{p4m_basic_block_fwd.4} parent=0 // loop_header_branch
    %14 = sbr.rel (%p12) target = $region8
  $region5: #{p4m_basic_block_fwd.4} parent=0 // loop_body
    %s16 = ssub.s32 %s11, 1
    %s17 = ssub.s32 %s11, 2
    %s27 = sadd.s32 1, %s20
    %p28 = scmp.ge.s32.totalorder %s27, 1
    %s29 = scalar_select %p28, 0, %s27
    %s30 = sadd.s32 1, %s19
    %s31 = scalar_select %p28, %s30, %s19
    %p32 = scmp.ge.s32.totalorder %s31, 2
    %s33 = scalar_select %p32, 0, %s31
    %s34 = sadd.s32 1, %s18
    %s35 = scalar_select %p32, %s34, %s18
    %p36 = scmp.ge.s32.totalorder %s35, 1
    %s37 = scalar_select %p36, 0, %s35
    %s38 = ssub.s32 %s19, %s33
    %p39 = scmp.eq.s32.totalorder %s38, 0
    %s41 = sadd.s32 %s40, 1
    %s42 = scalar_select %p39, %s40, %s41
    %p45 = pneg %p39
    %p46 = scmp.eq.s32.totalorder %s11, 1
    %p47 = por %p45, %p46
    %p48 = scmp.ne.s32.totalorder %s40, %s43
    %p49 = scmp.eq.s32.totalorder %s11, 0
    %p50 = por %p48, %p49
    %p51 = scmp.ne.s32.totalorder %s40, %s43
    %p52 = scmp.eq.s32.totalorder %s16, 1
    %p53 = por %p51, %p52
    %p54 = scmp.ne.s32.totalorder %s43, %s44
    %p55 = scmp.eq.s32.totalorder %s16, 0
    %p56 = por %p54, %p55
    %p57 = scmp.ne.s32.totalorder %s43, %s44
    %p58 = scmp.eq.s32.totalorder %s17, 1
    %p59 = por %p57, %p58
    %p61 = scmp.ne.s32.totalorder %s44, %s60
    %p62 = scmp.eq.s32.totalorder %s17, 0
    %p63 = por %p61, %p62
    %s64 = ssub.s32 %s18, %s37
    %p65 = scmp.eq.s32.totalorder %s64, 0
    %s67 = sadd.s32 %s66, 1
    %s68 = scalar_select %p65, %s66, %s67
    %p71 = pneg %p65
    %p72 = scmp.eq.s32.totalorder %s11, 1
    %p73 = por %p71, %p72
    %p74 = scmp.ne.s32.totalorder %s66, %s69
    %p75 = scmp.eq.s32.totalorder %s11, 0
    %p76 = por %p74, %p75
    %p77 = scmp.ne.s32.totalorder %s66, %s69
    %p78 = scmp.eq.s32.totalorder %s16, 1
    %p79 = por %p77, %p78
    %p80 = scmp.ne.s32.totalorder %s69, %s70
    %p81 = scmp.eq.s32.totalorder %s16, 0
    %p82 = por %p80, %p81
    %p83 = scmp.ne.s32.totalorder %s69, %s70
    %p84 = scmp.eq.s32.totalorder %s17, 1
    %p85 = por %p83, %p84
    %p87 = scmp.ne.s32.totalorder %s70, %s86
    %p88 = scmp.eq.s32.totalorder %s17, 0
    %p89 = por %p87, %p88
    %s90 = ssub.s32 %s19, %s33
    %s91 = ssub.s32 %s20, %s29
    %s92 = sor.u32 %s90, %s91
    %s93 = ssub.s32 %s18, %s37
    %s94 = sor.u32 %s92, %s93
    %p95 = scmp.eq.s32.totalorder %s94, 0
    %s97 = sadd.s32 %s96, 1
    %s98 = scalar_select %p95, %s96, %s97
    %p101 = pneg %p95
    %p102 = scmp.eq.s32.totalorder %s11, 1
    %p103 = por %p101, %p102
    %p104 = scmp.ne.s32.totalorder %s96, %s99
    %p105 = scmp.eq.s32.totalorder %s11, 0
    %p106 = por %p104, %p105
    %p107 = scmp.ne.s32.totalorder %s96, %s99
    %p108 = scmp.eq.s32.totalorder %s16, 1
    %p109 = por %p107, %p108
    %p110 = scmp.ne.s32.totalorder %s99, %s100
    %p111 = scmp.eq.s32.totalorder %s16, 0
    %p112 = por %p110, %p111
    %p113 = scmp.ne.s32.totalorder %s99, %s100
    %p114 = scmp.eq.s32.totalorder %s17, 1
    %p115 = por %p113, %p114
    %p117 = scmp.ne.s32.totalorder %s100, %s116
    %p118 = scmp.eq.s32.totalorder %s17, 0
    %p119 = por %p117, %p118
    %s120 = ssub.s32 %s19, %s33
    %s121 = ssub.s32 %s20, %s29
    %s122 = sor.u32 %s120, %s121
    %s123 = ssub.s32 %s18, %s37
    %s124 = sor.u32 %s122, %s123
    %p125 = scmp.eq.s32.totalorder %s124, 0
    %s127 = sadd.s32 %s126, 1
    %s128 = scalar_select %p125, %s126, %s127
    %p131 = pneg %p125
    %p132 = scmp.eq.s32.totalorder %s11, 1
    %p133 = por %p131, %p132
    %p134 = scmp.ne.s32.totalorder %s126, %s129
    %p135 = scmp.eq.s32.totalorder %s11, 0
    %p136 = por %p134, %p135
    %p137 = scmp.ne.s32.totalorder %s126, %s129
    %p138 = scmp.eq.s32.totalorder %s16, 1
    %p139 = por %p137, %p138
    %p140 = scmp.ne.s32.totalorder %s129, %s130
    %p141 = scmp.eq.s32.totalorder %s16, 0
    %p142 = por %p140, %p141
    %p143 = scmp.ne.s32.totalorder %s129, %s130
    %p144 = scmp.eq.s32.totalorder %s17, 1
    %p145 = por %p143, %p144
    %p147 = scmp.ne.s32.totalorder %s130, %s146
    %p148 = scmp.eq.s32.totalorder %s17, 0
    %p149 = por %p147, %p148
    %s150 = ssub.s32 %s19, %s33
    %s151 = ssub.s32 %s20, %s29
    %s152 = sor.u32 %s150, %s151
    %s153 = ssub.s32 %s18, %s37
    %s154 = sor.u32 %s152, %s153
    %p155 = scmp.eq.s32.totalorder %s154, 0
    %s157 = sadd.s32 %s156, 1
    %s158 = scalar_select %p155, %s156, %s157
    %p161 = pneg %p155
    %p162 = scmp.eq.s32.totalorder %s11, 1
    %p163 = por %p161, %p162
    %p164 = scmp.ne.s32.totalorder %s156, %s159
    %p165 = scmp.eq.s32.totalorder %s11, 0
    %p166 = por %p164, %p165
    %p167 = scmp.ne.s32.totalorder %s156, %s159
    %p168 = scmp.eq.s32.totalorder %s16, 1
    %p169 = por %p167, %p168
    %p170 = scmp.ne.s32.totalorder %s159, %s160
    %p171 = scmp.eq.s32.totalorder %s16, 0
    %p172 = por %p170, %p171
    %p173 = scmp.ne.s32.totalorder %s159, %s160
    %p174 = scmp.eq.s32.totalorder %s17, 1
    %p175 = por %p173, %p174
    %p177 = scmp.ne.s32.totalorder %s160, %s176
    %p178 = scmp.eq.s32.totalorder %s17, 0
    %p179 = por %p177, %p178
    %p180 = scmp.le.s32.totalorder 1, %s11
    %p181 = scmp.lt.s32.totalorder %s11, 3
    %p182 = pnand %p180, %p181
    %p183 = pneg %p182
    // Predicated region
    $region9: #{p4m_basic_block_fwd.4} parent=5 // pred_check
      _
    $region10: #{p4m_basic_block_fwd.4} parent=5 // pred_check_branch
      %185 = sbr.rel (%p182) target = $region12
    $region11: #{p4m_basic_block_fwd.4} parent=5 // pred_region
      %s186 = ssub.s32 %s11, 1
      // Predicated region
      $region13: #{p4m_basic_block_fwd.4} parent=11 // pred_check
        %p187 = pneg %p82
      $region14: #{p4m_basic_block_fwd.4} parent=11 // pred_check_branch
        %189 = sbr.rel (%p187) target = $region16
      $region15: #{p4m_basic_block_fwd.4} parent=11 // pred_region
        %p190 = scmp.lt.s32.totalorder %s21, 0
        %s191 = scalar_select %p190, %s21, 0
        %s192 = smul.addr %s191, 4
        %s193 = scalar_lea.vmem %s1, %s192
      $region16: #{p4m_basic_block_fwd.4} parent=11 // pred_fallthru
        _
    $region12: #{p4m_basic_block_fwd.4} parent=5 // pred_fallthru
      _
    %p194 = scmp.lt.s32.totalorder %s11, 2
    // Predicated region
    $region17: #{p4m_basic_block_fwd.4} parent=5 // pred_check
      %p195 = pneg %p194
    $region18: #{p4m_basic_block_fwd.4} parent=5 // pred_check_branch
      %197 = sbr.rel (%p195) target = $region20
    $region19: #{p4m_basic_block_fwd.4} parent=5 // pred_region
      // Predicated region
      $region21: #{p4m_basic_block_fwd.4} parent=19 // pred_check
        %p198 = pneg %p50
      $region22: #{p4m_basic_block_fwd.4} parent=19 // pred_check_branch
        %200 = sbr.rel (%p198) target = $region24
      $region23: #{p4m_basic_block_fwd.4} parent=19 // pred_region
        %p201 = scmp.lt.s32.totalorder %s19, 1
        %s202 = scalar_select %p201, %s19, 1
        %s203 = smul.addr %s202, 8
        %s204 = smul.addr %s203, 4
        %s205 = scalar_lea.vmem %s0, %s204
      $region24: #{p4m_basic_block_fwd.4} parent=19 // pred_fallthru
        _
    $region20: #{p4m_basic_block_fwd.4} parent=5 // pred_fallthru
      _
    %p206 = scmp.le.s32.totalorder 1, %s11
    %p207 = scmp.lt.s32.totalorder %s11, 3
    %p208 = pnand %p206, %p207
    %p209 = pneg %p208
    // Predicated region
    $region25: #{p4m_basic_block_fwd.4} parent=5 // pred_check
      _
    $region26: #{p4m_basic_block_fwd.4} parent=5 // pred_check_branch
      %211 = sbr.rel (%p208) target = $region28
    $region27: #{p4m_basic_block_fwd.4} parent=5 // pred_region
      %s212 = ssub.s32 %s11, 1
      %p213 = scmp.lt.s32.totalorder %s22, 1
      %s214 = scalar_select %p213, %s22, 1
      %s215 = smul.addr %s214, 8
      %s216 = smul.addr %s215, 4
      %s217 = scalar_lea.vmem %s0, %s216
      %p218 = pneg %p56
      %p219 = pneg %p53
      %p220 = scmp.lt.s32.totalorder %s21, 0
      %s221 = scalar_select %p220, %s21, 0
      %s222 = smul.addr %s221, 4
      %s223 = scalar_lea.vmem %s1, %s222
      %p224 = pneg %p82
      %p225 = pneg %p79
      %p226 = pneg %p112
      %p227 = pneg %p109
      %s228 = smul.u32 8, %s23
      %p229 = scmp.lt.s32.totalorder %s22, 1
      %s230 = scalar_select %p229, %s22, 1
      %p231 = scmp.lt.s32.totalorder %s228, 7
      %s232 = scalar_select %p231, %s228, 7
      %p233 = scmp.lt.s32.totalorder %s21, 0
      %s234 = scalar_select %p233, %s21, 0
      %s235 = sadd.s32 %s234, %s232
      %s236 = smul.addr %s230, 8
      %s237 = sadd.s32 %s235, %s236
      %s238 = smul.addr %s237, 4
      %s239 = scalar_lea.vmem %s2, %s238
      %p240 = pneg %p142
      %p241 = pneg %p139
      %p242 = scmp.lt.s32.totalorder %s22, 1
      %s243 = scalar_select %p242, %s22, 1
      %p244 = scmp.lt.s32.totalorder %s23, 0
      %s245 = scalar_select %p244, %s23, 0
      %p246 = scmp.lt.s32.totalorder %s21, 0
      %s247 = scalar_select %p246, %s21, 0
      %s248 = sadd.s32 %s247, %s245
      %s249 = sadd.s32 %s248, %s243
      %s250 = scalar_lea.vmem %s3, %s249
      %p251 = pneg %p172
      %p252 = pneg %p169
      %p253 = scmp.lt.s32.totalorder %s22, 1
      %s254 = scalar_select %p253, %s22, 1
      %p255 = scmp.lt.s32.totalorder %s23, 0
      %s256 = scalar_select %p255, %s23, 0
      %p257 = scmp.lt.s32.totalorder %s21, 0
      %s258 = scalar_select %p257, %s21, 0
      %s259 = sadd.s32 %s258, %s256
      %s260 = sadd.s32 %s259, %s254
      %s261 = scalar_lea.vmem %s4, %s260
      %p262 = scmp.lt.s32.totalorder %s22, 1
      %s263 = scalar_select %p262, %s22, 1
      %s264 = smul.addr %s263, 8
      %s265 = smul.addr %s264, 4
      %s266 = scalar_lea.vmem %s0, %s265
      %p267 = scmp.lt.s32.totalorder %s21, 0
      %s268 = scalar_select %p267, %s21, 0
      %s269 = smul.addr %s268, 4
      %s270 = scalar_lea.vmem %s1, %s269
      %s271 = smul.u32 8, %s23
      %p272 = scmp.lt.s32.totalorder %s22, 1
      %s273 = scalar_select %p272, %s22, 1
      %p274 = scmp.lt.s32.totalorder %s271, 7
      %s275 = scalar_select %p274, %s271, 7
      %p276 = scmp.lt.s32.totalorder %s21, 0
      %s277 = scalar_select %p276, %s21, 0
      %s278 = sadd.s32 %s277, %s275
      %s279 = smul.addr %s273, 8
      %s280 = sadd.s32 %s278, %s279
      %s281 = smul.addr %s280, 4
      %s282 = scalar_lea.vmem %s2, %s281
      %s283 = smul.u32 8, %s23
      %p284 = scmp.lt.s32.totalorder %s22, 1
      %s285 = scalar_select %p284, %s22, 1
      %p286 = scmp.lt.s32.totalorder %s23, 0
      %s287 = scalar_select %p286, %s23, 0
      %p288 = scmp.lt.s32.totalorder %s21, 0
      %s289 = scalar_select %p288, %s21, 0
      %s290 = sadd.s32 %s289, %s287
      %s291 = sadd.s32 %s290, %s285
      %s292 = scalar_lea.vmem %s3, %s291
      %p293 = scmp.lt.s32.totalorder %s22, 1
      %s294 = scalar_select %p293, %s22, 1
      %p295 = scmp.lt.s32.totalorder %s23, 0
      %s296 = scalar_select %p295, %s23, 0
      %p297 = scmp.lt.s32.totalorder %s21, 0
      %s298 = scalar_select %p297, %s21, 0
      %s299 = sadd.s32 %s298, %s296
      %s300 = sadd.s32 %s299, %s294
      %s301 = scalar_lea.vmem %s4, %s300
      %p303 = scmp.eq.s32.totalorder %s23, 0
      // Predicated region
      $region29: #{p4m_basic_block_fwd.4} parent=27 // pred_check
        %p304 = pneg %p303
      $region30: #{p4m_basic_block_fwd.4} parent=27 // pred_check_branch
        %306 = sbr.rel (%p304) target = $region32
      $region31: #{p4m_basic_block_fwd.4} parent=27 // pred_region
        %307 = vst [vmem:[#allocation2] sm:$0xff] 0.0
        %308 = vst [vmem:[#allocation2 + $0x8] sm:$0x3] 0.0
        %309 = vst [vmem:[#allocation2 + $0x10] sm:$0xff] 0.0
        %310 = vst [vmem:[#allocation2 + $0x18] sm:$0x3] 0.0
        %311 = vst [vmem:[#allocation2 + $0x20] sm:$0xff] 0.0
        %312 = vst [vmem:[#allocation2 + $0x28] sm:$0x3] 0.0
        %313 = vst [vmem:[#allocation2 + $0x30] sm:$0xff] 0.0
        %314 = vst [vmem:[#allocation2 + $0x38] sm:$0x3] 0.0
        %315 = vst [vmem:[#allocation2 + $0x40] sm:$0xff] 0.0
        %316 = vst [vmem:[#allocation2 + $0x48] sm:$0x3] 0.0
        %317 = vst [vmem:[#allocation2 + $0x50] sm:$0xff] 0.0
        %318 = vst [vmem:[#allocation2 + $0x58] sm:$0x3] 0.0
        %319 = vst [vmem:[#allocation2 + $0x60] sm:$0xff] 0.0
        %320 = vst [vmem:[#allocation2 + $0x68] sm:$0x3] 0.0
        %321 = vst [vmem:[#allocation2 + $0x70] sm:$0xff] 0.0
        %322 = vst [vmem:[#allocation2 + $0x78] sm:$0x3] 0.0
        %323 = vst [vmem:[#allocation2 + $0x80] sm:$0xff] 0.0
        %324 = vst [vmem:[#allocation2 + $0x88] sm:$0x3] 0.0
        %325 = vst [vmem:[#allocation2 + $0x90] sm:$0xff] 0.0
        %326 = vst [vmem:[#allocation2 + $0x98] sm:$0x3] 0.0
        %v327 = vld [vmem:[%s266] sm:$0xf]
        %v328 = vld [vmem:[%s266 + $0x4] sm:$0xf]
        %v329 = vld [vmem:[%s266 + $0x8] sm:$0xf]
        %v330 = vld [vmem:[%s266 + $0xc] sm:$0xf]
        %v331 = vld [vmem:[%s266 + $0x10] sm:$0xf]
        %v332 = vld [vmem:[%s266 + $0x14] sm:$0xf]
        %v333 = vld [vmem:[%s266 + $0x18] sm:$0xf]
        %v334 = vld [vmem:[%s266 + $0x1c] sm:$0xf]
        %v335 = vunpack.c.l.bf16 %v327
        %v336 = vunpack.c.l.bf16 %v328
        %v337 = vunpack.c.l.bf16 %v329
        %v338 = vunpack.c.l.bf16 %v330
        %v339 = vunpack.c.l.bf16 %v331
        %v340 = vunpack.c.l.bf16 %v332
        %v341 = vunpack.c.l.bf16 %v333
        %v342 = vunpack.c.l.bf16 %v334
        %s343 = scalar_lea.vmem [#allocation2], 16
        %344 = vst [vmem:[%s343 + $0x1] sm:$0xff] %v335
        %345 = vst [vmem:[%s343 + $0x11] sm:$0xff] %v336
        %346 = vst [vmem:[%s343 + $0x21] sm:$0xff] %v337
        %347 = vst [vmem:[%s343 + $0x31] sm:$0xff] %v338
        %348 = vst [vmem:[%s343 + $0x41] sm:$0xff] %v339
        %349 = vst [vmem:[%s343 + $0x51] sm:$0xff] %v340
        %350 = vst [vmem:[%s343 + $0x61] sm:$0xff] %v341
        %351 = vst [vmem:[%s343 + $0x71] sm:$0xff] %v342
      $region32: #{p4m_basic_block_fwd.4} parent=27 // pred_fallthru
        _
      %s352 = smul.u32 %s23, 8
      %s353 = smul.u32 %s352, 16
      %s354 = scalar_lea.vmem [#allocation2], %s353
      %v355 = vld [vmem:[%s354] sm:$0xff]
      %v356 = vld [vmem:[%s354 + $0x8] sm:$0x3]
      %v357 = vld [vmem:[%s354 + $0x10] sm:$0xff]
      %v358 = vld [vmem:[%s354 + $0x18] sm:$0x3]
      %v359 = vld [vmem:[%s354 + $0x20] sm:$0xff]
      %v360 = vld [vmem:[%s354 + $0x28] sm:$0x3]
      %v361 = vld [vmem:[%s354 + $0x30] sm:$0xff]
      %v362 = vld [vmem:[%s354 + $0x38] sm:$0x3]
      %v363 = vld [vmem:[%s354 + $0x40] sm:$0xff]
      %v364 = vld [vmem:[%s354 + $0x48] sm:$0x3]
      %v365 = vld [vmem:[%s354 + $0x50] sm:$0xff]
      %v366 = vld [vmem:[%s354 + $0x58] sm:$0x3]
      %v367 = vld [vmem:[%s354 + $0x60] sm:$0xff]
      %v368 = vld [vmem:[%s354 + $0x68] sm:$0x3]
      %v369 = vld [vmem:[%s354 + $0x70] sm:$0xff]
      %v370 = vld [vmem:[%s354 + $0x78] sm:$0x3]
      %v371 = vld [vmem:[%s354 + $0x80] sm:$0xff]
      %v372 = vld [vmem:[%s354 + $0x88] sm:$0x3]
      %v373 = vld [vmem:[%s354 + $0x90] sm:$0xff]
      %v374 = vld [vmem:[%s354 + $0x98] sm:$0x3]
      %v375 = vpack.c.bf16 %v356, %v355
      %v376 = vpack.c.bf16 %v358, %v357
      %v377 = vpack.c.bf16 %v360, %v359
      %v378 = vpack.c.bf16 %v362, %v361
      %v379 = vpack.c.bf16 %v364, %v363
      %v380 = vpack.c.bf16 %v366, %v365
      %v381 = vpack.c.bf16 %v368, %v367
      %v382 = vpack.c.bf16 %v370, %v369
      %v383 = vpack.c.bf16 %v372, %v371
      %v384 = vpack.c.bf16 %v374, %v373
      %v385 = vld [vmem:[%s270] sm:$0xf]
      %v386 = vld [vmem:[%s270 + $0x4] sm:$0xf]
      %v387 = vld [vmem:[%s270 + $0x8] sm:$0xf]
      %v388 = vld [vmem:[%s270 + $0xc] sm:$0xf]
      %v389 = vld [vmem:[%s270 + $0x10] sm:$0xf]
      %v390 = vld [vmem:[%s270 + $0x14] sm:$0xf]
      %v391 = vld [vmem:[%s270 + $0x18] sm:$0xf]
      %v392 = vld [vmem:[%s270 + $0x1c] sm:$0xf]
      %v393 = vld [vmem:[%s270 + $0x20] sm:$0xf]
      %v394 = vld [vmem:[%s270 + $0x24] sm:$0xf]
      %v395 = vld [vmem:[%s270 + $0x28] sm:$0xf]
      %v396 = vld [vmem:[%s270 + $0x2c] sm:$0xf]
      %v397 = vld [vmem:[%s270 + $0x30] sm:$0xf]
      %v398 = vld [vmem:[%s270 + $0x34] sm:$0xf]
      %v399 = vld [vmem:[%s270 + $0x38] sm:$0xf]
      %v400 = vld [vmem:[%s270 + $0x3c] sm:$0xf]
      %v409 = vunpack.c.l.b16 %v375
      %v410 = vunpack.c.h.b16 %v375
      %v411 = vunpack.c.l.b16 %v376
      %v412 = vunpack.c.h.b16 %v376
      %v413 = vunpack.c.l.b16 %v377
      %v414 = vunpack.c.h.b16 %v377
      %v415 = vunpack.c.l.b16 %v378
      %v416 = vunpack.c.h.b16 %v378
      %v417 = vunpack.c.l.b16 %v379
      %v418 = vunpack.c.h.b16 %v379
      %v419 = vunpack.c.l.b16 %v380
      %v420 = vunpack.c.h.b16 %v380
      %v421 = vunpack.c.l.b16 %v381
      %v422 = vunpack.c.h.b16 %v381
      %v423 = vunpack.c.l.b16 %v382
      %v424 = vunpack.c.h.b16 %v382
      %v425 = vpack.c.b16 %v409, %v409
      %v426 = vpack.c.b16 %v410, %v410
      %v427 = vpack.c.b16 %v411, %v411
      %v428 = vpack.c.b16 %v412, %v412
      %v429 = vpack.c.b16 %v413, %v413
      %v430 = vpack.c.b16 %v414, %v414
      %v431 = vpack.c.b16 %v415, %v415
      %v432 = vpack.c.b16 %v416, %v416
      %v433 = vpack.c.b16 %v417, %v417
      %v434 = vpack.c.b16 %v418, %v418
      %v435 = vpack.c.b16 %v419, %v419
      %v436 = vpack.c.b16 %v420, %v420
      %v437 = vpack.c.b16 %v421, %v421
      %v438 = vpack.c.b16 %v422, %v422
      %v439 = vpack.c.b16 %v423, %v423
      %v440 = vpack.c.b16 %v424, %v424
      %vm441 = vsmask.f32 3328
      %vm442 = vsmask.f32 7440
      %vm443 = vmor %vm441, %vm442
      %v445 = vshrl.u32 %v425, 16
      %v447 = vrot.slane %v445, 4
      %v448 = vshll.u32 %v425, 16
      %v450 = vrot.slane %v448, 5
      %v451 = vor.u32 %v447, %v450
      %v452 = vrot.slane %v451, 4
      %v454 = vshll.u32 %v426, 16
      %v456 = vrot.slane %v454, 5
      %v457 = vsel %vm443, %v452, %v456
      %v459 = vshrl.u32 %v427, 16
      %v461 = vrot.slane %v459, 4
      %v462 = vshll.u32 %v427, 16
      %v464 = vrot.slane %v462, 5
      %v465 = vor.u32 %v461, %v464
      %v466 = vrot.slane %v465, 4
      %v468 = vshll.u32 %v428, 16
      %v470 = vrot.slane %v468, 5
      %v471 = vsel %vm443, %v466, %v470
      %v473 = vshrl.u32 %v429, 16
      %v475 = vrot.slane %v473, 4
      %v476 = vshll.u32 %v429, 16
      %v478 = vrot.slane %v476, 5
      %v479 = vor.u32 %v475, %v478
      %v480 = vrot.slane %v479, 4
      %v482 = vshll.u32 %v430, 16
      %v484 = vrot.slane %v482, 5
      %v485 = vsel %vm443, %v480, %v484
      %v487 = vshrl.u32 %v431, 16
      %v489 = vrot.slane %v487, 4
      %v490 = vshll.u32 %v431, 16
      %v492 = vrot.slane %v490, 5
      %v493 = vor.u32 %v489, %v492
      %v494 = vrot.slane %v493, 4
      %v496 = vshll.u32 %v432, 16
      %v498 = vrot.slane %v496, 5
      %v499 = vsel %vm443, %v494, %v498
      %v501 = vshrl.u32 %v433, 16
      %v503 = vrot.slane %v501, 4
      %v504 = vshll.u32 %v433, 16
      %v506 = vrot.slane %v504, 5
      %v507 = vor.u32 %v503, %v506
      %v508 = vrot.slane %v507, 4
      %v510 = vshll.u32 %v434, 16
      %v512 = vrot.slane %v510, 5
      %v513 = vsel %vm443, %v508, %v512
      %v515 = vshrl.u32 %v435, 16
      %v517 = vrot.slane %v515, 4
      %v518 = vshll.u32 %v435, 16
      %v520 = vrot.slane %v518, 5
      %v521 = vor.u32 %v517, %v520
      %v522 = vrot.slane %v521, 4
      %v524 = vshll.u32 %v436, 16
      %v526 = vrot.slane %v524, 5
      %v527 = vsel %vm443, %v522, %v526
      %v529 = vshrl.u32 %v437, 16
      %v531 = vrot.slane %v529, 4
      %v532 = vshll.u32 %v437, 16
      %v534 = vrot.slane %v532, 5
      %v535 = vor.u32 %v531, %v534
      %v536 = vrot.slane %v535, 4
      %v538 = vshll.u32 %v438, 16
      %v540 = vrot.slane %v538, 5
      %v541 = vsel %vm443, %v536, %v540
      %v543 = vshrl.u32 %v439, 16
      %v545 = vrot.slane %v543, 4
      %v546 = vshll.u32 %v439, 16
      %v548 = vrot.slane %v546, 5
      %v549 = vor.u32 %v545, %v548
      %v550 = vrot.slane %v549, 4
      %v552 = vshll.u32 %v440, 16
      %v554 = vrot.slane %v552, 5
      %v555 = vsel %vm443, %v550, %v554
      %s556 = scalar_lea.vmem %s270, 64
      %v557 = vld [vmem:[%s556] sm:$0xf]
      %v558 = vld [vmem:[%s556 + $0x4] sm:$0xf]
      %v559 = vld [vmem:[%s556 + $0x8] sm:$0xf]
      %v560 = vld [vmem:[%s556 + $0xc] sm:$0xf]
      %v561 = vld [vmem:[%s556 + $0x10] sm:$0xf]
      %v562 = vld [vmem:[%s556 + $0x14] sm:$0xf]
      %v563 = vld [vmem:[%s556 + $0x18] sm:$0xf]
      %v564 = vld [vmem:[%s556 + $0x1c] sm:$0xf]
      %v565 = vld [vmem:[%s556 + $0x20] sm:$0xf]
      %v566 = vld [vmem:[%s556 + $0x24] sm:$0xf]
      %v567 = vld [vmem:[%s556 + $0x28] sm:$0xf]
      %v568 = vld [vmem:[%s556 + $0x2c] sm:$0xf]
      %v569 = vld [vmem:[%s556 + $0x30] sm:$0xf]
      %v570 = vld [vmem:[%s556 + $0x34] sm:$0xf]
      %v571 = vld [vmem:[%s556 + $0x38] sm:$0xf]
      %v572 = vld [vmem:[%s556 + $0x3c] sm:$0xf]
      %v573 = vunpack.c.l.b16 %v457
      %v574 = vunpack.c.l.b16 %v471
      %v575 = vunpack.c.l.b16 %v485
      %v576 = vunpack.c.l.b16 %v499
      %v577 = vunpack.c.l.b16 %v513
      %v578 = vunpack.c.l.b16 %v527
      %v579 = vunpack.c.l.b16 %v541
      %v580 = vunpack.c.l.b16 %v555
      %v581 = vpack.c.b16 %v574, %v573
      %v582 = vpack.c.b16 %v576, %v575
      %v583 = vpack.c.b16 %v578, %v577
      %v584 = vpack.c.b16 %v580, %v579
      %v605 = vunpack.c.l.b16 %v557
      %v606 = vunpack.c.l.b16 %v558
      %v607 = vunpack.c.l.b16 %v559
      %v608 = vunpack.c.l.b16 %v560
      %v609 = vunpack.c.l.b16 %v561
      %v610 = vunpack.c.l.b16 %v562
      %v611 = vunpack.c.l.b16 %v563
      %v612 = vunpack.c.l.b16 %v564
      %v613 = vunpack.c.l.b16 %v565
      %v614 = vunpack.c.l.b16 %v566
      %v615 = vunpack.c.l.b16 %v567
      %v616 = vunpack.c.l.b16 %v568
      %v617 = vunpack.c.l.b16 %v569
      %v618 = vunpack.c.l.b16 %v570
      %v619 = vunpack.c.l.b16 %v571
      %v620 = vunpack.c.l.b16 %v572
      %v621 = vpack.c.b16 %v606, %v605
      %v622 = vpack.c.b16 %v608, %v607
      %v623 = vpack.c.b16 %v610, %v609
      %v624 = vpack.c.b16 %v612, %v611
      %v625 = vpack.c.b16 %v614, %v613
      %v626 = vpack.c.b16 %v616, %v615
      %v627 = vpack.c.b16 %v618, %v617
      %v628 = vpack.c.b16 %v620, %v619
      %637 = vmatprep.subr.bf16.mxu0 0
      %638 = vmatpush1.bf16.msra.mxu0 %v621
      %639 = vmatprep.subr.bf16.mxu0 0
      %640 = vmatpush1.bf16.msra.mxu0 %v622
      %641 = vmatprep.subr.bf16.mxu0 0
      %642 = vmatpush1.bf16.msra.mxu0 %v623
      %643 = vmatprep.subr.bf16.mxu0 0
      %644 = vmatpush1.bf16.msra.mxu0 %v624
      %645 = vmatprep.subr.bf16.mxu0 0
      %646 = vmatpush1.bf16.msra.mxu0 %v625
      %647 = vmatprep.subr.bf16.mxu0 0
      %648 = vmatpush1.bf16.msra.mxu0 %v626
      %649 = vmatprep.subr.bf16.mxu0 0
      %650 = vmatpush1.bf16.msra.mxu0 %v627
      %651 = vmatprep.subr.bf16.mxu0 0
      %652 = vmatpush1.bf16.msra.mxu0 %v628
      %653 = vmatprep.subr.bf16.mxu0 0
      %654 = vmatpush1.bf16.msra.mxu0 0
      %655 = vmatprep.subr.bf16.mxu0 0
      %656 = vmatpush1.bf16.msra.mxu0 0
      %657 = vmatprep.subr.bf16.mxu0 0
      %658 = vmatpush1.bf16.msra.mxu0 0
      %659 = vmatprep.subr.bf16.mxu0 0
      %660 = vmatpush1.bf16.msra.mxu0 0
      %661 = vmatprep.subr.bf16.mxu0 0
      %662 = vmatpush1.bf16.msra.mxu0 0
      %663 = vmatprep.subr.bf16.mxu0 0
      %664 = vmatpush1.bf16.msra.mxu0 0
      %665 = vmatprep.subr.bf16.mxu0 0
      %666 = vmatpush1.bf16.msra.mxu0 0
      %667 = vmatprep.subr.bf16.mxu0 0
      %668 = vmatpush1.bf16.msra.mxu0 0
      %669 = vmatprep.mubr.bf16.mxu0 0
      %670 = vmatmul.mubr.bf16.gmra.mrb[0].mxu0 %v581
      %v671 = vpop.f32.mrb[0].mxu0
      %v672 = vadd.f32 0.0, %v671
      %v673 = vpop.f32.mrb[0].mxu0
      %v674 = vpop.f32.mrb[0].mxu0
      %v675 = vadd.f32 0.0, %v674
      %v676 = vpop.f32.mrb[0].mxu0
      %677 = vmatprep.mubr.bf16.mxu0 0
      %678 = vmatmul.mubr.bf16.gmra.mrb[0].mxu0 %v582
      %v679 = vpop.f32.mrb[0].mxu0
      %v680 = vadd.f32 0.0, %v679
      %v681 = vpop.f32.mrb[0].mxu0
      %v682 = vpop.f32.mrb[0].mxu0
      %v683 = vadd.f32 0.0, %v682
      %v684 = vpop.f32.mrb[0].mxu0
      %685 = vmatprep.mubr.bf16.mxu0 0
      %686 = vmatmul.mubr.bf16.gmra.mrb[0].mxu0 %v583
      %v687 = vpop.f32.mrb[0].mxu0
      %v688 = vadd.f32 0.0, %v687
      %v689 = vpop.f32.mrb[0].mxu0
      %v690 = vpop.f32.mrb[0].mxu0
      %v691 = vadd.f32 0.0, %v690
      %v692 = vpop.f32.mrb[0].mxu0
      %693 = vmatprep.mubr.bf16.mxu0 0
      %694 = vmatmul.mubr.bf16.gmra.mrb[0].mxu0 %v584
      %v695 = vpop.f32.mrb[0].mxu0
      %v696 = vadd.f32 0.0, %v695
      %v697 = vpop.f32.mrb[0].mxu0
      %v698 = vpop.f32.mrb[0].mxu0
      %v699 = vadd.f32 0.0, %v698
      %v700 = vpop.f32.mrb[0].mxu0
      %701 = vdwg.mxu0
      %v702 = vpack.c.b16 %v411, %v409
      %v703 = vpack.c.b16 %v415, %v413
      %v704 = vpack.c.b16 %v419, %v417
      %v705 = vpack.c.b16 %v423, %v421
      %v726 = vunpack.c.l.b16 %v385
      %v727 = vunpack.c.l.b16 %v386
      %v728 = vunpack.c.l.b16 %v387
      %v729 = vunpack.c.l.b16 %v388
      %v730 = vunpack.c.l.b16 %v389
      %v731 = vunpack.c.l.b16 %v390
      %v732 = vunpack.c.l.b16 %v391
      %v733 = vunpack.c.l.b16 %v392
      %v734 = vunpack.c.l.b16 %v393
      %v735 = vunpack.c.l.b16 %v394
      %v736 = vunpack.c.l.b16 %v395
      %v737 = vunpack.c.l.b16 %v396
      %v738 = vunpack.c.l.b16 %v397
      %v739 = vunpack.c.l.b16 %v398
      %v740 = vunpack.c.l.b16 %v399
      %v741 = vunpack.c.l.b16 %v400
      %v742 = vpack.c.b16 %v727, %v726
      %v743 = vpack.c.b16 %v729, %v728
      %v744 = vpack.c.b16 %v731, %v730
      %v745 = vpack.c.b16 %v733, %v732
      %v746 = vpack.c.b16 %v735, %v734
      %v747 = vpack.c.b16 %v737, %v736
      %v748 = vpack.c.b16 %v739, %v738
      %v749 = vpack.c.b16 %v741, %v740
      %758 = vmatprep.subr.bf16.mxu0 0
      %759 = vmatpush1.bf16.msra.mxu0 %v742
      %760 = vmatprep.subr.bf16.mxu0 0
      %761 = vmatpush1.bf16.msra.mxu0 %v743
      %762 = vmatprep.subr.bf16.mxu0 0
      %763 = vmatpush1.bf16.msra.mxu0 %v744
      %764 = vmatprep.subr.bf16.mxu0 0
      %765 = vmatpush1.bf16.msra.mxu0 %v745
      %766 = vmatprep.subr.bf16.mxu0 0
      %767 = vmatpush1.bf16.msra.mxu0 %v746
      %768 = vmatprep.subr.bf16.mxu0 0
      %769 = vmatpush1.bf16.msra.mxu0 %v747
      %770 = vmatprep.subr.bf16.mxu0 0
      %771 = vmatpush1.bf16.msra.mxu0 %v748
      %772 = vmatprep.subr.bf16.mxu0 0
      %773 = vmatpush1.bf16.msra.mxu0 %v749
      %774 = vmatprep.subr.bf16.mxu0 0
      %775 = vmatpush1.bf16.msra.mxu0 0
      %776 = vmatprep.subr.bf16.mxu0 0
      %777 = vmatpush1.bf16.msra.mxu0 0
      %778 = vmatprep.subr.bf16.mxu0 0
      %779 = vmatpush1.bf16.msra.mxu0 0
      %780 = vmatprep.subr.bf16.mxu0 0
      %781 = vmatpush1.bf16.msra.mxu0 0
      %782 = vmatprep.subr.bf16.mxu0 0
      %783 = vmatpush1.bf16.msra.mxu0 0
      %784 = vmatprep.subr.bf16.mxu0 0
      %785 = vmatpush1.bf16.msra.mxu0 0
      %786 = vmatprep.subr.bf16.mxu0 0
      %787 = vmatpush1.bf16.msra.mxu0 0
      %788 = vmatprep.subr.bf16.mxu0 0
      %789 = vmatpush1.bf16.msra.mxu0 0
      %790 = vmatprep.mubr.bf16.mxu0 0
      %791 = vmatmul.mubr.bf16.gmra.mrb[0].mxu0 %v702
      %v792 = vpop.f32.mrb[0].mxu0
      %v793 = vadd.f32 %v672, %v792
      %v794 = vpop.f32.mrb[0].mxu0
      %v795 = vpop.f32.mrb[0].mxu0
      %v796 = vadd.f32 %v675, %v795
      %v797 = vpop.f32.mrb[0].mxu0
      %798 = vmatprep.mubr.bf16.mxu0 0
      %799 = vmatmul.mubr.bf16.gmra.mrb[0].mxu0 %v703
      %v800 = vpop.f32.mrb[0].mxu0
      %v801 = vadd.f32 %v680, %v800
      %v802 = vpop.f32.mrb[0].mxu0
      %v803 = vpop.f32.mrb[0].mxu0
      %v804 = vadd.f32 %v683, %v803
      %v805 = vpop.f32.mrb[0].mxu0
      %806 = vmatprep.mubr.bf16.mxu0 0
      %807 = vmatmul.mubr.bf16.gmra.mrb[0].mxu0 %v704
      %v808 = vpop.f32.mrb[0].mxu0
      %v809 = vadd.f32 %v688, %v808
      %v810 = vpop.f32.mrb[0].mxu0
      %v811 = vpop.f32.mrb[0].mxu0
      %v812 = vadd.f32 %v691, %v811
      %v813 = vpop.f32.mrb[0].mxu0
      %814 = vmatprep.mubr.bf16.mxu0 0
      %815 = vmatmul.mubr.bf16.gmra.mrb[0].mxu0 %v705
      %v816 = vpop.f32.mrb[0].mxu0
      %v817 = vadd.f32 %v696, %v816
      %v818 = vpop.f32.mrb[0].mxu0
      %v819 = vpop.f32.mrb[0].mxu0
      %v820 = vadd.f32 %v699, %v819
      %v821 = vpop.f32.mrb[0].mxu0
      %822 = vdwg.mxu0
      %vm823 = vcmask 1042432
      %vm824 = vcmask 1046532
      %vm825 = vmor %vm823, %vm824
      %v826 = vrot.slane %v425, 5
      %v827 = vrot.slane %v826, 4
      %v828 = vrot.slane %v426, 5
      %v829 = vsel %vm825, %v827, %v828
      %v830 = vrot.slane %v427, 5
      %v831 = vrot.slane %v830, 4
      %v832 = vrot.slane %v428, 5
      %v833 = vsel %vm825, %v831, %v832
      %v834 = vrot.slane %v429, 5
      %v835 = vrot.slane %v834, 4
      %v836 = vrot.slane %v430, 5
      %v837 = vsel %vm825, %v835, %v836
      %v838 = vrot.slane %v431, 5
      %v839 = vrot.slane %v838, 4
      %v840 = vrot.slane %v432, 5
      %v841 = vsel %vm825, %v839, %v840
      %v842 = vrot.slane %v433, 5
      %v843 = vrot.slane %v842, 4
      %v844 = vrot.slane %v434, 5
      %v845 = vsel %vm825, %v843, %v844
      %v846 = vrot.slane %v435, 5
      %v847 = vrot.slane %v846, 4
      %v848 = vrot.slane %v436, 5
      %v849 = vsel %vm825, %v847, %v848
      %v850 = vrot.slane %v437, 5
      %v851 = vrot.slane %v850, 4
      %v852 = vrot.slane %v438, 5
      %v853 = vsel %vm825, %v851, %v852
      %v854 = vrot.slane %v439, 5
      %v855 = vrot.slane %v854, 4
      %v856 = vrot.slane %v440, 5
      %v857 = vsel %vm825, %v855, %v856
      %s858 = scalar_lea.vmem %s270, 128
      %v859 = vld [vmem:[%s858] sm:$0xf]
      %v860 = vld [vmem:[%s858 + $0x4] sm:$0xf]
      %v861 = vld [vmem:[%s858 + $0x8] sm:$0xf]
      %v862 = vld [vmem:[%s858 + $0xc] sm:$0xf]
      %v863 = vld [vmem:[%s858 + $0x10] sm:$0xf]
      %v864 = vld [vmem:[%s858 + $0x14] sm:$0xf]
      %v865 = vld [vmem:[%s858 + $0x18] sm:$0xf]
      %v866 = vld [vmem:[%s858 + $0x1c] sm:$0xf]
      %v867 = vld [vmem:[%s858 + $0x20] sm:$0xf]
      %v868 = vld [vmem:[%s858 + $0x24] sm:$0xf]
      %v869 = vld [vmem:[%s858 + $0x28] sm:$0xf]
      %v870 = vld [vmem:[%s858 + $0x2c] sm:$0xf]
      %v871 = vld [vmem:[%s858 + $0x30] sm:$0xf]
      %v872 = vld [vmem:[%s858 + $0x34] sm:$0xf]
      %v873 = vld [vmem:[%s858 + $0x38] sm:$0xf]
      %v874 = vld [vmem:[%s858 + $0x3c] sm:$0xf]
      %v875 = vunpack.c.l.b16 %v829
      %v876 = vunpack.c.l.b16 %v833
      %v877 = vunpack.c.l.b16 %v837
      %v878 = vunpack.c.l.b16 %v841
      %v879 = vunpack.c.l.b16 %v845
      %v880 = vunpack.c.l.b16 %v849
      %v881 = vunpack.c.l.b16 %v853
      %v882 = vunpack.c.l.b16 %v857
      %v883 = vpack.c.b16 %v876, %v875
      %v884 = vpack.c.b16 %v878, %v877
      %v885 = vpack.c.b16 %v880, %v879
      %v886 = vpack.c.b16 %v882, %v881
      %v907 = vunpack.c.l.b16 %v859
      %v908 = vunpack.c.l.b16 %v860
      %v909 = vunpack.c.l.b16 %v861
      %v910 = vunpack.c.l.b16 %v862
      %v911 = vunpack.c.l.b16 %v863
      %v912 = vunpack.c.l.b16 %v864
      %v913 = vunpack.c.l.b16 %v865
      %v914 = vunpack.c.l.b16 %v866
      %v915 = vunpack.c.l.b16 %v867
      %v916 = vunpack.c.l.b16 %v868
      %v917 = vunpack.c.l.b16 %v869
      %v918 = vunpack.c.l.b16 %v870
      %v919 = vunpack.c.l.b16 %v871
      %v920 = vunpack.c.l.b16 %v872
      %v921 = vunpack.c.l.b16 %v873
      %v922 = vunpack.c.l.b16 %v874
      %v923 = vpack.c.b16 %v908, %v907
      %v924 = vpack.c.b16 %v910, %v909
      %v925 = vpack.c.b16 %v912, %v911
      %v926 = vpack.c.b16 %v914, %v913
      %v927 = vpack.c.b16 %v916, %v915
      %v928 = vpack.c.b16 %v918, %v917
      %v929 = vpack.c.b16 %v920, %v919
      %v930 = vpack.c.b16 %v922, %v921
      %939 = vmatprep.subr.bf16.mxu0 0
      %940 = vmatpush1.bf16.msra.mxu0 %v923
      %941 = vmatprep.subr.bf16.mxu0 0
      %942 = vmatpush1.bf16.msra.mxu0 %v924
      %943 = vmatprep.subr.bf16.mxu0 0
      %944 = vmatpush1.bf16.msra.mxu0 %v925
      %945 = vmatprep.subr.bf16.mxu0 0
      %946 = vmatpush1.bf16.msra.mxu0 %v926
      %947 = vmatprep.subr.bf16.mxu0 0
      %948 = vmatpush1.bf16.msra.mxu0 %v927
      %949 = vmatprep.subr.bf16.mxu0 0
      %950 = vmatpush1.bf16.msra.mxu0 %v928
      %951 = vmatprep.subr.bf16.mxu0 0
      %952 = vmatpush1.bf16.msra.mxu0 %v929
      %953 = vmatprep.subr.bf16.mxu0 0
      %954 = vmatpush1.bf16.msra.mxu0 %v930
      %955 = vmatprep.subr.bf16.mxu0 0
      %956 = vmatpush1.bf16.msra.mxu0 0
      %957 = vmatprep.subr.bf16.mxu0 0
      %958 = vmatpush1.bf16.msra.mxu0 0
      %959 = vmatprep.subr.bf16.mxu0 0
      %960 = vmatpush1.bf16.msra.mxu0 0
      %961 = vmatprep.subr.bf16.mxu0 0
      %962 = vmatpush1.bf16.msra.mxu0 0
      %963 = vmatprep.subr.bf16.mxu0 0
      %964 = vmatpush1.bf16.msra.mxu0 0
      %965 = vmatprep.subr.bf16.mxu0 0
      %966 = vmatpush1.bf16.msra.mxu0 0
      %967 = vmatprep.subr.bf16.mxu0 0
      %968 = vmatpush1.bf16.msra.mxu0 0
      %969 = vmatprep.subr.bf16.mxu0 0
      %970 = vmatpush1.bf16.msra.mxu0 0
      %971 = vmatprep.mubr.bf16.mxu0 0
      %972 = vmatmul.mubr.bf16.gmra.mrb[0].mxu0 %v883
      %v973 = vpop.f32.mrb[0].mxu0
      %v974 = vadd.f32 0.0, %v973
      %v975 = vpop.f32.mrb[0].mxu0
      %v976 = vpop.f32.mrb[0].mxu0
      %v977 = vadd.f32 0.0, %v976
      %v978 = vpop.f32.mrb[0].mxu0
      %979 = vmatprep.mubr.bf16.mxu0 0
      %980 = vmatmul.mubr.bf16.gmra.mrb[0].mxu0 %v884
      %v981 = vpop.f32.mrb[0].mxu0
      %v982 = vadd.f32 0.0, %v981
      %v983 = vpop.f32.mrb[0].mxu0
      %v984 = vpop.f32.mrb[0].mxu0
      %v985 = vadd.f32 0.0, %v984
      %v986 = vpop.f32.mrb[0].mxu0
      %987 = vmatprep.mubr.bf16.mxu0 0
      %988 = vmatmul.mubr.bf16.gmra.mrb[0].mxu0 %v885
      %v989 = vpop.f32.mrb[0].mxu0
      %v990 = vadd.f32 0.0, %v989
      %v991 = vpop.f32.mrb[0].mxu0
      %v992 = vpop.f32.mrb[0].mxu0
      %v993 = vadd.f32 0.0, %v992
      %v994 = vpop.f32.mrb[0].mxu0
      %995 = vmatprep.mubr.bf16.mxu0 0
      %996 = vmatmul.mubr.bf16.gmra.mrb[0].mxu0 %v886
      %v997 = vpop.f32.mrb[0].mxu0
      %v998 = vadd.f32 0.0, %v997
      %v999 = vpop.f32.mrb[0].mxu0
      %v1000 = vpop.f32.mrb[0].mxu0
      %v1001 = vadd.f32 0.0, %v1000
      %v1002 = vpop.f32.mrb[0].mxu0
      %1003 = vdwg.mxu0
      %v1004 = vadd.f32 %v793, %v974
      %v1005 = vadd.f32 %v796, %v977
      %v1006 = vadd.f32 %v801, %v982
      %v1007 = vadd.f32 %v804, %v985
      %v1008 = vadd.f32 %v809, %v990
      %v1009 = vadd.f32 %v812, %v993
      %v1010 = vadd.f32 %v817, %v998
      %v1011 = vadd.f32 %v820, %v1001
      %s1012 = scalar_lea.vmem %s270, 192
      %v1013 = vld [vmem:[%s1012] sm:$0xf]
      %v1014 = vld [vmem:[%s1012 + $0x4] sm:$0xf]
      %v1015 = vld [vmem:[%s1012 + $0x8] sm:$0xf]
      %v1016 = vld [vmem:[%s1012 + $0xc] sm:$0xf]
      %v1017 = vld [vmem:[%s1012 + $0x10] sm:$0xf]
      %v1018 = vld [vmem:[%s1012 + $0x14] sm:$0xf]
      %v1019 = vld [vmem:[%s1012 + $0x18] sm:$0xf]
      %v1020 = vld [vmem:[%s1012 + $0x1c] sm:$0xf]
      %v1021 = vld [vmem:[%s1012 + $0x20] sm:$0xf]
      %v1022 = vld [vmem:[%s1012 + $0x24] sm:$0xf]
      %v1023 = vld [vmem:[%s1012 + $0x28] sm:$0xf]
      %v1024 = vld [vmem:[%s1012 + $0x2c] sm:$0xf]
      %v1025 = vld [vmem:[%s1012 + $0x30] sm:$0xf]
      %v1026 = vld [vmem:[%s1012 + $0x34] sm:$0xf]
      %v1027 = vld [vmem:[%s1012 + $0x38] sm:$0xf]
      %v1028 = vld [vmem:[%s1012 + $0x3c] sm:$0xf]
      %v1030 = vunpack.c.l.b16 %v383
      %v1031 = vpack.c.b16 %v413, %v411
      %v1032 = vpack.c.b16 %v417, %v415
      %v1033 = vpack.c.b16 %v421, %v419
      %v1034 = vpack.c.b16 %v1030, %v423
      %v1055 = vunpack.c.l.b16 %v1013
      %v1056 = vunpack.c.l.b16 %v1014
      %v1057 = vunpack.c.l.b16 %v1015
      %v1058 = vunpack.c.l.b16 %v1016
      %v1059 = vunpack.c.l.b16 %v1017
      %v1060 = vunpack.c.l.b16 %v1018
      %v1061 = vunpack.c.l.b16 %v1019
      %v1062 = vunpack.c.l.b16 %v1020
      %v1063 = vunpack.c.l.b16 %v1021
      %v1064 = vunpack.c.l.b16 %v1022
      %v1065 = vunpack.c.l.b16 %v1023
      %v1066 = vunpack.c.l.b16 %v1024
      %v1067 = vunpack.c.l.b16 %v1025
      %v1068 = vunpack.c.l.b16 %v1026
      %v1069 = vunpack.c.l.b16 %v1027
      %v1070 = vunpack.c.l.b16 %v1028
      %v1071 = vpack.c.b16 %v1056, %v1055
      %v1072 = vpack.c.b16 %v1058, %v1057
      %v1073 = vpack.c.b16 %v1060, %v1059
      %v1074 = vpack.c.b16 %v1062, %v1061
      %v1075 = vpack.c.b16 %v1064, %v1063
      %v1076 = vpack.c.b16 %v1066, %v1065
      %v1077 = vpack.c.b16 %v1068, %v1067
      %v1078 = vpack.c.b16 %v1070, %v1069
      %1087 = vmatprep.subr.bf16.mxu0 0
      %1088 = vmatpush1.bf16.msra.mxu0 %v1071
      %1089 = vmatprep.subr.bf16.mxu0 0
      %1090 = vmatpush1.bf16.msra.mxu0 %v1072
      %1091 = vmatprep.subr.bf16.mxu0 0
      %1092 = vmatpush1.bf16.msra.mxu0 %v1073
      %1093 = vmatprep.subr.bf16.mxu0 0
      %1094 = vmatpush1.bf16.msra.mxu0 %v1074
      %1095 = vmatprep.subr.bf16.mxu0 0
      %1096 = vmatpush1.bf16.msra.mxu0 %v1075
      %1097 = vmatprep.subr.bf16.mxu0 0
      %1098 = vmatpush1.bf16.msra.mxu0 %v1076
      %1099 = vmatprep.subr.bf16.mxu0 0
      %1100 = vmatpush1.bf16.msra.mxu0 %v1077
      %1101 = vmatprep.subr.bf16.mxu0 0
      %1102 = vmatpush1.bf16.msra.mxu0 %v1078
      %1103 = vmatprep.subr.bf16.mxu0 0
      %1104 = vmatpush1.bf16.msra.mxu0 0
      %1105 = vmatprep.subr.bf16.mxu0 0
      %1106 = vmatpush1.bf16.msra.mxu0 0
      %1107 = vmatprep.subr.bf16.mxu0 0
      %1108 = vmatpush1.bf16.msra.mxu0 0
      %1109 = vmatprep.subr.bf16.mxu0 0
      %1110 = vmatpush1.bf16.msra.mxu0 0
      %1111 = vmatprep.subr.bf16.mxu0 0
      %1112 = vmatpush1.bf16.msra.mxu0 0
      %1113 = vmatprep.subr.bf16.mxu0 0
      %1114 = vmatpush1.bf16.msra.mxu0 0
      %1115 = vmatprep.subr.bf16.mxu0 0
      %1116 = vmatpush1.bf16.msra.mxu0 0
      %1117 = vmatprep.subr.bf16.mxu0 0
      %1118 = vmatpush1.bf16.msra.mxu0 0
      %1119 = vmatprep.mubr.bf16.mxu0 0
      %1120 = vmatmul.mubr.bf16.gmra.mrb[0].mxu0 %v1031
      %v1121 = vpop.f32.mrb[0].mxu0
      %v1122 = vadd.f32 0.0, %v1121
      %v1123 = vpop.f32.mrb[0].mxu0
      %v1124 = vpop.f32.mrb[0].mxu0
      %v1125 = vadd.f32 0.0, %v1124
      %v1126 = vpop.f32.mrb[0].mxu0
      %1127 = vmatprep.mubr.bf16.mxu0 0
      %1128 = vmatmul.mubr.bf16.gmra.mrb[0].mxu0 %v1032
      %v1129 = vpop.f32.mrb[0].mxu0
      %v1130 = vadd.f32 0.0, %v1129
      %v1131 = vpop.f32.mrb[0].mxu0
      %v1132 = vpop.f32.mrb[0].mxu0
      %v1133 = vadd.f32 0.0, %v1132
      %v1134 = vpop.f32.mrb[0].mxu0
      %1135 = vmatprep.mubr.bf16.mxu0 0
      %1136 = vmatmul.mubr.bf16.gmra.mrb[0].mxu0 %v1033
      %v1137 = vpop.f32.mrb[0].mxu0
      %v1138 = vadd.f32 0.0, %v1137
      %v1139 = vpop.f32.mrb[0].mxu0
      %v1140 = vpop.f32.mrb[0].mxu0
      %v1141 = vadd.f32 0.0, %v1140
      %v1142 = vpop.f32.mrb[0].mxu0
      %1143 = vmatprep.mubr.bf16.mxu0 0
      %1144 = vmatmul.mubr.bf16.gmra.mrb[0].mxu0 %v1034
      %v1145 = vpop.f32.mrb[0].mxu0
      %v1146 = vadd.f32 0.0, %v1145
      %v1147 = vpop.f32.mrb[0].mxu0
      %v1148 = vpop.f32.mrb[0].mxu0
      %v1149 = vadd.f32 0.0, %v1148
      %v1150 = vpop.f32.mrb[0].mxu0
      %1151 = vdwg.mxu0
      %v1152 = vadd.f32 %v1004, %v1122
      %v1153 = vadd.f32 %v1005, %v1125
      %v1154 = vadd.f32 %v1006, %v1130
      %v1155 = vadd.f32 %v1007, %v1133
      %v1156 = vadd.f32 %v1008, %v1138
      %v1157 = vadd.f32 %v1009, %v1141
      %v1158 = vadd.f32 %v1010, %v1146
      %v1159 = vadd.f32 %v1011, %v1149
      %v1160 = vunpack.c.h.b16 %v383
      %v1161 = vpack.c.b16 %v1030, %v1030
      %v1162 = vpack.c.b16 %v1160, %v1160
      %v1164 = vshrl.u32 %v1161, 16
      %v1166 = vrot.slane %v1164, 4
      %v1167 = vshll.u32 %v1161, 16
      %v1169 = vrot.slane %v1167, 5
      %v1170 = vor.u32 %v1166, %v1169
      %v1171 = vrot.slane %v1170, 4
      %v1173 = vshll.u32 %v1162, 16
      %v1175 = vrot.slane %v1173, 5
      %v1176 = vsel %vm443, %v1171, %v1175
      %s1177 = scalar_lea.vmem %s270, 256
      %v1178 = vld [vmem:[%s1177] sm:$0xf]
      %v1179 = vld [vmem:[%s1177 + $0x4] sm:$0xf]
      %v1180 = vld [vmem:[%s1177 + $0x8] sm:$0xf]
      %v1181 = vld [vmem:[%s1177 + $0xc] sm:$0xf]
      %v1182 = vld [vmem:[%s1177 + $0x10] sm:$0xf]
      %v1183 = vld [vmem:[%s1177 + $0x14] sm:$0xf]
      %v1184 = vld [vmem:[%s1177 + $0x18] sm:$0xf]
      %v1185 = vld [vmem:[%s1177 + $0x1c] sm:$0xf]
      %v1186 = vld [vmem:[%s1177 + $0x20] sm:$0xf]
      %v1187 = vld [vmem:[%s1177 + $0x24] sm:$0xf]
      %v1188 = vld [vmem:[%s1177 + $0x28] sm:$0xf]
      %v1189 = vld [vmem:[%s1177 + $0x2c] sm:$0xf]
      %v1190 = vld [vmem:[%s1177 + $0x30] sm:$0xf]
      %v1191 = vld [vmem:[%s1177 + $0x34] sm:$0xf]
      %v1192 = vld [vmem:[%s1177 + $0x38] sm:$0xf]
      %v1193 = vld [vmem:[%s1177 + $0x3c] sm:$0xf]
      %v1194 = vunpack.c.l.b16 %v1176
      %v1195 = vpack.c.b16 %v575, %v574
      %v1196 = vpack.c.b16 %v577, %v576
      %v1197 = vpack.c.b16 %v579, %v578
      %v1198 = vpack.c.b16 %v1194, %v580
      %v1219 = vunpack.c.l.b16 %v1178
      %v1220 = vunpack.c.l.b16 %v1179
      %v1221 = vunpack.c.l.b16 %v1180
      %v1222 = vunpack.c.l.b16 %v1181
      %v1223 = vunpack.c.l.b16 %v1182
      %v1224 = vunpack.c.l.b16 %v1183
      %v1225 = vunpack.c.l.b16 %v1184
      %v1226 = vunpack.c.l.b16 %v1185
      %v1227 = vunpack.c.l.b16 %v1186
      %v1228 = vunpack.c.l.b16 %v1187
      %v1229 = vunpack.c.l.b16 %v1188
      %v1230 = vunpack.c.l.b16 %v1189
      %v1231 = vunpack.c.l.b16 %v1190
      %v1232 = vunpack.c.l.b16 %v1191
      %v1233 = vunpack.c.l.b16 %v1192
      %v1234 = vunpack.c.l.b16 %v1193
      %v1235 = vpack.c.b16 %v1220, %v1219
      %v1236 = vpack.c.b16 %v1222, %v1221
      %v1237 = vpack.c.b16 %v1224, %v1223
      %v1238 = vpack.c.b16 %v1226, %v1225
      %v1239 = vpack.c.b16 %v1228, %v1227
      %v1240 = vpack.c.b16 %v1230, %v1229
      %v1241 = vpack.c.b16 %v1232, %v1231
      %v1242 = vpack.c.b16 %v1234, %v1233
      %1251 = vmatprep.subr.bf16.mxu0 0
      %1252 = vmatpush1.bf16.msra.mxu0 %v1235
      %1253 = vmatprep.subr.bf16.mxu0 0
      %1254 = vmatpush1.bf16.msra.mxu0 %v1236
      %1255 = vmatprep.subr.bf16.mxu0 0
      %1256 = vmatpush1.bf16.msra.mxu0 %v1237
      %1257 = vmatprep.subr.bf16.mxu0 0
      %1258 = vmatpush1.bf16.msra.mxu0 %v1238
      %1259 = vmatprep.subr.bf16.mxu0 0
      %1260 = vmatpush1.bf16.msra.mxu0 %v1239
      %1261 = vmatprep.subr.bf16.mxu0 0
      %1262 = vmatpush1.bf16.msra.mxu0 %v1240
      %1263 = vmatprep.subr.bf16.mxu0 0
      %1264 = vmatpush1.bf16.msra.mxu0 %v1241
      %1265 = vmatprep.subr.bf16.mxu0 0
      %1266 = vmatpush1.bf16.msra.mxu0 %v1242
      %1267 = vmatprep.subr.bf16.mxu0 0
      %1268 = vmatpush1.bf16.msra.mxu0 0
      %1269 = vmatprep.subr.bf16.mxu0 0
      %1270 = vmatpush1.bf16.msra.mxu0 0
      %1271 = vmatprep.subr.bf16.mxu0 0
      %1272 = vmatpush1.bf16.msra.mxu0 0
      %1273 = vmatprep.subr.bf16.mxu0 0
      %1274 = vmatpush1.bf16.msra.mxu0 0
      %1275 = vmatprep.subr.bf16.mxu0 0
      %1276 = vmatpush1.bf16.msra.mxu0 0
      %1277 = vmatprep.subr.bf16.mxu0 0
      %1278 = vmatpush1.bf16.msra.mxu0 0
      %1279 = vmatprep.subr.bf16.mxu0 0
      %1280 = vmatpush1.bf16.msra.mxu0 0
      %1281 = vmatprep.subr.bf16.mxu0 0
      %1282 = vmatpush1.bf16.msra.mxu0 0
      %1283 = vmatprep.mubr.bf16.mxu0 0
      %1284 = vmatmul.mubr.bf16.gmra.mrb[0].mxu0 %v1195
      %v1285 = vpop.f32.mrb[0].mxu0
      %v1286 = vadd.f32 0.0, %v1285
      %v1287 = vpop.f32.mrb[0].mxu0
      %v1288 = vpop.f32.mrb[0].mxu0
      %v1289 = vadd.f32 0.0, %v1288
      %v1290 = vpop.f32.mrb[0].mxu0
      %1291 = vmatprep.mubr.bf16.mxu0 0
      %1292 = vmatmul.mubr.bf16.gmra.mrb[0].mxu0 %v1196
      %v1293 = vpop.f32.mrb[0].mxu0
      %v1294 = vadd.f32 0.0, %v1293
      %v1295 = vpop.f32.mrb[0].mxu0
      %v1296 = vpop.f32.mrb[0].mxu0
      %v1297 = vadd.f32 0.0, %v1296
      %v1298 = vpop.f32.mrb[0].mxu0
      %1299 = vmatprep.mubr.bf16.mxu0 0
      %1300 = vmatmul.mubr.bf16.gmra.mrb[0].mxu0 %v1197
      %v1301 = vpop.f32.mrb[0].mxu0
      %v1302 = vadd.f32 0.0, %v1301
      %v1303 = vpop.f32.mrb[0].mxu0
      %v1304 = vpop.f32.mrb[0].mxu0
      %v1305 = vadd.f32 0.0, %v1304
      %v1306 = vpop.f32.mrb[0].mxu0
      %1307 = vmatprep.mubr.bf16.mxu0 0
      %1308 = vmatmul.mubr.bf16.gmra.mrb[0].mxu0 %v1198
      %v1309 = vpop.f32.mrb[0].mxu0
      %v1310 = vadd.f32 0.0, %v1309
      %v1311 = vpop.f32.mrb[0].mxu0
      %v1312 = vpop.f32.mrb[0].mxu0
      %v1313 = vadd.f32 0.0, %v1312
      %v1314 = vpop.f32.mrb[0].mxu0
      %1315 = vdwg.mxu0
      %v1316 = vadd.f32 %v1152, %v1286
      %v1317 = vadd.f32 %v1153, %v1289
      %v1318 = vadd.f32 %v1154, %v1294
      %v1319 = vadd.f32 %v1155, %v1297
      %v1320 = vadd.f32 %v1156, %v1302
      %v1321 = vadd.f32 %v1157, %v1305
      %v1322 = vadd.f32 %v1158, %v1310
      %v1323 = vadd.f32 %v1159, %v1313
      %v1324 = vrot.slane %v1161, 5
      %v1325 = vrot.slane %v1324, 4
      %v1326 = vrot.slane %v1162, 5
      %v1327 = vsel %vm825, %v1325, %v1326
      %s1328 = scalar_lea.vmem %s270, 320
      %v1329 = vld [vmem:[%s1328] sm:$0xf]
      %v1330 = vld [vmem:[%s1328 + $0x4] sm:$0xf]
      %v1331 = vld [vmem:[%s1328 + $0x8] sm:$0xf]
      %v1332 = vld [vmem:[%s1328 + $0xc] sm:$0xf]
      %v1333 = vld [vmem:[%s1328 + $0x10] sm:$0xf]
      %v1334 = vld [vmem:[%s1328 + $0x14] sm:$0xf]
      %v1335 = vld [vmem:[%s1328 + $0x18] sm:$0xf]
      %v1336 = vld [vmem:[%s1328 + $0x1c] sm:$0xf]
      %v1337 = vld [vmem:[%s1328 + $0x20] sm:$0xf]
      %v1338 = vld [vmem:[%s1328 + $0x24] sm:$0xf]
      %v1339 = vld [vmem:[%s1328 + $0x28] sm:$0xf]
      %v1340 = vld [vmem:[%s1328 + $0x2c] sm:$0xf]
      %v1341 = vld [vmem:[%s1328 + $0x30] sm:$0xf]
      %v1342 = vld [vmem:[%s1328 + $0x34] sm:$0xf]
      %v1343 = vld [vmem:[%s1328 + $0x38] sm:$0xf]
      %v1344 = vld [vmem:[%s1328 + $0x3c] sm:$0xf]
      %v1345 = vunpack.c.l.b16 %v1327
      %v1346 = vpack.c.b16 %v877, %v876
      %v1347 = vpack.c.b16 %v879, %v878
      %v1348 = vpack.c.b16 %v881, %v880
      %v1349 = vpack.c.b16 %v1345, %v882
      %v1370 = vunpack.c.l.b16 %v1329
      %v1371 = vunpack.c.l.b16 %v1330
      %v1372 = vunpack.c.l.b16 %v1331
      %v1373 = vunpack.c.l.b16 %v1332
      %v1374 = vunpack.c.l.b16 %v1333
      %v1375 = vunpack.c.l.b16 %v1334
      %v1376 = vunpack.c.l.b16 %v1335
      %v1377 = vunpack.c.l.b16 %v1336
      %v1378 = vunpack.c.l.b16 %v1337
      %v1379 = vunpack.c.l.b16 %v1338
      %v1380 = vunpack.c.l.b16 %v1339
      %v1381 = vunpack.c.l.b16 %v1340
      %v1382 = vunpack.c.l.b16 %v1341
      %v1383 = vunpack.c.l.b16 %v1342
      %v1384 = vunpack.c.l.b16 %v1343
      %v1385 = vunpack.c.l.b16 %v1344
      %v1386 = vpack.c.b16 %v1371, %v1370
      %v1387 = vpack.c.b16 %v1373, %v1372
      %v1388 = vpack.c.b16 %v1375, %v1374
      %v1389 = vpack.c.b16 %v1377, %v1376
      %v1390 = vpack.c.b16 %v1379, %v1378
      %v1391 = vpack.c.b16 %v1381, %v1380
      %v1392 = vpack.c.b16 %v1383, %v1382
      %v1393 = vpack.c.b16 %v1385, %v1384
      %1402 = vmatprep.subr.bf16.mxu0 0
      %1403 = vmatpush1.bf16.msra.mxu0 %v1386
      %1404 = vmatprep.subr.bf16.mxu0 0
      %1405 = vmatpush1.bf16.msra.mxu0 %v1387
      %1406 = vmatprep.subr.bf16.mxu0 0
      %1407 = vmatpush1.bf16.msra.mxu0 %v1388
      %1408 = vmatprep.subr.bf16.mxu0 0
      %1409 = vmatpush1.bf16.msra.mxu0 %v1389
      %1410 = vmatprep.subr.bf16.mxu0 0
      %1411 = vmatpush1.bf16.msra.mxu0 %v1390
      %1412 = vmatprep.subr.bf16.mxu0 0
      %1413 = vmatpush1.bf16.msra.mxu0 %v1391
      %1414 = vmatprep.subr.bf16.mxu0 0
      %1415 = vmatpush1.bf16.msra.mxu0 %v1392
      %1416 = vmatprep.subr.bf16.mxu0 0
      %1417 = vmatpush1.bf16.msra.mxu0 %v1393
      %1418 = vmatprep.subr.bf16.mxu0 0
      %1419 = vmatpush1.bf16.msra.mxu0 0
      %1420 = vmatprep.subr.bf16.mxu0 0
      %1421 = vmatpush1.bf16.msra.mxu0 0
      %1422 = vmatprep.subr.bf16.mxu0 0
      %1423 = vmatpush1.bf16.msra.mxu0 0
      %1424 = vmatprep.subr.bf16.mxu0 0
      %1425 = vmatpush1.bf16.msra.mxu0 0
      %1426 = vmatprep.subr.bf16.mxu0 0
      %1427 = vmatpush1.bf16.msra.mxu0 0
      %1428 = vmatprep.subr.bf16.mxu0 0
      %1429 = vmatpush1.bf16.msra.mxu0 0
      %1430 = vmatprep.subr.bf16.mxu0 0
      %1431 = vmatpush1.bf16.msra.mxu0 0
      %1432 = vmatprep.subr.bf16.mxu0 0
      %1433 = vmatpush1.bf16.msra.mxu0 0
      %1434 = vmatprep.mubr.bf16.mxu0 0
      %1435 = vmatmul.mubr.bf16.gmra.mrb[0].mxu0 %v1346
      %v1436 = vpop.f32.mrb[0].mxu0
      %v1437 = vadd.f32 0.0, %v1436
      %v1438 = vpop.f32.mrb[0].mxu0
      %v1439 = vpop.f32.mrb[0].mxu0
      %v1440 = vadd.f32 0.0, %v1439
      %v1441 = vpop.f32.mrb[0].mxu0
      %1442 = vmatprep.mubr.bf16.mxu0 0
      %1443 = vmatmul.mubr.bf16.gmra.mrb[0].mxu0 %v1347
      %v1444 = vpop.f32.mrb[0].mxu0
      %v1445 = vadd.f32 0.0, %v1444
      %v1446 = vpop.f32.mrb[0].mxu0
      %v1447 = vpop.f32.mrb[0].mxu0
      %v1448 = vadd.f32 0.0, %v1447
      %v1449 = vpop.f32.mrb[0].mxu0
      %1450 = vmatprep.mubr.bf16.mxu0 0
      %1451 = vmatmul.mubr.bf16.gmra.mrb[0].mxu0 %v1348
      %v1452 = vpop.f32.mrb[0].mxu0
      %v1453 = vadd.f32 0.0, %v1452
      %v1454 = vpop.f32.mrb[0].mxu0
      %v1455 = vpop.f32.mrb[0].mxu0
      %v1456 = vadd.f32 0.0, %v1455
      %v1457 = vpop.f32.mrb[0].mxu0
      %1458 = vmatprep.mubr.bf16.mxu0 0
      %1459 = vmatmul.mubr.bf16.gmra.mrb[0].mxu0 %v1349
      %v1460 = vpop.f32.mrb[0].mxu0
      %v1461 = vadd.f32 0.0, %v1460
      %v1462 = vpop.f32.mrb[0].mxu0
      %v1463 = vpop.f32.mrb[0].mxu0
      %v1464 = vadd.f32 0.0, %v1463
      %v1465 = vpop.f32.mrb[0].mxu0
      %1466 = vdwg.mxu0
      %v1467 = vadd.f32 %v1316, %v1437
      %v1468 = vadd.f32 %v1317, %v1440
      %v1469 = vadd.f32 %v1318, %v1445
      %v1470 = vadd.f32 %v1319, %v1448
      %v1471 = vadd.f32 %v1320, %v1453
      %v1472 = vadd.f32 %v1321, %v1456
      %v1473 = vadd.f32 %v1322, %v1461
      %v1474 = vadd.f32 %v1323, %v1464
      %s1475 = scalar_lea.vmem %s270, 384
      %v1476 = vld [vmem:[%s1475] sm:$0xf]
      %v1477 = vld [vmem:[%s1475 + $0x4] sm:$0xf]
      %v1478 = vld [vmem:[%s1475 + $0x8] sm:$0xf]
      %v1479 = vld [vmem:[%s1475 + $0xc] sm:$0xf]
      %v1480 = vld [vmem:[%s1475 + $0x10] sm:$0xf]
      %v1481 = vld [vmem:[%s1475 + $0x14] sm:$0xf]
      %v1482 = vld [vmem:[%s1475 + $0x18] sm:$0xf]
      %v1483 = vld [vmem:[%s1475 + $0x1c] sm:$0xf]
      %v1484 = vld [vmem:[%s1475 + $0x20] sm:$0xf]
      %v1485 = vld [vmem:[%s1475 + $0x24] sm:$0xf]
      %v1486 = vld [vmem:[%s1475 + $0x28] sm:$0xf]
      %v1487 = vld [vmem:[%s1475 + $0x2c] sm:$0xf]
      %v1488 = vld [vmem:[%s1475 + $0x30] sm:$0xf]
      %v1489 = vld [vmem:[%s1475 + $0x34] sm:$0xf]
      %v1490 = vld [vmem:[%s1475 + $0x38] sm:$0xf]
      %v1491 = vld [vmem:[%s1475 + $0x3c] sm:$0xf]
      %v1493 = vunpack.c.l.b16 %v384
      %v1494 = vpack.c.b16 %v1493, %v1030
      %v1512 = vunpack.c.l.b16 %v1476
      %v1513 = vunpack.c.l.b16 %v1477
      %v1514 = vunpack.c.l.b16 %v1478
      %v1515 = vunpack.c.l.b16 %v1479
      %v1516 = vunpack.c.l.b16 %v1480
      %v1517 = vunpack.c.l.b16 %v1481
      %v1518 = vunpack.c.l.b16 %v1482
      %v1519 = vunpack.c.l.b16 %v1483
      %v1520 = vunpack.c.l.b16 %v1484
      %v1521 = vunpack.c.l.b16 %v1485
      %v1522 = vunpack.c.l.b16 %v1486
      %v1523 = vunpack.c.l.b16 %v1487
      %v1524 = vunpack.c.l.b16 %v1488
      %v1525 = vunpack.c.l.b16 %v1489
      %v1526 = vunpack.c.l.b16 %v1490
      %v1527 = vunpack.c.l.b16 %v1491
      %v1528 = vpack.c.b16 %v1513, %v1512
      %v1529 = vpack.c.b16 %v1515, %v1514
      %v1530 = vpack.c.b16 %v1517, %v1516
      %v1531 = vpack.c.b16 %v1519, %v1518
      %v1532 = vpack.c.b16 %v1521, %v1520
      %v1533 = vpack.c.b16 %v1523, %v1522
      %v1534 = vpack.c.b16 %v1525, %v1524
      %v1535 = vpack.c.b16 %v1527, %v1526
      %1544 = vmatprep.subr.bf16.mxu0 0
      %1545 = vmatpush1.bf16.msra.mxu0 %v1528
      %1546 = vmatprep.subr.bf16.mxu0 0
      %1547 = vmatpush1.bf16.msra.mxu0 %v1529
      %1548 = vmatprep.subr.bf16.mxu0 0
      %1549 = vmatpush1.bf16.msra.mxu0 %v1530
      %1550 = vmatprep.subr.bf16.mxu0 0
      %1551 = vmatpush1.bf16.msra.mxu0 %v1531
      %1552 = vmatprep.subr.bf16.mxu0 0
      %1553 = vmatpush1.bf16.msra.mxu0 %v1532
      %1554 = vmatprep.subr.bf16.mxu0 0
      %1555 = vmatpush1.bf16.msra.mxu0 %v1533
      %1556 = vmatprep.subr.bf16.mxu0 0
      %1557 = vmatpush1.bf16.msra.mxu0 %v1534
      %1558 = vmatprep.subr.bf16.mxu0 0
      %1559 = vmatpush1.bf16.msra.mxu0 %v1535
      %1560 = vmatprep.subr.bf16.mxu0 0
      %1561 = vmatpush1.bf16.msra.mxu0 0
      %1562 = vmatprep.subr.bf16.mxu0 0
      %1563 = vmatpush1.bf16.msra.mxu0 0
      %1564 = vmatprep.subr.bf16.mxu0 0
      %1565 = vmatpush1.bf16.msra.mxu0 0
      %1566 = vmatprep.subr.bf16.mxu0 0
      %1567 = vmatpush1.bf16.msra.mxu0 0
      %1568 = vmatprep.subr.bf16.mxu0 0
      %1569 = vmatpush1.bf16.msra.mxu0 0
      %1570 = vmatprep.subr.bf16.mxu0 0
      %1571 = vmatpush1.bf16.msra.mxu0 0
      %1572 = vmatprep.subr.bf16.mxu0 0
      %1573 = vmatpush1.bf16.msra.mxu0 0
      %1574 = vmatprep.subr.bf16.mxu0 0
      %1575 = vmatpush1.bf16.msra.mxu0 0
      %1576 = vmatprep.mubr.bf16.mxu0 0
      %1577 = vmatmul.mubr.bf16.gmra.mrb[0].mxu0 %v703
      %v1578 = vpop.f32.mrb[0].mxu0
      %v1579 = vadd.f32 0.0, %v1578
      %v1580 = vpop.f32.mrb[0].mxu0
      %v1581 = vpop.f32.mrb[0].mxu0
      %v1582 = vadd.f32 0.0, %v1581
      %v1583 = vpop.f32.mrb[0].mxu0
      %1584 = vmatprep.mubr.bf16.mxu0 0
      %1585 = vmatmul.mubr.bf16.gmra.mrb[0].mxu0 %v704
      %v1586 = vpop.f32.mrb[0].mxu0
      %v1587 = vadd.f32 0.0, %v1586
      %v1588 = vpop.f32.mrb[0].mxu0
      %v1589 = vpop.f32.mrb[0].mxu0
      %v1590 = vadd.f32 0.0, %v1589
      %v1591 = vpop.f32.mrb[0].mxu0
      %1592 = vmatprep.mubr.bf16.mxu0 0
      %1593 = vmatmul.mubr.bf16.gmra.mrb[0].mxu0 %v705
      %v1594 = vpop.f32.mrb[0].mxu0
      %v1595 = vadd.f32 0.0, %v1594
      %v1596 = vpop.f32.mrb[0].mxu0
      %v1597 = vpop.f32.mrb[0].mxu0
      %v1598 = vadd.f32 0.0, %v1597
      %v1599 = vpop.f32.mrb[0].mxu0
      %1600 = vmatprep.mubr.bf16.mxu0 0
      %1601 = vmatmul.mubr.bf16.gmra.mrb[0].mxu0 %v1494
      %v1602 = vpop.f32.mrb[0].mxu0
      %v1603 = vadd.f32 0.0, %v1602
      %v1604 = vpop.f32.mrb[0].mxu0
      %v1605 = vpop.f32.mrb[0].mxu0
      %v1606 = vadd.f32 0.0, %v1605
      %v1607 = vpop.f32.mrb[0].mxu0
      %1608 = vdwg.mxu0
      %v1609 = vadd.f32 %v1467, %v1579
      %v1610 = vadd.f32 %v1468, %v1582
      %v1611 = vadd.f32 %v1469, %v1587
      %v1612 = vadd.f32 %v1470, %v1590
      %v1613 = vadd.f32 %v1471, %v1595
      %v1614 = vadd.f32 %v1472, %v1598
      %v1615 = vadd.f32 %v1473, %v1603
      %v1616 = vadd.f32 %v1474, %v1606
      %v1617 = vunpack.c.h.b16 %v384
      %v1618 = vpack.c.b16 %v1493, %v1493
      %v1619 = vpack.c.b16 %v1617, %v1617
      %v1621 = vshrl.u32 %v1618, 16
      %v1623 = vrot.slane %v1621, 4
      %v1624 = vshll.u32 %v1618, 16
      %v1626 = vrot.slane %v1624, 5
      %v1627 = vor.u32 %v1623, %v1626
      %v1628 = vrot.slane %v1627, 4
      %v1630 = vshll.u32 %v1619, 16
      %v1632 = vrot.slane %v1630, 5
      %v1633 = vsel %vm443, %v1628, %v1632
      %s1634 = scalar_lea.vmem %s270, 448
      %v1635 = vld [vmem:[%s1634] sm:$0xf]
      %v1636 = vld [vmem:[%s1634 + $0x4] sm:$0xf]
      %v1637 = vld [vmem:[%s1634 + $0x8] sm:$0xf]
      %v1638 = vld [vmem:[%s1634 + $0xc] sm:$0xf]
      %v1639 = vld [vmem:[%s1634 + $0x10] sm:$0xf]
      %v1640 = vld [vmem:[%s1634 + $0x14] sm:$0xf]
      %v1641 = vld [vmem:[%s1634 + $0x18] sm:$0xf]
      %v1642 = vld [vmem:[%s1634 + $0x1c] sm:$0xf]
      %v1643 = vld [vmem:[%s1634 + $0x20] sm:$0xf]
      %v1644 = vld [vmem:[%s1634 + $0x24] sm:$0xf]
      %v1645 = vld [vmem:[%s1634 + $0x28] sm:$0xf]
      %v1646 = vld [vmem:[%s1634 + $0x2c] sm:$0xf]
      %v1647 = vld [vmem:[%s1634 + $0x30] sm:$0xf]
      %v1648 = vld [vmem:[%s1634 + $0x34] sm:$0xf]
      %v1649 = vld [vmem:[%s1634 + $0x38] sm:$0xf]
      %v1650 = vld [vmem:[%s1634 + $0x3c] sm:$0xf]
      %v1651 = vunpack.c.l.b16 %v1633
      %v1652 = vpack.c.b16 %v1651, %v1194
      %v1670 = vunpack.c.l.b16 %v1635
      %v1671 = vunpack.c.l.b16 %v1636
      %v1672 = vunpack.c.l.b16 %v1637
      %v1673 = vunpack.c.l.b16 %v1638
      %v1674 = vunpack.c.l.b16 %v1639
      %v1675 = vunpack.c.l.b16 %v1640
      %v1676 = vunpack.c.l.b16 %v1641
      %v1677 = vunpack.c.l.b16 %v1642
      %v1678 = vunpack.c.l.b16 %v1643
      %v1679 = vunpack.c.l.b16 %v1644
      %v1680 = vunpack.c.l.b16 %v1645
      %v1681 = vunpack.c.l.b16 %v1646
      %v1682 = vunpack.c.l.b16 %v1647
      %v1683 = vunpack.c.l.b16 %v1648
      %v1684 = vunpack.c.l.b16 %v1649
      %v1685 = vunpack.c.l.b16 %v1650
      %v1686 = vpack.c.b16 %v1671, %v1670
      %v1687 = vpack.c.b16 %v1673, %v1672
      %v1688 = vpack.c.b16 %v1675, %v1674
      %v1689 = vpack.c.b16 %v1677, %v1676
      %v1690 = vpack.c.b16 %v1679, %v1678
      %v1691 = vpack.c.b16 %v1681, %v1680
      %v1692 = vpack.c.b16 %v1683, %v1682
      %v1693 = vpack.c.b16 %v1685, %v1684
      %1702 = vmatprep.subr.bf16.mxu0 0
      %1703 = vmatpush1.bf16.msra.mxu0 %v1686
      %1704 = vmatprep.subr.bf16.mxu0 0
      %1705 = vmatpush1.bf16.msra.mxu0 %v1687
      %1706 = vmatprep.subr.bf16.mxu0 0
      %1707 = vmatpush1.bf16.msra.mxu0 %v1688
      %1708 = vmatprep.subr.bf16.mxu0 0
      %1709 = vmatpush1.bf16.msra.mxu0 %v1689
      %1710 = vmatprep.subr.bf16.mxu0 0
      %1711 = vmatpush1.bf16.msra.mxu0 %v1690
      %1712 = vmatprep.subr.bf16.mxu0 0
      %1713 = vmatpush1.bf16.msra.mxu0 %v1691
      %1714 = vmatprep.subr.bf16.mxu0 0
      %1715 = vmatpush1.bf16.msra.mxu0 %v1692
      %1716 = vmatprep.subr.bf16.mxu0 0
      %1717 = vmatpush1.bf16.msra.mxu0 %v1693
      %1718 = vmatprep.subr.bf16.mxu0 0
      %1719 = vmatpush1.bf16.msra.mxu0 0
      %1720 = vmatprep.subr.bf16.mxu0 0
      %1721 = vmatpush1.bf16.msra.mxu0 0
      %1722 = vmatprep.subr.bf16.mxu0 0
      %1723 = vmatpush1.bf16.msra.mxu0 0
      %1724 = vmatprep.subr.bf16.mxu0 0
      %1725 = vmatpush1.bf16.msra.mxu0 0
      %1726 = vmatprep.subr.bf16.mxu0 0
      %1727 = vmatpush1.bf16.msra.mxu0 0
      %1728 = vmatprep.subr.bf16.mxu0 0
      %1729 = vmatpush1.bf16.msra.mxu0 0
      %1730 = vmatprep.subr.bf16.mxu0 0
      %1731 = vmatpush1.bf16.msra.mxu0 0
      %1732 = vmatprep.subr.bf16.mxu0 0
      %1733 = vmatpush1.bf16.msra.mxu0 0
      %1734 = vmatprep.mubr.bf16.mxu0 0
      %1735 = vmatmul.mubr.bf16.gmra.mrb[0].mxu0 %v582
      %v1736 = vpop.f32.mrb[0].mxu0
      %v1737 = vadd.f32 0.0, %v1736
      %v1738 = vpop.f32.mrb[0].mxu0
      %v1739 = vpop.f32.mrb[0].mxu0
      %v1740 = vadd.f32 0.0, %v1739
      %v1741 = vpop.f32.mrb[0].mxu0
      %1742 = vmatprep.mubr.bf16.mxu0 0
      %1743 = vmatmul.mubr.bf16.gmra.mrb[0].mxu0 %v583
      %v1744 = vpop.f32.mrb[0].mxu0
      %v1745 = vadd.f32 0.0, %v1744
      %v1746 = vpop.f32.mrb[0].mxu0
      %v1747 = vpop.f32.mrb[0].mxu0
      %v1748 = vadd.f32 0.0, %v1747
      %v1749 = vpop.f32.mrb[0].mxu0
      %1750 = vmatprep.mubr.bf16.mxu0 0
      %1751 = vmatmul.mubr.bf16.gmra.mrb[0].mxu0 %v584
      %v1752 = vpop.f32.mrb[0].mxu0
      %v1753 = vadd.f32 0.0, %v1752
      %v1754 = vpop.f32.mrb[0].mxu0
      %v1755 = vpop.f32.mrb[0].mxu0
      %v1756 = vadd.f32 0.0, %v1755
      %v1757 = vpop.f32.mrb[0].mxu0
      %1758 = vmatprep.mubr.bf16.mxu0 0
      %1759 = vmatmul.mubr.bf16.gmra.mrb[0].mxu0 %v1652
      %v1760 = vpop.f32.mrb[0].mxu0
      %v1761 = vadd.f32 0.0, %v1760
      %v1762 = vpop.f32.mrb[0].mxu0
      %v1763 = vpop.f32.mrb[0].mxu0
      %v1764 = vadd.f32 0.0, %v1763
      %v1765 = vpop.f32.mrb[0].mxu0
      %1766 = vdwg.mxu0
      %v1767 = vadd.f32 %v1609, %v1737
      %v1768 = vadd.f32 %v1610, %v1740
      %v1769 = vadd.f32 %v1611, %v1745
      %v1770 = vadd.f32 %v1612, %v1748
      %v1771 = vadd.f32 %v1613, %v1753
      %v1772 = vadd.f32 %v1614, %v1756
      %v1773 = vadd.f32 %v1615, %v1761
      %v1774 = vadd.f32 %v1616, %v1764
      %v1775 = vrot.slane %v1618, 5
      %v1776 = vrot.slane %v1775, 4
      %v1777 = vrot.slane %v1619, 5
      %v1778 = vsel %vm825, %v1776, %v1777
      %s1779 = scalar_lea.vmem %s270, 512
      %v1780 = vld [vmem:[%s1779] sm:$0xf]
      %v1781 = vld [vmem:[%s1779 + $0x4] sm:$0xf]
      %v1782 = vld [vmem:[%s1779 + $0x8] sm:$0xf]
      %v1783 = vld [vmem:[%s1779 + $0xc] sm:$0xf]
      %v1784 = vld [vmem:[%s1779 + $0x10] sm:$0xf]
      %v1785 = vld [vmem:[%s1779 + $0x14] sm:$0xf]
      %v1786 = vld [vmem:[%s1779 + $0x18] sm:$0xf]
      %v1787 = vld [vmem:[%s1779 + $0x1c] sm:$0xf]
      %v1788 = vld [vmem:[%s1779 + $0x20] sm:$0xf]
      %v1789 = vld [vmem:[%s1779 + $0x24] sm:$0xf]
      %v1790 = vld [vmem:[%s1779 + $0x28] sm:$0xf]
      %v1791 = vld [vmem:[%s1779 + $0x2c] sm:$0xf]
      %v1792 = vld [vmem:[%s1779 + $0x30] sm:$0xf]
      %v1793 = vld [vmem:[%s1779 + $0x34] sm:$0xf]
      %v1794 = vld [vmem:[%s1779 + $0x38] sm:$0xf]
      %v1795 = vld [vmem:[%s1779 + $0x3c] sm:$0xf]
      %v1796 = vunpack.c.l.b16 %v1778
      %v1797 = vpack.c.b16 %v1796, %v1345
      %v1815 = vunpack.c.l.b16 %v1780
      %v1816 = vunpack.c.l.b16 %v1781
      %v1817 = vunpack.c.l.b16 %v1782
      %v1818 = vunpack.c.l.b16 %v1783
      %v1819 = vunpack.c.l.b16 %v1784
      %v1820 = vunpack.c.l.b16 %v1785
      %v1821 = vunpack.c.l.b16 %v1786
      %v1822 = vunpack.c.l.b16 %v1787
      %v1823 = vunpack.c.l.b16 %v1788
      %v1824 = vunpack.c.l.b16 %v1789
      %v1825 = vunpack.c.l.b16 %v1790
      %v1826 = vunpack.c.l.b16 %v1791
      %v1827 = vunpack.c.l.b16 %v1792
      %v1828 = vunpack.c.l.b16 %v1793
      %v1829 = vunpack.c.l.b16 %v1794
      %v1830 = vunpack.c.l.b16 %v1795
      %v1831 = vpack.c.b16 %v1816, %v1815
      %v1832 = vpack.c.b16 %v1818, %v1817
      %v1833 = vpack.c.b16 %v1820, %v1819
      %v1834 = vpack.c.b16 %v1822, %v1821
      %v1835 = vpack.c.b16 %v1824, %v1823
      %v1836 = vpack.c.b16 %v1826, %v1825
      %v1837 = vpack.c.b16 %v1828, %v1827
      %v1838 = vpack.c.b16 %v1830, %v1829
      %1847 = vmatprep.subr.bf16.mxu0 0
      %1848 = vmatpush1.bf16.msra.mxu0 %v1831
      %1849 = vmatprep.subr.bf16.mxu0 0
      %1850 = vmatpush1.bf16.msra.mxu0 %v1832
      %1851 = vmatprep.subr.bf16.mxu0 0
      %1852 = vmatpush1.bf16.msra.mxu0 %v1833
      %1853 = vmatprep.subr.bf16.mxu0 0
      %1854 = vmatpush1.bf16.msra.mxu0 %v1834
      %1855 = vmatprep.subr.bf16.mxu0 0
      %1856 = vmatpush1.bf16.msra.mxu0 %v1835
      %1857 = vmatprep.subr.bf16.mxu0 0
      %1858 = vmatpush1.bf16.msra.mxu0 %v1836
      %1859 = vmatprep.subr.bf16.mxu0 0
      %1860 = vmatpush1.bf16.msra.mxu0 %v1837
      %1861 = vmatprep.subr.bf16.mxu0 0
      %1862 = vmatpush1.bf16.msra.mxu0 %v1838
      %1863 = vmatprep.subr.bf16.mxu0 0
      %1864 = vmatpush1.bf16.msra.mxu0 0
      %1865 = vmatprep.subr.bf16.mxu0 0
      %1866 = vmatpush1.bf16.msra.mxu0 0
      %1867 = vmatprep.subr.bf16.mxu0 0
      %1868 = vmatpush1.bf16.msra.mxu0 0
      %1869 = vmatprep.subr.bf16.mxu0 0
      %1870 = vmatpush1.bf16.msra.mxu0 0
      %1871 = vmatprep.subr.bf16.mxu0 0
      %1872 = vmatpush1.bf16.msra.mxu0 0
      %1873 = vmatprep.subr.bf16.mxu0 0
      %1874 = vmatpush1.bf16.msra.mxu0 0
      %1875 = vmatprep.subr.bf16.mxu0 0
      %1876 = vmatpush1.bf16.msra.mxu0 0
      %1877 = vmatprep.subr.bf16.mxu0 0
      %1878 = vmatpush1.bf16.msra.mxu0 0
      %1879 = vmatprep.mubr.bf16.mxu0 0
      %1880 = vmatmul.mubr.bf16.gmra.mrb[0].mxu0 %v884
      %v1881 = vpop.f32.mrb[0].mxu0
      %v1882 = vadd.f32 0.0, %v1881
      %v1883 = vpop.f32.mrb[0].mxu0
      %v1884 = vpop.f32.mrb[0].mxu0
      %v1885 = vadd.f32 0.0, %v1884
      %v1886 = vpop.f32.mrb[0].mxu0
      %1887 = vmatprep.mubr.bf16.mxu0 0
      %1888 = vmatmul.mubr.bf16.gmra.mrb[0].mxu0 %v885
      %v1889 = vpop.f32.mrb[0].mxu0
      %v1890 = vadd.f32 0.0, %v1889
      %v1891 = vpop.f32.mrb[0].mxu0
      %v1892 = vpop.f32.mrb[0].mxu0
      %v1893 = vadd.f32 0.0, %v1892
      %v1894 = vpop.f32.mrb[0].mxu0
      %1895 = vmatprep.mubr.bf16.mxu0 0
      %1896 = vmatmul.mubr.bf16.gmra.mrb[0].mxu0 %v886
      %v1897 = vpop.f32.mrb[0].mxu0
      %v1898 = vadd.f32 0.0, %v1897
      %v1899 = vpop.f32.mrb[0].mxu0
      %v1900 = vpop.f32.mrb[0].mxu0
      %v1901 = vadd.f32 0.0, %v1900
      %v1902 = vpop.f32.mrb[0].mxu0
      %1903 = vmatprep.mubr.bf16.mxu0 0
      %1904 = vmatmul.mubr.bf16.gmra.mrb[0].mxu0 %v1797
      %v1905 = vpop.f32.mrb[0].mxu0
      %v1906 = vadd.f32 0.0, %v1905
      %v1907 = vpop.f32.mrb[0].mxu0
      %v1908 = vpop.f32.mrb[0].mxu0
      %v1909 = vadd.f32 0.0, %v1908
      %v1910 = vpop.f32.mrb[0].mxu0
      %1911 = vdwg.mxu0
      %v1912 = vadd.f32 %v1767, %v1882
      %v1913 = vadd.f32 %v1768, %v1885
      %v1914 = vadd.f32 %v1769, %v1890
      %v1915 = vadd.f32 %v1770, %v1893
      %v1916 = vadd.f32 %v1771, %v1898
      %v1917 = vadd.f32 %v1772, %v1901
      %v1918 = vadd.f32 %v1773, %v1906
      %v1919 = vadd.f32 %v1774, %v1909
      %v1920 = vpack.c.bf16 %v1912, %v1912
      %v1921 = vpack.c.bf16 %v1913, %v1913
      %v1922 = vpack.c.bf16 %v1914, %v1914
      %v1923 = vpack.c.bf16 %v1915, %v1915
      %v1924 = vpack.c.bf16 %v1916, %v1916
      %v1925 = vpack.c.bf16 %v1917, %v1917
      %v1926 = vpack.c.bf16 %v1918, %v1918
      %v1927 = vpack.c.bf16 %v1919, %v1919
      %1928 = vst [vmem:[%s282] sm:$0xf] %v1920
      %1929 = vst [vmem:[%s282 + $0x4] sm:$0xf] %v1921
      %1930 = vst [vmem:[%s282 + $0x8] sm:$0xf] %v1922
      %1931 = vst [vmem:[%s282 + $0xc] sm:$0xf] %v1923
      %1932 = vst [vmem:[%s282 + $0x10] sm:$0xf] %v1924
      %1933 = vst [vmem:[%s282 + $0x14] sm:$0xf] %v1925
      %1934 = vst [vmem:[%s282 + $0x18] sm:$0xf] %v1926
      %1935 = vst [vmem:[%s282 + $0x1c] sm:$0xf] %v1927
      %v1936 = vadd.f32 %v1912, %v1913
      %v1937 = vadd.f32 %v1936, %v1914
      %v1938 = vadd.f32 %v1937, %v1915
      %v1939 = vadd.f32 %v1938, %v1916
      %v1940 = vadd.f32 %v1939, %v1917
      %v1941 = vadd.f32 %v1940, %v1918
      %v1942 = vadd.f32 %v1941, %v1919
      %v1943 = vrot.slane %v1942, 4
      %v1944 = vadd.f32 %v1942, %v1943
      %v1945 = vrot.slane %v1944, 2
      %v1946 = vadd.f32 %v1944, %v1945
      %v1947 = vrot.slane %v1946, 1
      %v1948 = vadd.f32 %v1946, %v1947
      %1949 = vst [vmem:[%s292] sm:$0x1] %v1948
      %v1950 = vmul.f32 %v1912, %v1912
      %v1951 = vmul.f32 %v1913, %v1913
      %v1952 = vmul.f32 %v1914, %v1914
      %v1953 = vmul.f32 %v1915, %v1915
      %v1954 = vmul.f32 %v1916, %v1916
      %v1955 = vmul.f32 %v1917, %v1917
      %v1956 = vmul.f32 %v1918, %v1918
      %v1957 = vmul.f32 %v1919, %v1919
      %v1958 = vadd.f32 %v1950, %v1951
      %v1959 = vadd.f32 %v1958, %v1952
      %v1960 = vadd.f32 %v1959, %v1953
      %v1961 = vadd.f32 %v1960, %v1954
      %v1962 = vadd.f32 %v1961, %v1955
      %v1963 = vadd.f32 %v1962, %v1956
      %v1964 = vadd.f32 %v1963, %v1957
      %v1965 = vrot.slane %v1964, 4
      %v1966 = vadd.f32 %v1964, %v1965
      %v1967 = vrot.slane %v1966, 2
      %v1968 = vadd.f32 %v1966, %v1967
      %v1969 = vrot.slane %v1968, 1
      %v1970 = vadd.f32 %v1968, %v1969
      %1971 = vst [vmem:[%s301] sm:$0x1] %v1970
      %s1972 = smul.u32 8, %s23
      %p1973 = scmp.lt.s32.totalorder %s22, 1
      %s1974 = scalar_select %p1973, %s22, 1
      %p1975 = scmp.lt.s32.totalorder %s1972, 7
      %s1976 = scalar_select %p1975, %s1972, 7
      %p1977 = scmp.lt.s32.totalorder %s21, 0
      %s1978 = scalar_select %p1977, %s21, 0
      %s1979 = sadd.s32 %s1978, %s1976
      %s1980 = smul.addr %s1974, 8
      %s1981 = sadd.s32 %s1979, %s1980
      %s1982 = smul.addr %s1981, 4
      %s1983 = scalar_lea.vmem %s2, %s1982
      %p1984 = scmp.lt.s32.totalorder %s22, 1
      %s1985 = scalar_select %p1984, %s22, 1
      %p1986 = scmp.lt.s32.totalorder %s23, 0
      %s1987 = scalar_select %p1986, %s23, 0
      %p1988 = scmp.lt.s32.totalorder %s21, 0
      %s1989 = scalar_select %p1988, %s21, 0
      %s1990 = sadd.s32 %s1989, %s1987
      %s1991 = sadd.s32 %s1990, %s1985
      %s1992 = scalar_lea.vmem %s3, %s1991
      %p1993 = scmp.lt.s32.totalorder %s22, 1
      %s1994 = scalar_select %p1993, %s22, 1
      %p1995 = scmp.lt.s32.totalorder %s23, 0
      %s1996 = scalar_select %p1995, %s23, 0
      %p1997 = scmp.lt.s32.totalorder %s21, 0
      %s1998 = scalar_select %p1997, %s21, 0
      %s1999 = sadd.s32 %s1998, %s1996
      %s2000 = sadd.s32 %s1999, %s1994
      %s2001 = scalar_lea.vmem %s4, %s2000
      // Predicated region
      $region33: #{p4m_basic_block_fwd.4} parent=27 // pred_check
        %p2002 = pneg %p109
      $region34: #{p4m_basic_block_fwd.4} parent=27 // pred_check_branch
        %2004 = sbr.rel (%p2002) target = $region36
      $region35: #{p4m_basic_block_fwd.4} parent=27 // pred_region
        %s2005 = smul.u32 8, %s23
      $region36: #{p4m_basic_block_fwd.4} parent=27 // pred_fallthru
        _
      // Predicated region
      $region37: #{p4m_basic_block_fwd.4} parent=27 // pred_check
        %p2006 = pneg %p139
      $region38: #{p4m_basic_block_fwd.4} parent=27 // pred_check_branch
        %2008 = sbr.rel (%p2006) target = $region40
      $region39: #{p4m_basic_block_fwd.4} parent=27 // pred_region
        _
      $region40: #{p4m_basic_block_fwd.4} parent=27 // pred_fallthru
        _
      // Predicated region
      $region41: #{p4m_basic_block_fwd.4} parent=27 // pred_check
        %p2009 = pneg %p169
      $region42: #{p4m_basic_block_fwd.4} parent=27 // pred_check_branch
        %2011 = sbr.rel (%p2009) target = $region44
      $region43: #{p4m_basic_block_fwd.4} parent=27 // pred_region
        _
      $region44: #{p4m_basic_block_fwd.4} parent=27 // pred_fallthru
        _
    $region28: #{p4m_basic_block_fwd.4} parent=5 // pred_fallthru
      _
    %p2012 = scmp.le.s32.totalorder 2, %s11
    // Predicated region
    $region45: #{p4m_basic_block_fwd.4} parent=5 // pred_check
      %p2013 = pneg %p2012
    $region46: #{p4m_basic_block_fwd.4} parent=5 // pred_check_branch
      %2015 = sbr.rel (%p2013) target = $region48
    $region47: #{p4m_basic_block_fwd.4} parent=5 // pred_region
      %s2016 = ssub.s32 %s11, 2
      // Predicated region
      $region49: #{p4m_basic_block_fwd.4} parent=47 // pred_check
        %p2017 = pneg %p115
      $region50: #{p4m_basic_block_fwd.4} parent=47 // pred_check_branch
        %2019 = sbr.rel (%p2017) target = $region52
      $region51: #{p4m_basic_block_fwd.4} parent=47 // pred_region
        %s2020 = smul.u32 8, %s26
        %p2021 = scmp.lt.s32.totalorder %s25, 1
        %s2022 = scalar_select %p2021, %s25, 1
        %p2023 = scmp.lt.s32.totalorder %s2020, 7
        %s2024 = scalar_select %p2023, %s2020, 7
        %p2025 = scmp.lt.s32.totalorder %s24, 0
        %s2026 = scalar_select %p2025, %s24, 0
        %s2027 = sadd.s32 %s2026, %s2024
        %s2028 = smul.addr %s2022, 8
        %s2029 = sadd.s32 %s2027, %s2028
        %s2030 = smul.addr %s2029, 4
        %s2031 = scalar_lea.vmem %s2, %s2030
      $region52: #{p4m_basic_block_fwd.4} parent=47 // pred_fallthru
        _
      // Predicated region
      $region53: #{p4m_basic_block_fwd.4} parent=47 // pred_check
        %p2032 = pneg %p145
      $region54: #{p4m_basic_block_fwd.4} parent=47 // pred_check_branch
        %2034 = sbr.rel (%p2032) target = $region56
      $region55: #{p4m_basic_block_fwd.4} parent=47 // pred_region
        %p2035 = scmp.lt.s32.totalorder %s25, 1
        %s2036 = scalar_select %p2035, %s25, 1
        %p2037 = scmp.lt.s32.totalorder %s26, 0
        %s2038 = scalar_select %p2037, %s26, 0
        %p2039 = scmp.lt.s32.totalorder %s24, 0
        %s2040 = scalar_select %p2039, %s24, 0
        %s2041 = sadd.s32 %s2040, %s2038
        %s2042 = sadd.s32 %s2041, %s2036
        %s2043 = scalar_lea.vmem %s3, %s2042
      $region56: #{p4m_basic_block_fwd.4} parent=47 // pred_fallthru
        _
      // Predicated region
      $region57: #{p4m_basic_block_fwd.4} parent=47 // pred_check
        %p2044 = pneg %p175
      $region58: #{p4m_basic_block_fwd.4} parent=47 // pred_check_branch
        %2046 = sbr.rel (%p2044) target = $region60
      $region59: #{p4m_basic_block_fwd.4} parent=47 // pred_region
        %p2047 = scmp.lt.s32.totalorder %s25, 1
        %s2048 = scalar_select %p2047, %s25, 1
        %p2049 = scmp.lt.s32.totalorder %s26, 0
        %s2050 = scalar_select %p2049, %s26, 0
        %p2051 = scmp.lt.s32.totalorder %s24, 0
        %s2052 = scalar_select %p2051, %s24, 0
        %s2053 = sadd.s32 %s2052, %s2050
        %s2054 = sadd.s32 %s2053, %s2048
        %s2055 = scalar_lea.vmem %s4, %s2054
      $region60: #{p4m_basic_block_fwd.4} parent=47 // pred_fallthru
        _
    $region48: #{p4m_basic_block_fwd.4} parent=5 // pred_fallthru
      _
  $region6: #{p4m_basic_block_fwd.4} parent=0 // loop_footer
    %s15 = sadd.s32 1, %s11
  $region7: #{p4m_basic_block_fwd.4} parent=0 // loop_footer_branch
    %10 = sbr.rel target = $region3
  $region8: #{p4m_basic_block_fwd.4} parent=0 // loop_exit
    _

// kernel: p4m_basic_block_fwd.5
$region0: #{p4m_basic_block_fwd.5}
  #allocation0 [shape = 'u32[]', space=smem, size = 0x4, offset = 0x4, fixed_abs, tag = 'smem constant byte address 0x4 - core index']
  #allocation1 [shape = 'u32[144,128]{1,0:T(1,128)}', space=vmem, size = 0x12000, scoped, tag = 'internal scratch']
  #allocation2 [shape = 'f32[10,10,128]{2,1,0:T(8,128)}', space=vmem, size = 0x14000, scoped, tag = 'scratch operand']
  %s0 = inlined_call_operand.vmem [shape: bf16[2,8,8,128], index: 0, kind: input, shape index: {}]
  %s1 = inlined_call_operand.vmem [shape: bf16[3,3,128,128], index: 1, kind: input, shape index: {}]
  %s2 = inlined_call_operand.vmem [shape: f32[1,128], index: 2, kind: input, shape index: {}]
  %s3 = inlined_call_operand.vmem [shape: f32[1,128], index: 3, kind: input, shape index: {}]
  %s4 = inlined_call_operand.vmem [shape: bf16[2,8,8,128], index: 4, kind: output, shape index: {0}]
  %s5 = inlined_call_operand.vmem [shape: f32[2,1,1,128], index: 5, kind: output, shape index: {1}]
  %s6 = inlined_call_operand.vmem [shape: f32[2,1,1,128], index: 6, kind: output, shape index: {2}]
  %7 = xla_tuple %s4, %s5, %s6
  %s8 = sld [smem:[#allocation0]]
  $region69: #{p4m_basic_block_fwd.5} parent=0
    _
  %s10 = ssub.s32 1, %s8
  %s11 = scalar_select 0, %s10, %s8
  loop: start=0, step=1, limit=4
  $region2: #{p4m_basic_block_fwd.5} parent=0 // loop_pre_header
    _
  $region3: #{p4m_basic_block_fwd.5} parent=0 // loop_header
    %s13 = sphi 0, %s17
    %p14 = scmp.ge.s32.totalorder %s13, 4
    %s20 = sphi 0, %s39
    %s21 = sphi 0, %s35
    %s22 = sphi 0, %s31
    %s23 = sphi 0, %s20
    %s24 = sphi 0, %s21
    %s25 = sphi 0, %s22
    %s26 = sphi 0, %s23
    %s27 = sphi 0, %s24
    %s28 = sphi 0, %s25
    %s42 = sphi 0, %s44
    %s45 = sphi 0, %s42
    %s46 = sphi 0, %s45
    %s62 = sphi 0, %s46
    %s68 = sphi 0, %s70
    %s71 = sphi 0, %s68
    %s72 = sphi 0, %s71
    %s88 = sphi 0, %s72
    %s92 = sphi 0, %s92
    %s94 = sphi 0, %s92
    %s95 = sphi 0, %s94
    %s109 = sphi 0, %s95
    %s113 = sphi 0, %s113
    %s115 = sphi 0, %s113
    %s116 = sphi 0, %s115
    %s130 = sphi 0, %s116
    %s140 = sphi 0, %s142
    %s143 = sphi 0, %s140
    %s144 = sphi 0, %s143
    %s160 = sphi 0, %s144
    %s170 = sphi 0, %s172
    %s173 = sphi 0, %s170
    %s174 = sphi 0, %s173
    %s190 = sphi 0, %s174
    %s200 = sphi 0, %s202
    %s203 = sphi 0, %s200
    %s204 = sphi 0, %s203
    %s220 = sphi 0, %s204
  $region4: #{p4m_basic_block_fwd.5} parent=0 // loop_header_branch
    %16 = sbr.rel (%p14) target = $region8
  $region5: #{p4m_basic_block_fwd.5} parent=0 // loop_body
    %s18 = ssub.s32 %s13, 1
    %s19 = ssub.s32 %s13, 2
    %s29 = sadd.s32 1, %s22
    %p30 = scmp.ge.s32.totalorder %s29, 1
    %s31 = scalar_select %p30, 0, %s29
    %s32 = sadd.s32 1, %s21
    %s33 = scalar_select %p30, %s32, %s21
    %p34 = scmp.ge.s32.totalorder %s33, 2
    %s35 = scalar_select %p34, 0, %s33
    %s36 = sadd.s32 1, %s20
    %s37 = scalar_select %p34, %s36, %s20
    %p38 = scmp.ge.s32.totalorder %s37, 1
    %s39 = scalar_select %p38, 0, %s37
    %s40 = ssub.s32 %s21, %s35
    %p41 = scmp.eq.s32.totalorder %s40, 0
    %s43 = sadd.s32 %s42, 1
    %s44 = scalar_select %p41, %s42, %s43
    %p47 = pneg %p41
    %p48 = scmp.eq.s32.totalorder %s13, 1
    %p49 = por %p47, %p48
    %p50 = scmp.ne.s32.totalorder %s42, %s45
    %p51 = scmp.eq.s32.totalorder %s13, 0
    %p52 = por %p50, %p51
    %p53 = scmp.ne.s32.totalorder %s42, %s45
    %p54 = scmp.eq.s32.totalorder %s18, 1
    %p55 = por %p53, %p54
    %p56 = scmp.ne.s32.totalorder %s45, %s46
    %p57 = scmp.eq.s32.totalorder %s18, 0
    %p58 = por %p56, %p57
    %p59 = scmp.ne.s32.totalorder %s45, %s46
    %p60 = scmp.eq.s32.totalorder %s19, 1
    %p61 = por %p59, %p60
    %p63 = scmp.ne.s32.totalorder %s46, %s62
    %p64 = scmp.eq.s32.totalorder %s19, 0
    %p65 = por %p63, %p64
    %s66 = ssub.s32 %s20, %s39
    %p67 = scmp.eq.s32.totalorder %s66, 0
    %s69 = sadd.s32 %s68, 1
    %s70 = scalar_select %p67, %s68, %s69
    %p73 = pneg %p67
    %p74 = scmp.eq.s32.totalorder %s13, 1
    %p75 = por %p73, %p74
    %p76 = scmp.ne.s32.totalorder %s68, %s71
    %p77 = scmp.eq.s32.totalorder %s13, 0
    %p78 = por %p76, %p77
    %p79 = scmp.ne.s32.totalorder %s68, %s71
    %p80 = scmp.eq.s32.totalorder %s18, 1
    %p81 = por %p79, %p80
    %p82 = scmp.ne.s32.totalorder %s71, %s72
    %p83 = scmp.eq.s32.totalorder %s18, 0
    %p84 = por %p82, %p83
    %p85 = scmp.ne.s32.totalorder %s71, %s72
    %p86 = scmp.eq.s32.totalorder %s19, 1
    %p87 = por %p85, %p86
    %p89 = scmp.ne.s32.totalorder %s72, %s88
    %p90 = scmp.eq.s32.totalorder %s19, 0
    %p91 = por %p89, %p90
    %s93 = sadd.s32 %s92, 1
    %p96 = scmp.eq.s32.totalorder %s13, 1
    %p97 = scmp.ne.s32.totalorder %s92, %s94
    %p98 = scmp.eq.s32.totalorder %s13, 0
    %p99 = por %p97, %p98
    %p100 = scmp.ne.s32.totalorder %s92, %s94
    %p101 = scmp.eq.s32.totalorder %s18, 1
    %p102 = por %p100, %p101
    %p103 = scmp.ne.s32.totalorder %s94, %s95
    %p104 = scmp.eq.s32.totalorder %s18, 0
    %p105 = por %p103, %p104
    %p106 = scmp.ne.s32.totalorder %s94, %s95
    %p107 = scmp.eq.s32.totalorder %s19, 1
    %p108 = por %p106, %p107
    %p110 = scmp.ne.s32.totalorder %s95, %s109
    %p111 = scmp.eq.s32.totalorder %s19, 0
    %p112 = por %p110, %p111
    %s114 = sadd.s32 %s113, 1
    %p117 = scmp.eq.s32.totalorder %s13, 1
    %p118 = scmp.ne.s32.totalorder %s113, %s115
    %p119 = scmp.eq.s32.totalorder %s13, 0
    %p120 = por %p118, %p119
    %p121 = scmp.ne.s32.totalorder %s113, %s115
    %p122 = scmp.eq.s32.totalorder %s18, 1
    %p123 = por %p121, %p122
    %p124 = scmp.ne.s32.totalorder %s115, %s116
    %p125 = scmp.eq.s32.totalorder %s18, 0
    %p126 = por %p124, %p125
    %p127 = scmp.ne.s32.totalorder %s115, %s116
    %p128 = scmp.eq.s32.totalorder %s19, 1
    %p129 = por %p127, %p128
    %p131 = scmp.ne.s32.totalorder %s116, %s130
    %p132 = scmp.eq.s32.totalorder %s19, 0
    %p133 = por %p131, %p132
    %s134 = ssub.s32 %s21, %s35
    %s135 = ssub.s32 %s22, %s31
    %s136 = sor.u32 %s134, %s135
    %s137 = ssub.s32 %s20, %s39
    %s138 = sor.u32 %s136, %s137
    %p139 = scmp.eq.s32.totalorder %s138, 0
    %s141 = sadd.s32 %s140, 1
    %s142 = scalar_select %p139, %s140, %s141
    %p145 = pneg %p139
    %p146 = scmp.eq.s32.totalorder %s13, 1
    %p147 = por %p145, %p146
    %p148 = scmp.ne.s32.totalorder %s140, %s143
    %p149 = scmp.eq.s32.totalorder %s13, 0
    %p150 = por %p148, %p149
    %p151 = scmp.ne.s32.totalorder %s140, %s143
    %p152 = scmp.eq.s32.totalorder %s18, 1
    %p153 = por %p151, %p152
    %p154 = scmp.ne.s32.totalorder %s143, %s144
    %p155 = scmp.eq.s32.totalorder %s18, 0
    %p156 = por %p154, %p155
    %p157 = scmp.ne.s32.totalorder %s143, %s144
    %p158 = scmp.eq.s32.totalorder %s19, 1
    %p159 = por %p157, %p158
    %p161 = scmp.ne.s32.totalorder %s144, %s160
    %p162 = scmp.eq.s32.totalorder %s19, 0
    %p163 = por %p161, %p162
    %s164 = ssub.s32 %s21, %s35
    %s165 = ssub.s32 %s22, %s31
    %s166 = sor.u32 %s164, %s165
    %s167 = ssub.s32 %s20, %s39
    %s168 = sor.u32 %s166, %s167
    %p169 = scmp.eq.s32.totalorder %s168, 0
    %s171 = sadd.s32 %s170, 1
    %s172 = scalar_select %p169, %s170, %s171
    %p175 = pneg %p169
    %p176 = scmp.eq.s32.totalorder %s13, 1
    %p177 = por %p175, %p176
    %p178 = scmp.ne.s32.totalorder %s170, %s173
    %p179 = scmp.eq.s32.totalorder %s13, 0
    %p180 = por %p178, %p179
    %p181 = scmp.ne.s32.totalorder %s170, %s173
    %p182 = scmp.eq.s32.totalorder %s18, 1
    %p183 = por %p181, %p182
    %p184 = scmp.ne.s32.totalorder %s173, %s174
    %p185 = scmp.eq.s32.totalorder %s18, 0
    %p186 = por %p184, %p185
    %p187 = scmp.ne.s32.totalorder %s173, %s174
    %p188 = scmp.eq.s32.totalorder %s19, 1
    %p189 = por %p187, %p188
    %p191 = scmp.ne.s32.totalorder %s174, %s190
    %p192 = scmp.eq.s32.totalorder %s19, 0
    %p193 = por %p191, %p192
    %s194 = ssub.s32 %s21, %s35
    %s195 = ssub.s32 %s22, %s31
    %s196 = sor.u32 %s194, %s195
    %s197 = ssub.s32 %s20, %s39
    %s198 = sor.u32 %s196, %s197
    %p199 = scmp.eq.s32.totalorder %s198, 0
    %s201 = sadd.s32 %s200, 1
    %s202 = scalar_select %p199, %s200, %s201
    %p205 = pneg %p199
    %p206 = scmp.eq.s32.totalorder %s13, 1
    %p207 = por %p205, %p206
    %p208 = scmp.ne.s32.totalorder %s200, %s203
    %p209 = scmp.eq.s32.totalorder %s13, 0
    %p210 = por %p208, %p209
    %p211 = scmp.ne.s32.totalorder %s200, %s203
    %p212 = scmp.eq.s32.totalorder %s18, 1
    %p213 = por %p211, %p212
    %p214 = scmp.ne.s32.totalorder %s203, %s204
    %p215 = scmp.eq.s32.totalorder %s18, 0
    %p216 = por %p214, %p215
    %p217 = scmp.ne.s32.totalorder %s203, %s204
    %p218 = scmp.eq.s32.totalorder %s19, 1
    %p219 = por %p217, %p218
    %p221 = scmp.ne.s32.totalorder %s204, %s220
    %p222 = scmp.eq.s32.totalorder %s19, 0
    %p223 = por %p221, %p222
    %p224 = scmp.le.s32.totalorder 1, %s13
    %p225 = scmp.lt.s32.totalorder %s13, 3
    %p226 = pnand %p224, %p225
    %p227 = pneg %p226
    // Predicated region
    $region9: #{p4m_basic_block_fwd.5} parent=5 // pred_check
      _
    $region10: #{p4m_basic_block_fwd.5} parent=5 // pred_check_branch
      %229 = sbr.rel (%p226) target = $region12
    $region11: #{p4m_basic_block_fwd.5} parent=5 // pred_region
      %s230 = ssub.s32 %s13, 1
      // Predicated region
      $region13: #{p4m_basic_block_fwd.5} parent=11 // pred_check
        %p231 = pneg %p84
      $region14: #{p4m_basic_block_fwd.5} parent=11 // pred_check_branch
        %233 = sbr.rel (%p231) target = $region16
      $region15: #{p4m_basic_block_fwd.5} parent=11 // pred_region
        %p234 = scmp.lt.s32.totalorder %s23, 0
        %s235 = scalar_select %p234, %s23, 0
        %s236 = smul.addr %s235, 4
        %s237 = scalar_lea.vmem %s1, %s236
      $region16: #{p4m_basic_block_fwd.5} parent=11 // pred_fallthru
        _
      // Predicated region
      $region17: #{p4m_basic_block_fwd.5} parent=11 // pred_check
        %p238 = pneg %p105
      $region18: #{p4m_basic_block_fwd.5} parent=11 // pred_check_branch
        %240 = sbr.rel (%p238) target = $region20
      $region19: #{p4m_basic_block_fwd.5} parent=11 // pred_region
        _
      $region20: #{p4m_basic_block_fwd.5} parent=11 // pred_fallthru
        _
      // Predicated region
      $region21: #{p4m_basic_block_fwd.5} parent=11 // pred_check
        %p241 = pneg %p126
      $region22: #{p4m_basic_block_fwd.5} parent=11 // pred_check_branch
        %243 = sbr.rel (%p241) target = $region24
      $region23: #{p4m_basic_block_fwd.5} parent=11 // pred_region
        _
      $region24: #{p4m_basic_block_fwd.5} parent=11 // pred_fallthru
        _
    $region12: #{p4m_basic_block_fwd.5} parent=5 // pred_fallthru
      _
    %p244 = scmp.lt.s32.totalorder %s13, 2
    // Predicated region
    $region25: #{p4m_basic_block_fwd.5} parent=5 // pred_check
      %p245 = pneg %p244
    $region26: #{p4m_basic_block_fwd.5} parent=5 // pred_check_branch
      %247 = sbr.rel (%p245) target = $region28
    $region27: #{p4m_basic_block_fwd.5} parent=5 // pred_region
      // Predicated region
      $region29: #{p4m_basic_block_fwd.5} parent=27 // pred_check
        %p248 = pneg %p52
      $region30: #{p4m_basic_block_fwd.5} parent=27 // pred_check_branch
        %250 = sbr.rel (%p248) target = $region32
      $region31: #{p4m_basic_block_fwd.5} parent=27 // pred_region
        %p251 = scmp.lt.s32.totalorder %s21, 1
        %s252 = scalar_select %p251, %s21, 1
        %s253 = smul.addr %s252, 8
        %s254 = smul.addr %s253, 4
        %s255 = scalar_lea.vmem %s0, %s254
      $region32: #{p4m_basic_block_fwd.5} parent=27 // pred_fallthru
        _
    $region28: #{p4m_basic_block_fwd.5} parent=5 // pred_fallthru
      _
    %p256 = scmp.le.s32.totalorder 1, %s13
    %p257 = scmp.lt.s32.totalorder %s13, 3
    %p258 = pnand %p256, %p257
    %p259 = pneg %p258
    // Predicated region
    $region33: #{p4m_basic_block_fwd.5} parent=5 // pred_check
      _
    $region34: #{p4m_basic_block_fwd.5} parent=5 // pred_check_branch
      %261 = sbr.rel (%p258) target = $region36
    $region35: #{p4m_basic_block_fwd.5} parent=5 // pred_region
      %s262 = ssub.s32 %s13, 1
      %p263 = scmp.lt.s32.totalorder %s24, 1
      %s264 = scalar_select %p263, %s24, 1
      %s265 = smul.addr %s264, 8
      %s266 = smul.addr %s265, 4
      %s267 = scalar_lea.vmem %s0, %s266
      %p268 = pneg %p58
      %p269 = pneg %p55
      %p270 = scmp.lt.s32.totalorder %s23, 0
      %s271 = scalar_select %p270, %s23, 0
      %s272 = smul.addr %s271, 4
      %s273 = scalar_lea.vmem %s1, %s272
      %p274 = pneg %p84
      %p275 = pneg %p81
      %p276 = pneg %p105
      %p277 = pneg %p102
      %p278 = pneg %p126
      %p279 = pneg %p123
      %p280 = pneg %p156
      %p281 = pneg %p153
      %s282 = smul.u32 8, %s25
      %p283 = scmp.lt.s32.totalorder %s24, 1
      %s284 = scalar_select %p283, %s24, 1
      %p285 = scmp.lt.s32.totalorder %s282, 7
      %s286 = scalar_select %p285, %s282, 7
      %p287 = scmp.lt.s32.totalorder %s23, 0
      %s288 = scalar_select %p287, %s23, 0
      %s289 = sadd.s32 %s288, %s286
      %s290 = smul.addr %s284, 8
      %s291 = sadd.s32 %s289, %s290
      %s292 = smul.addr %s291, 4
      %s293 = scalar_lea.vmem %s4, %s292
      %p294 = pneg %p186
      %p295 = pneg %p183
      %p296 = scmp.lt.s32.totalorder %s24, 1
      %s297 = scalar_select %p296, %s24, 1
      %p298 = scmp.lt.s32.totalorder %s25, 0
      %s299 = scalar_select %p298, %s25, 0
      %p300 = scmp.lt.s32.totalorder %s23, 0
      %s301 = scalar_select %p300, %s23, 0
      %s302 = sadd.s32 %s301, %s299
      %s303 = sadd.s32 %s302, %s297
      %s304 = scalar_lea.vmem %s5, %s303
      %p305 = pneg %p216
      %p306 = pneg %p213
      %p307 = scmp.lt.s32.totalorder %s24, 1
      %s308 = scalar_select %p307, %s24, 1
      %p309 = scmp.lt.s32.totalorder %s25, 0
      %s310 = scalar_select %p309, %s25, 0
      %p311 = scmp.lt.s32.totalorder %s23, 0
      %s312 = scalar_select %p311, %s23, 0
      %s313 = sadd.s32 %s312, %s310
      %s314 = sadd.s32 %s313, %s308
      %s315 = scalar_lea.vmem %s6, %s314
      %p316 = scmp.lt.s32.totalorder %s24, 1
      %s317 = scalar_select %p316, %s24, 1
      %s318 = smul.addr %s317, 8
      %s319 = smul.addr %s318, 4
      %s320 = scalar_lea.vmem %s0, %s319
      %p321 = scmp.lt.s32.totalorder %s23, 0
      %s322 = scalar_select %p321, %s23, 0
      %s323 = smul.addr %s322, 4
      %s324 = scalar_lea.vmem %s1, %s323
      %s325 = smul.u32 8, %s25
      %p326 = scmp.lt.s32.totalorder %s24, 1
      %s327 = scalar_select %p326, %s24, 1
      %p328 = scmp.lt.s32.totalorder %s325, 7
      %s329 = scalar_select %p328, %s325, 7
      %p330 = scmp.lt.s32.totalorder %s23, 0
      %s331 = scalar_select %p330, %s23, 0
      %s332 = sadd.s32 %s331, %s329
      %s333 = smul.addr %s327, 8
      %s334 = sadd.s32 %s332, %s333
      %s335 = smul.addr %s334, 4
      %s336 = scalar_lea.vmem %s4, %s335
      %s337 = smul.u32 8, %s25
      %p338 = scmp.lt.s32.totalorder %s24, 1
      %s339 = scalar_select %p338, %s24, 1
      %p340 = scmp.lt.s32.totalorder %s25, 0
      %s341 = scalar_select %p340, %s25, 0
      %p342 = scmp.lt.s32.totalorder %s23, 0
      %s343 = scalar_select %p342, %s23, 0
      %s344 = sadd.s32 %s343, %s341
      %s345 = sadd.s32 %s344, %s339
      %s346 = scalar_lea.vmem %s5, %s345
      %p347 = scmp.lt.s32.totalorder %s24, 1
      %s348 = scalar_select %p347, %s24, 1
      %p349 = scmp.lt.s32.totalorder %s25, 0
      %s350 = scalar_select %p349, %s25, 0
      %p351 = scmp.lt.s32.totalorder %s23, 0
      %s352 = scalar_select %p351, %s23, 0
      %s353 = sadd.s32 %s352, %s350
      %s354 = sadd.s32 %s353, %s348
      %s355 = scalar_lea.vmem %s6, %s354
      %p357 = scmp.eq.s32.totalorder %s25, 0
      // Predicated region
      $region37: #{p4m_basic_block_fwd.5} parent=35 // pred_check
        %p358 = pneg %p357
      $region38: #{p4m_basic_block_fwd.5} parent=35 // pred_check_branch
        %360 = sbr.rel (%p358) target = $region40
      $region39: #{p4m_basic_block_fwd.5} parent=35 // pred_region
        %361 = vst [vmem:[#allocation2] sm:$0xff] 0.0
        %362 = vst [vmem:[#allocation2 + $0x8] sm:$0x3] 0.0
        %363 = vst [vmem:[#allocation2 + $0x10] sm:$0xff] 0.0
        %364 = vst [vmem:[#allocation2 + $0x18] sm:$0x3] 0.0
        %365 = vst [vmem:[#allocation2 + $0x20] sm:$0xff] 0.0
        %366 = vst [vmem:[#allocation2 + $0x28] sm:$0x3] 0.0
        %367 = vst [vmem:[#allocation2 + $0x30] sm:$0xff] 0.0
        %368 = vst [vmem:[#allocation2 + $0x38] sm:$0x3] 0.0
        %369 = vst [vmem:[#allocation2 + $0x40] sm:$0xff] 0.0
        %370 = vst [vmem:[#allocation2 + $0x48] sm:$0x3] 0.0
        %371 = vst [vmem:[#allocation2 + $0x50] sm:$0xff] 0.0
        %372 = vst [vmem:[#allocation2 + $0x58] sm:$0x3] 0.0
        %373 = vst [vmem:[#allocation2 + $0x60] sm:$0xff] 0.0
        %374 = vst [vmem:[#allocation2 + $0x68] sm:$0x3] 0.0
        %375 = vst [vmem:[#allocation2 + $0x70] sm:$0xff] 0.0
        %376 = vst [vmem:[#allocation2 + $0x78] sm:$0x3] 0.0
        %377 = vst [vmem:[#allocation2 + $0x80] sm:$0xff] 0.0
        %378 = vst [vmem:[#allocation2 + $0x88] sm:$0x3] 0.0
        %379 = vst [vmem:[#allocation2 + $0x90] sm:$0xff] 0.0
        %380 = vst [vmem:[#allocation2 + $0x98] sm:$0x3] 0.0
        %v381 = vld [vmem:[%s320] sm:$0xf]
        %v382 = vld [vmem:[%s320 + $0x4] sm:$0xf]
        %v383 = vld [vmem:[%s320 + $0x8] sm:$0xf]
        %v384 = vld [vmem:[%s320 + $0xc] sm:$0xf]
        %v385 = vld [vmem:[%s320 + $0x10] sm:$0xf]
        %v386 = vld [vmem:[%s320 + $0x14] sm:$0xf]
        %v387 = vld [vmem:[%s320 + $0x18] sm:$0xf]
        %v388 = vld [vmem:[%s320 + $0x1c] sm:$0xf]
        %v389 = vunpack.c.l.bf16 %v381
        %v390 = vunpack.c.l.bf16 %v382
        %v391 = vunpack.c.l.bf16 %v383
        %v392 = vunpack.c.l.bf16 %v384
        %v393 = vunpack.c.l.bf16 %v385
        %v394 = vunpack.c.l.bf16 %v386
        %v395 = vunpack.c.l.bf16 %v387
        %v396 = vunpack.c.l.bf16 %v388
        %v397 = vld [vmem:[%s2] sm:$0x1]
        %v399 = vlaneseq
        %v400 = vshrl.u32 %v399, 7
        %v401 = vsub.s32 0, %v400
        %v402 = vrot.slane %v397, %v401
        %v404 = vmul.f32 %v389, %v402
        %v405 = vmul.f32 %v390, %v402
        %v406 = vmul.f32 %v391, %v402
        %v407 = vmul.f32 %v392, %v402
        %v408 = vmul.f32 %v393, %v402
        %v409 = vmul.f32 %v394, %v402
        %v410 = vmul.f32 %v395, %v402
        %v411 = vmul.f32 %v396, %v402
        %v412 = vld [vmem:[%s3] sm:$0x1]
        %v414 = vlaneseq
        %v415 = vshrl.u32 %v414, 7
        %v416 = vsub.s32 0, %v415
        %v417 = vrot.slane %v412, %v416
        %v419 = vadd.f32 %v404, %v417
        %v420 = vadd.f32 %v405, %v417
        %v421 = vadd.f32 %v406, %v417
        %v422 = vadd.f32 %v407, %v417
        %v423 = vadd.f32 %v408, %v417
        %v424 = vadd.f32 %v409, %v417
        %v425 = vadd.f32 %v410, %v417
        %v426 = vadd.f32 %v411, %v417
        %v427 = vmax.f32 %v419, 0.0
        %v428 = vmax.f32 %v420, 0.0
        %v429 = vmax.f32 %v421, 0.0
        %v430 = vmax.f32 %v422, 0.0
        %v431 = vmax.f32 %v423, 0.0
        %v432 = vmax.f32 %v424, 0.0
        %v433 = vmax.f32 %v425, 0.0
        %v434 = vmax.f32 %v426, 0.0
        %s435 = scalar_lea.vmem [#allocation2], 16
        %436 = vst [vmem:[%s435 + $0x1] sm:$0xff] %v427
        %437 = vst [vmem:[%s435 + $0x11] sm:$0xff] %v428
        %438 = vst [vmem:[%s435 + $0x21] sm:$0xff] %v429
        %439 = vst [vmem:[%s435 + $0x31] sm:$0xff] %v430
        %440 = vst [vmem:[%s435 + $0x41] sm:$0xff] %v431
        %441 = vst [vmem:[%s435 + $0x51] sm:$0xff] %v432
        %442 = vst [vmem:[%s435 + $0x61] sm:$0xff] %v433
        %443 = vst [vmem:[%s435 + $0x71] sm:$0xff] %v434
      $region40: #{p4m_basic_block_fwd.5} parent=35 // pred_fallthru
        _
      %s444 = smul.u32 %s25, 8
      %s445 = smul.u32 %s444, 16
      %s446 = scalar_lea.vmem [#allocation2], %s445
      %v447 = vld [vmem:[%s446] sm:$0xff]
      %v448 = vld [vmem:[%s446 + $0x8] sm:$0x3]
      %v449 = vld [vmem:[%s446 + $0x10] sm:$0xff]
      %v450 = vld [vmem:[%s446 + $0x18] sm:$0x3]
      %v451 = vld [vmem:[%s446 + $0x20] sm:$0xff]
      %v452 = vld [vmem:[%s446 + $0x28] sm:$0x3]
      %v453 = vld [vmem:[%s446 + $0x30] sm:$0xff]
      %v454 = vld [vmem:[%s446 + $0x38] sm:$0x3]
      %v455 = vld [vmem:[%s446 + $0x40] sm:$0xff]
      %v456 = vld [vmem:[%s446 + $0x48] sm:$0x3]
      %v457 = vld [vmem:[%s446 + $0x50] sm:$0xff]
      %v458 = vld [vmem:[%s446 + $0x58] sm:$0x3]
      %v459 = vld [vmem:[%s446 + $0x60] sm:$0xff]
      %v460 = vld [vmem:[%s446 + $0x68] sm:$0x3]
      %v461 = vld [vmem:[%s446 + $0x70] sm:$0xff]
      %v462 = vld [vmem:[%s446 + $0x78] sm:$0x3]
      %v463 = vld [vmem:[%s446 + $0x80] sm:$0xff]
      %v464 = vld [vmem:[%s446 + $0x88] sm:$0x3]
      %v465 = vld [vmem:[%s446 + $0x90] sm:$0xff]
      %v466 = vld [vmem:[%s446 + $0x98] sm:$0x3]
      %v467 = vpack.c.bf16 %v448, %v447
      %v468 = vpack.c.bf16 %v450, %v449
      %v469 = vpack.c.bf16 %v452, %v451
      %v470 = vpack.c.bf16 %v454, %v453
      %v471 = vpack.c.bf16 %v456, %v455
      %v472 = vpack.c.bf16 %v458, %v457
      %v473 = vpack.c.bf16 %v460, %v459
      %v474 = vpack.c.bf16 %v462, %v461
      %v475 = vpack.c.bf16 %v464, %v463
      %v476 = vpack.c.bf16 %v466, %v465
      %v477 = vld [vmem:[%s324] sm:$0xf]
      %v478 = vld [vmem:[%s324 + $0x4] sm:$0xf]
      %v479 = vld [vmem:[%s324 + $0x8] sm:$0xf]
      %v480 = vld [vmem:[%s324 + $0xc] sm:$0xf]
      %v481 = vld [vmem:[%s324 + $0x10] sm:$0xf]
      %v482 = vld [vmem:[%s324 + $0x14] sm:$0xf]
      %v483 = vld [vmem:[%s324 + $0x18] sm:$0xf]
      %v484 = vld [vmem:[%s324 + $0x1c] sm:$0xf]
      %v485 = vld [vmem:[%s324 + $0x20] sm:$0xf]
      %v486 = vld [vmem:[%s324 + $0x24] sm:$0xf]
      %v487 = vld [vmem:[%s324 + $0x28] sm:$0xf]
      %v488 = vld [vmem:[%s324 + $0x2c] sm:$0xf]
      %v489 = vld [vmem:[%s324 + $0x30] sm:$0xf]
      %v490 = vld [vmem:[%s324 + $0x34] sm:$0xf]
      %v491 = vld [vmem:[%s324 + $0x38] sm:$0xf]
      %v492 = vld [vmem:[%s324 + $0x3c] sm:$0xf]
      %v501 = vunpack.c.l.b16 %v467
      %v502 = vunpack.c.h.b16 %v467
      %v503 = vunpack.c.l.b16 %v468
      %v504 = vunpack.c.h.b16 %v468
      %v505 = vunpack.c.l.b16 %v469
      %v506 = vunpack.c.h.b16 %v469
      %v507 = vunpack.c.l.b16 %v470
      %v508 = vunpack.c.h.b16 %v470
      %v509 = vunpack.c.l.b16 %v471
      %v510 = vunpack.c.h.b16 %v471
      %v511 = vunpack.c.l.b16 %v472
      %v512 = vunpack.c.h.b16 %v472
      %v513 = vunpack.c.l.b16 %v473
      %v514 = vunpack.c.h.b16 %v473
      %v515 = vunpack.c.l.b16 %v474
      %v516 = vunpack.c.h.b16 %v474
      %v517 = vpack.c.b16 %v501, %v501
      %v518 = vpack.c.b16 %v502, %v502
      %v519 = vpack.c.b16 %v503, %v503
      %v520 = vpack.c.b16 %v504, %v504
      %v521 = vpack.c.b16 %v505, %v505
      %v522 = vpack.c.b16 %v506, %v506
      %v523 = vpack.c.b16 %v507, %v507
      %v524 = vpack.c.b16 %v508, %v508
      %v525 = vpack.c.b16 %v509, %v509
      %v526 = vpack.c.b16 %v510, %v510
      %v527 = vpack.c.b16 %v511, %v511
      %v528 = vpack.c.b16 %v512, %v512
      %v529 = vpack.c.b16 %v513, %v513
      %v530 = vpack.c.b16 %v514, %v514
      %v531 = vpack.c.b16 %v515, %v515
      %v532 = vpack.c.b16 %v516, %v516
      %vm533 = vsmask.f32 3328
      %vm534 = vsmask.f32 7440
      %vm535 = vmor %vm533, %vm534
      %v537 = vshrl.u32 %v517, 16
      %v539 = vrot.slane %v537, 4
      %v540 = vshll.u32 %v517, 16
      %v542 = vrot.slane %v540, 5
      %v543 = vor.u32 %v539, %v542
      %v544 = vrot.slane %v543, 4
      %v546 = vshll.u32 %v518, 16
      %v548 = vrot.slane %v546, 5
      %v549 = vsel %vm535, %v544, %v548
      %v551 = vshrl.u32 %v519, 16
      %v553 = vrot.slane %v551, 4
      %v554 = vshll.u32 %v519, 16
      %v556 = vrot.slane %v554, 5
      %v557 = vor.u32 %v553, %v556
      %v558 = vrot.slane %v557, 4
      %v560 = vshll.u32 %v520, 16
      %v562 = vrot.slane %v560, 5
      %v563 = vsel %vm535, %v558, %v562
      %v565 = vshrl.u32 %v521, 16
      %v567 = vrot.slane %v565, 4
      %v568 = vshll.u32 %v521, 16
      %v570 = vrot.slane %v568, 5
      %v571 = vor.u32 %v567, %v570
      %v572 = vrot.slane %v571, 4
      %v574 = vshll.u32 %v522, 16
      %v576 = vrot.slane %v574, 5
      %v577 = vsel %vm535, %v572, %v576
      %v579 = vshrl.u32 %v523, 16
      %v581 = vrot.slane %v579, 4
      %v582 = vshll.u32 %v523, 16
      %v584 = vrot.slane %v582, 5
      %v585 = vor.u32 %v581, %v584
      %v586 = vrot.slane %v585, 4
      %v588 = vshll.u32 %v524, 16
      %v590 = vrot.slane %v588, 5
      %v591 = vsel %vm535, %v586, %v590
      %v593 = vshrl.u32 %v525, 16
      %v595 = vrot.slane %v593, 4
      %v596 = vshll.u32 %v525, 16
      %v598 = vrot.slane %v596, 5
      %v599 = vor.u32 %v595, %v598
      %v600 = vrot.slane %v599, 4
      %v602 = vshll.u32 %v526, 16
      %v604 = vrot.slane %v602, 5
      %v605 = vsel %vm535, %v600, %v604
      %v607 = vshrl.u32 %v527, 16
      %v609 = vrot.slane %v607, 4
      %v610 = vshll.u32 %v527, 16
      %v612 = vrot.slane %v610, 5
      %v613 = vor.u32 %v609, %v612
      %v614 = vrot.slane %v613, 4
      %v616 = vshll.u32 %v528, 16
      %v618 = vrot.slane %v616, 5
      %v619 = vsel %vm535, %v614, %v618
      %v621 = vshrl.u32 %v529, 16
      %v623 = vrot.slane %v621, 4
      %v624 = vshll.u32 %v529, 16
      %v626 = vrot.slane %v624, 5
      %v627 = vor.u32 %v623, %v626
      %v628 = vrot.slane %v627, 4
      %v630 = vshll.u32 %v530, 16
      %v632 = vrot.slane %v630, 5
      %v633 = vsel %vm535, %v628, %v632
      %v635 = vshrl.u32 %v531, 16
      %v637 = vrot.slane %v635, 4
      %v638 = vshll.u32 %v531, 16
      %v640 = vrot.slane %v638, 5
      %v641 = vor.u32 %v637, %v640
      %v642 = vrot.slane %v641, 4
      %v644 = vshll.u32 %v532, 16
      %v646 = vrot.slane %v644, 5
      %v647 = vsel %vm535, %v642, %v646
      %s648 = scalar_lea.vmem %s324, 64
      %v649 = vld [vmem:[%s648] sm:$0xf]
      %v650 = vld [vmem:[%s648 + $0x4] sm:$0xf]
      %v651 = vld [vmem:[%s648 + $0x8] sm:$0xf]
      %v652 = vld [vmem:[%s648 + $0xc] sm:$0xf]
      %v653 = vld [vmem:[%s648 + $0x10] sm:$0xf]
      %v654 = vld [vmem:[%s648 + $0x14] sm:$0xf]
      %v655 = vld [vmem:[%s648 + $0x18] sm:$0xf]
      %v656 = vld [vmem:[%s648 + $0x1c] sm:$0xf]
      %v657 = vld [vmem:[%s648 + $0x20] sm:$0xf]
      %v658 = vld [vmem:[%s648 + $0x24] sm:$0xf]
      %v659 = vld [vmem:[%s648 + $0x28] sm:$0xf]
      %v660 = vld [vmem:[%s648 + $0x2c] sm:$0xf]
      %v661 = vld [vmem:[%s648 + $0x30] sm:$0xf]
      %v662 = vld [vmem:[%s648 + $0x34] sm:$0xf]
      %v663 = vld [vmem:[%s648 + $0x38] sm:$0xf]
      %v664 = vld [vmem:[%s648 + $0x3c] sm:$0xf]
      %v665 = vunpack.c.l.b16 %v549
      %v666 = vunpack.c.l.b16 %v563
      %v667 = vunpack.c.l.b16 %v577
      %v668 = vunpack.c.l.b16 %v591
      %v669 = vunpack.c.l.b16 %v605
      %v670 = vunpack.c.l.b16 %v619
      %v671 = vunpack.c.l.b16 %v633
      %v672 = vunpack.c.l.b16 %v647
      %v673 = vpack.c.b16 %v666, %v665
      %v674 = vpack.c.b16 %v668, %v667
      %v675 = vpack.c.b16 %v670, %v669
      %v676 = vpack.c.b16 %v672, %v671
      %v697 = vunpack.c.l.b16 %v649
      %v698 = vunpack.c.l.b16 %v650
      %v699 = vunpack.c.l.b16 %v651
      %v700 = vunpack.c.l.b16 %v652
      %v701 = vunpack.c.l.b16 %v653
      %v702 = vunpack.c.l.b16 %v654
      %v703 = vunpack.c.l.b16 %v655
      %v704 = vunpack.c.l.b16 %v656
      %v705 = vunpack.c.l.b16 %v657
      %v706 = vunpack.c.l.b16 %v658
      %v707 = vunpack.c.l.b16 %v659
      %v708 = vunpack.c.l.b16 %v660
      %v709 = vunpack.c.l.b16 %v661
      %v710 = vunpack.c.l.b16 %v662
      %v711 = vunpack.c.l.b16 %v663
      %v712 = vunpack.c.l.b16 %v664
      %v713 = vpack.c.b16 %v698, %v697
      %v714 = vpack.c.b16 %v700, %v699
      %v715 = vpack.c.b16 %v702, %v701
      %v716 = vpack.c.b16 %v704, %v703
      %v717 = vpack.c.b16 %v706, %v705
      %v718 = vpack.c.b16 %v708, %v707
      %v719 = vpack.c.b16 %v710, %v709
      %v720 = vpack.c.b16 %v712, %v711
      %729 = vmatprep.subr.bf16.mxu0 0
      %730 = vmatpush1.bf16.msra.mxu0 %v713
      %731 = vmatprep.subr.bf16.mxu0 0
      %732 = vmatpush1.bf16.msra.mxu0 %v714
      %733 = vmatprep.subr.bf16.mxu0 0
      %734 = vmatpush1.bf16.msra.mxu0 %v715
      %735 = vmatprep.subr.bf16.mxu0 0
      %736 = vmatpush1.bf16.msra.mxu0 %v716
      %737 = vmatprep.subr.bf16.mxu0 0
      %738 = vmatpush1.bf16.msra.mxu0 %v717
      %739 = vmatprep.subr.bf16.mxu0 0
      %740 = vmatpush1.bf16.msra.mxu0 %v718
      %741 = vmatprep.subr.bf16.mxu0 0
      %742 = vmatpush1.bf16.msra.mxu0 %v719
      %743 = vmatprep.subr.bf16.mxu0 0
      %744 = vmatpush1.bf16.msra.mxu0 %v720
      %745 = vmatprep.subr.bf16.mxu0 0
      %746 = vmatpush1.bf16.msra.mxu0 0
      %747 = vmatprep.subr.bf16.mxu0 0
      %748 = vmatpush1.bf16.msra.mxu0 0
      %749 = vmatprep.subr.bf16.mxu0 0
      %750 = vmatpush1.bf16.msra.mxu0 0
      %751 = vmatprep.subr.bf16.mxu0 0
      %752 = vmatpush1.bf16.msra.mxu0 0
      %753 = vmatprep.subr.bf16.mxu0 0
      %754 = vmatpush1.bf16.msra.mxu0 0
      %755 = vmatprep.subr.bf16.mxu0 0
      %756 = vmatpush1.bf16.msra.mxu0 0
      %757 = vmatprep.subr.bf16.mxu0 0
      %758 = vmatpush1.bf16.msra.mxu0 0
      %759 = vmatprep.subr.bf16.mxu0 0
      %760 = vmatpush1.bf16.msra.mxu0 0
      %761 = vmatprep.mubr.bf16.mxu0 0
      %762 = vmatmul.mubr.bf16.gmra.mrb[0].mxu0 %v673
      %v763 = vpop.f32.mrb[0].mxu0
      %v764 = vadd.f32 0.0, %v763
      %v765 = vpop.f32.mrb[0].mxu0
      %v766 = vpop.f32.mrb[0].mxu0
      %v767 = vadd.f32 0.0, %v766
      %v768 = vpop.f32.mrb[0].mxu0
      %769 = vmatprep.mubr.bf16.mxu0 0
      %770 = vmatmul.mubr.bf16.gmra.mrb[0].mxu0 %v674
      %v771 = vpop.f32.mrb[0].mxu0
      %v772 = vadd.f32 0.0, %v771
      %v773 = vpop.f32.mrb[0].mxu0
      %v774 = vpop.f32.mrb[0].mxu0
      %v775 = vadd.f32 0.0, %v774
      %v776 = vpop.f32.mrb[0].mxu0
      %777 = vmatprep.mubr.bf16.mxu0 0
      %778 = vmatmul.mubr.bf16.gmra.mrb[0].mxu0 %v675
      %v779 = vpop.f32.mrb[0].mxu0
      %v780 = vadd.f32 0.0, %v779
      %v781 = vpop.f32.mrb[0].mxu0
      %v782 = vpop.f32.mrb[0].mxu0
      %v783 = vadd.f32 0.0, %v782
      %v784 = vpop.f32.mrb[0].mxu0
      %785 = vmatprep.mubr.bf16.mxu0 0
      %786 = vmatmul.mubr.bf16.gmra.mrb[0].mxu0 %v676
      %v787 = vpop.f32.mrb[0].mxu0
      %v788 = vadd.f32 0.0, %v787
      %v789 = vpop.f32.mrb[0].mxu0
      %v790 = vpop.f32.mrb[0].mxu0
      %v791 = vadd.f32 0.0, %v790
      %v792 = vpop.f32.mrb[0].mxu0
      %793 = vdwg.mxu0
      %v794 = vpack.c.b16 %v503, %v501
      %v795 = vpack.c.b16 %v507, %v505
      %v796 = vpack.c.b16 %v511, %v509
      %v797 = vpack.c.b16 %v515, %v513
      %v818 = vunpack.c.l.b16 %v477
      %v819 = vunpack.c.l.b16 %v478
      %v820 = vunpack.c.l.b16 %v479
      %v821 = vunpack.c.l.b16 %v480
      %v822 = vunpack.c.l.b16 %v481
      %v823 = vunpack.c.l.b16 %v482
      %v824 = vunpack.c.l.b16 %v483
      %v825 = vunpack.c.l.b16 %v484
      %v826 = vunpack.c.l.b16 %v485
      %v827 = vunpack.c.l.b16 %v486
      %v828 = vunpack.c.l.b16 %v487
      %v829 = vunpack.c.l.b16 %v488
      %v830 = vunpack.c.l.b16 %v489
      %v831 = vunpack.c.l.b16 %v490
      %v832 = vunpack.c.l.b16 %v491
      %v833 = vunpack.c.l.b16 %v492
      %v834 = vpack.c.b16 %v819, %v818
      %v835 = vpack.c.b16 %v821, %v820
      %v836 = vpack.c.b16 %v823, %v822
      %v837 = vpack.c.b16 %v825, %v824
      %v838 = vpack.c.b16 %v827, %v826
      %v839 = vpack.c.b16 %v829, %v828
      %v840 = vpack.c.b16 %v831, %v830
      %v841 = vpack.c.b16 %v833, %v832
      %850 = vmatprep.subr.bf16.mxu0 0
      %851 = vmatpush1.bf16.msra.mxu0 %v834
      %852 = vmatprep.subr.bf16.mxu0 0
      %853 = vmatpush1.bf16.msra.mxu0 %v835
      %854 = vmatprep.subr.bf16.mxu0 0
      %855 = vmatpush1.bf16.msra.mxu0 %v836
      %856 = vmatprep.subr.bf16.mxu0 0
      %857 = vmatpush1.bf16.msra.mxu0 %v837
      %858 = vmatprep.subr.bf16.mxu0 0
      %859 = vmatpush1.bf16.msra.mxu0 %v838
      %860 = vmatprep.subr.bf16.mxu0 0
      %861 = vmatpush1.bf16.msra.mxu0 %v839
      %862 = vmatprep.subr.bf16.mxu0 0
      %863 = vmatpush1.bf16.msra.mxu0 %v840
      %864 = vmatprep.subr.bf16.mxu0 0
      %865 = vmatpush1.bf16.msra.mxu0 %v841
      %866 = vmatprep.subr.bf16.mxu0 0
      %867 = vmatpush1.bf16.msra.mxu0 0
      %868 = vmatprep.subr.bf16.mxu0 0
      %869 = vmatpush1.bf16.msra.mxu0 0
      %870 = vmatprep.subr.bf16.mxu0 0
      %871 = vmatpush1.bf16.msra.mxu0 0
      %872 = vmatprep.subr.bf16.mxu0 0
      %873 = vmatpush1.bf16.msra.mxu0 0
      %874 = vmatprep.subr.bf16.mxu0 0
      %875 = vmatpush1.bf16.msra.mxu0 0
      %876 = vmatprep.subr.bf16.mxu0 0
      %877 = vmatpush1.bf16.msra.mxu0 0
      %878 = vmatprep.subr.bf16.mxu0 0
      %879 = vmatpush1.bf16.msra.mxu0 0
      %880 = vmatprep.subr.bf16.mxu0 0
      %881 = vmatpush1.bf16.msra.mxu0 0
      %882 = vmatprep.mubr.bf16.mxu0 0
      %883 = vmatmul.mubr.bf16.gmra.mrb[0].mxu0 %v794
      %v884 = vpop.f32.mrb[0].mxu0
      %v885 = vadd.f32 %v764, %v884
      %v886 = vpop.f32.mrb[0].mxu0
      %v887 = vpop.f32.mrb[0].mxu0
      %v888 = vadd.f32 %v767, %v887
      %v889 = vpop.f32.mrb[0].mxu0
      %890 = vmatprep.mubr.bf16.mxu0 0
      %891 = vmatmul.mubr.bf16.gmra.mrb[0].mxu0 %v795
      %v892 = vpop.f32.mrb[0].mxu0
      %v893 = vadd.f32 %v772, %v892
      %v894 = vpop.f32.mrb[0].mxu0
      %v895 = vpop.f32.mrb[0].mxu0
      %v896 = vadd.f32 %v775, %v895
      %v897 = vpop.f32.mrb[0].mxu0
      %898 = vmatprep.mubr.bf16.mxu0 0
      %899 = vmatmul.mubr.bf16.gmra.mrb[0].mxu0 %v796
      %v900 = vpop.f32.mrb[0].mxu0
      %v901 = vadd.f32 %v780, %v900
      %v902 = vpop.f32.mrb[0].mxu0
      %v903 = vpop.f32.mrb[0].mxu0
      %v904 = vadd.f32 %v783, %v903
      %v905 = vpop.f32.mrb[0].mxu0
      %906 = vmatprep.mubr.bf16.mxu0 0
      %907 = vmatmul.mubr.bf16.gmra.mrb[0].mxu0 %v797
      %v908 = vpop.f32.mrb[0].mxu0
      %v909 = vadd.f32 %v788, %v908
      %v910 = vpop.f32.mrb[0].mxu0
      %v911 = vpop.f32.mrb[0].mxu0
      %v912 = vadd.f32 %v791, %v911
      %v913 = vpop.f32.mrb[0].mxu0
      %914 = vdwg.mxu0
      %vm915 = vcmask 1042432
      %vm916 = vcmask 1046532
      %vm917 = vmor %vm915, %vm916
      %v918 = vrot.slane %v517, 5
      %v919 = vrot.slane %v918, 4
      %v920 = vrot.slane %v518, 5
      %v921 = vsel %vm917, %v919, %v920
      %v922 = vrot.slane %v519, 5
      %v923 = vrot.slane %v922, 4
      %v924 = vrot.slane %v520, 5
      %v925 = vsel %vm917, %v923, %v924
      %v926 = vrot.slane %v521, 5
      %v927 = vrot.slane %v926, 4
      %v928 = vrot.slane %v522, 5
      %v929 = vsel %vm917, %v927, %v928
      %v930 = vrot.slane %v523, 5
      %v931 = vrot.slane %v930, 4
      %v932 = vrot.slane %v524, 5
      %v933 = vsel %vm917, %v931, %v932
      %v934 = vrot.slane %v525, 5
      %v935 = vrot.slane %v934, 4
      %v936 = vrot.slane %v526, 5
      %v937 = vsel %vm917, %v935, %v936
      %v938 = vrot.slane %v527, 5
      %v939 = vrot.slane %v938, 4
      %v940 = vrot.slane %v528, 5
      %v941 = vsel %vm917, %v939, %v940
      %v942 = vrot.slane %v529, 5
      %v943 = vrot.slane %v942, 4
      %v944 = vrot.slane %v530, 5
      %v945 = vsel %vm917, %v943, %v944
      %v946 = vrot.slane %v531, 5
      %v947 = vrot.slane %v946, 4
      %v948 = vrot.slane %v532, 5
      %v949 = vsel %vm917, %v947, %v948
      %s950 = scalar_lea.vmem %s324, 128
      %v951 = vld [vmem:[%s950] sm:$0xf]
      %v952 = vld [vmem:[%s950 + $0x4] sm:$0xf]
      %v953 = vld [vmem:[%s950 + $0x8] sm:$0xf]
      %v954 = vld [vmem:[%s950 + $0xc] sm:$0xf]
      %v955 = vld [vmem:[%s950 + $0x10] sm:$0xf]
      %v956 = vld [vmem:[%s950 + $0x14] sm:$0xf]
      %v957 = vld [vmem:[%s950 + $0x18] sm:$0xf]
      %v958 = vld [vmem:[%s950 + $0x1c] sm:$0xf]
      %v959 = vld [vmem:[%s950 + $0x20] sm:$0xf]
      %v960 = vld [vmem:[%s950 + $0x24] sm:$0xf]
      %v961 = vld [vmem:[%s950 + $0x28] sm:$0xf]
      %v962 = vld [vmem:[%s950 + $0x2c] sm:$0xf]
      %v963 = vld [vmem:[%s950 + $0x30] sm:$0xf]
      %v964 = vld [vmem:[%s950 + $0x34] sm:$0xf]
      %v965 = vld [vmem:[%s950 + $0x38] sm:$0xf]
      %v966 = vld [vmem:[%s950 + $0x3c] sm:$0xf]
      %v967 = vunpack.c.l.b16 %v921
      %v968 = vunpack.c.l.b16 %v925
      %v969 = vunpack.c.l.b16 %v929
      %v970 = vunpack.c.l.b16 %v933
      %v971 = vunpack.c.l.b16 %v937
      %v972 = vunpack.c.l.b16 %v941
      %v973 = vunpack.c.l.b16 %v945
      %v974 = vunpack.c.l.b16 %v949
      %v975 = vpack.c.b16 %v968, %v967
      %v976 = vpack.c.b16 %v970, %v969
      %v977 = vpack.c.b16 %v972, %v971
      %v978 = vpack.c.b16 %v974, %v973
      %v999 = vunpack.c.l.b16 %v951
      %v1000 = vunpack.c.l.b16 %v952
      %v1001 = vunpack.c.l.b16 %v953
      %v1002 = vunpack.c.l.b16 %v954
      %v1003 = vunpack.c.l.b16 %v955
      %v1004 = vunpack.c.l.b16 %v956
      %v1005 = vunpack.c.l.b16 %v957
      %v1006 = vunpack.c.l.b16 %v958
      %v1007 = vunpack.c.l.b16 %v959
      %v1008 = vunpack.c.l.b16 %v960
      %v1009 = vunpack.c.l.b16 %v961
      %v1010 = vunpack.c.l.b16 %v962
      %v1011 = vunpack.c.l.b16 %v963
      %v1012 = vunpack.c.l.b16 %v964
      %v1013 = vunpack.c.l.b16 %v965
      %v1014 = vunpack.c.l.b16 %v966
      %v1015 = vpack.c.b16 %v1000, %v999
      %v1016 = vpack.c.b16 %v1002, %v1001
      %v1017 = vpack.c.b16 %v1004, %v1003
      %v1018 = vpack.c.b16 %v1006, %v1005
      %v1019 = vpack.c.b16 %v1008, %v1007
      %v1020 = vpack.c.b16 %v1010, %v1009
      %v1021 = vpack.c.b16 %v1012, %v1011
      %v1022 = vpack.c.b16 %v1014, %v1013
      %1031 = vmatprep.subr.bf16.mxu0 0
      %1032 = vmatpush1.bf16.msra.mxu0 %v1015
      %1033 = vmatprep.subr.bf16.mxu0 0
      %1034 = vmatpush1.bf16.msra.mxu0 %v1016
      %1035 = vmatprep.subr.bf16.mxu0 0
      %1036 = vmatpush1.bf16.msra.mxu0 %v1017
      %1037 = vmatprep.subr.bf16.mxu0 0
      %1038 = vmatpush1.bf16.msra.mxu0 %v1018
      %1039 = vmatprep.subr.bf16.mxu0 0
      %1040 = vmatpush1.bf16.msra.mxu0 %v1019
      %1041 = vmatprep.subr.bf16.mxu0 0
      %1042 = vmatpush1.bf16.msra.mxu0 %v1020
      %1043 = vmatprep.subr.bf16.mxu0 0
      %1044 = vmatpush1.bf16.msra.mxu0 %v1021
      %1045 = vmatprep.subr.bf16.mxu0 0
      %1046 = vmatpush1.bf16.msra.mxu0 %v1022
      %1047 = vmatprep.subr.bf16.mxu0 0
      %1048 = vmatpush1.bf16.msra.mxu0 0
      %1049 = vmatprep.subr.bf16.mxu0 0
      %1050 = vmatpush1.bf16.msra.mxu0 0
      %1051 = vmatprep.subr.bf16.mxu0 0
      %1052 = vmatpush1.bf16.msra.mxu0 0
      %1053 = vmatprep.subr.bf16.mxu0 0
      %1054 = vmatpush1.bf16.msra.mxu0 0
      %1055 = vmatprep.subr.bf16.mxu0 0
      %1056 = vmatpush1.bf16.msra.mxu0 0
      %1057 = vmatprep.subr.bf16.mxu0 0
      %1058 = vmatpush1.bf16.msra.mxu0 0
      %1059 = vmatprep.subr.bf16.mxu0 0
      %1060 = vmatpush1.bf16.msra.mxu0 0
      %1061 = vmatprep.subr.bf16.mxu0 0
      %1062 = vmatpush1.bf16.msra.mxu0 0
      %1063 = vmatprep.mubr.bf16.mxu0 0
      %1064 = vmatmul.mubr.bf16.gmra.mrb[0].mxu0 %v975
      %v1065 = vpop.f32.mrb[0].mxu0
      %v1066 = vadd.f32 0.0, %v1065
      %v1067 = vpop.f32.mrb[0].mxu0
      %v1068 = vpop.f32.mrb[0].mxu0
      %v1069 = vadd.f32 0.0, %v1068
      %v1070 = vpop.f32.mrb[0].mxu0
      %1071 = vmatprep.mubr.bf16.mxu0 0
      %1072 = vmatmul.mubr.bf16.gmra.mrb[0].mxu0 %v976
      %v1073 = vpop.f32.mrb[0].mxu0
      %v1074 = vadd.f32 0.0, %v1073
      %v1075 = vpop.f32.mrb[0].mxu0
      %v1076 = vpop.f32.mrb[0].mxu0
      %v1077 = vadd.f32 0.0, %v1076
      %v1078 = vpop.f32.mrb[0].mxu0
      %1079 = vmatprep.mubr.bf16.mxu0 0
      %1080 = vmatmul.mubr.bf16.gmra.mrb[0].mxu0 %v977
      %v1081 = vpop.f32.mrb[0].mxu0
      %v1082 = vadd.f32 0.0, %v1081
      %v1083 = vpop.f32.mrb[0].mxu0
      %v1084 = vpop.f32.mrb[0].mxu0
      %v1085 = vadd.f32 0.0, %v1084
      %v1086 = vpop.f32.mrb[0].mxu0
      %1087 = vmatprep.mubr.bf16.mxu0 0
      %1088 = vmatmul.mubr.bf16.gmra.mrb[0].mxu0 %v978
      %v1089 = vpop.f32.mrb[0].mxu0
      %v1090 = vadd.f32 0.0, %v1089
      %v1091 = vpop.f32.mrb[0].mxu0
      %v1092 = vpop.f32.mrb[0].mxu0
      %v1093 = vadd.f32 0.0, %v1092
      %v1094 = vpop.f32.mrb[0].mxu0
      %1095 = vdwg.mxu0
      %v1096 = vadd.f32 %v885, %v1066
      %v1097 = vadd.f32 %v888, %v1069
      %v1098 = vadd.f32 %v893, %v1074
      %v1099 = vadd.f32 %v896, %v1077
      %v1100 = vadd.f32 %v901, %v1082
      %v1101 = vadd.f32 %v904, %v1085
      %v1102 = vadd.f32 %v909, %v1090
      %v1103 = vadd.f32 %v912, %v1093
      %s1104 = scalar_lea.vmem %s324, 192
      %v1105 = vld [vmem:[%s1104] sm:$0xf]
      %v1106 = vld [vmem:[%s1104 + $0x4] sm:$0xf]
      %v1107 = vld [vmem:[%s1104 + $0x8] sm:$0xf]
      %v1108 = vld [vmem:[%s1104 + $0xc] sm:$0xf]
      %v1109 = vld [vmem:[%s1104 + $0x10] sm:$0xf]
      %v1110 = vld [vmem:[%s1104 + $0x14] sm:$0xf]
      %v1111 = vld [vmem:[%s1104 + $0x18] sm:$0xf]
      %v1112 = vld [vmem:[%s1104 + $0x1c] sm:$0xf]
      %v1113 = vld [vmem:[%s1104 + $0x20] sm:$0xf]
      %v1114 = vld [vmem:[%s1104 + $0x24] sm:$0xf]
      %v1115 = vld [vmem:[%s1104 + $0x28] sm:$0xf]
      %v1116 = vld [vmem:[%s1104 + $0x2c] sm:$0xf]
      %v1117 = vld [vmem:[%s1104 + $0x30] sm:$0xf]
      %v1118 = vld [vmem:[%s1104 + $0x34] sm:$0xf]
      %v1119 = vld [vmem:[%s1104 + $0x38] sm:$0xf]
      %v1120 = vld [vmem:[%s1104 + $0x3c] sm:$0xf]
      %v1122 = vunpack.c.l.b16 %v475
      %v1123 = vpack.c.b16 %v505, %v503
      %v1124 = vpack.c.b16 %v509, %v507
      %v1125 = vpack.c.b16 %v513, %v511
      %v1126 = vpack.c.b16 %v1122, %v515
      %v1147 = vunpack.c.l.b16 %v1105
      %v1148 = vunpack.c.l.b16 %v1106
      %v1149 = vunpack.c.l.b16 %v1107
      %v1150 = vunpack.c.l.b16 %v1108
      %v1151 = vunpack.c.l.b16 %v1109
      %v1152 = vunpack.c.l.b16 %v1110
      %v1153 = vunpack.c.l.b16 %v1111
      %v1154 = vunpack.c.l.b16 %v1112
      %v1155 = vunpack.c.l.b16 %v1113
      %v1156 = vunpack.c.l.b16 %v1114
      %v1157 = vunpack.c.l.b16 %v1115
      %v1158 = vunpack.c.l.b16 %v1116
      %v1159 = vunpack.c.l.b16 %v1117
      %v1160 = vunpack.c.l.b16 %v1118
      %v1161 = vunpack.c.l.b16 %v1119
      %v1162 = vunpack.c.l.b16 %v1120
      %v1163 = vpack.c.b16 %v1148, %v1147
      %v1164 = vpack.c.b16 %v1150, %v1149
      %v1165 = vpack.c.b16 %v1152, %v1151
      %v1166 = vpack.c.b16 %v1154, %v1153
      %v1167 = vpack.c.b16 %v1156, %v1155
      %v1168 = vpack.c.b16 %v1158, %v1157
      %v1169 = vpack.c.b16 %v1160, %v1159
      %v1170 = vpack.c.b16 %v1162, %v1161
      %1179 = vmatprep.subr.bf16.mxu0 0
      %1180 = vmatpush1.bf16.msra.mxu0 %v1163
      %1181 = vmatprep.subr.bf16.mxu0 0
      %1182 = vmatpush1.bf16.msra.mxu0 %v1164
      %1183 = vmatprep.subr.bf16.mxu0 0
      %1184 = vmatpush1.bf16.msra.mxu0 %v1165
      %1185 = vmatprep.subr.bf16.mxu0 0
      %1186 = vmatpush1.bf16.msra.mxu0 %v1166
      %1187 = vmatprep.subr.bf16.mxu0 0
      %1188 = vmatpush1.bf16.msra.mxu0 %v1167
      %1189 = vmatprep.subr.bf16.mxu0 0
      %1190 = vmatpush1.bf16.msra.mxu0 %v1168
      %1191 = vmatprep.subr.bf16.mxu0 0
      %1192 = vmatpush1.bf16.msra.mxu0 %v1169
      %1193 = vmatprep.subr.bf16.mxu0 0
      %1194 = vmatpush1.bf16.msra.mxu0 %v1170
      %1195 = vmatprep.subr.bf16.mxu0 0
      %1196 = vmatpush1.bf16.msra.mxu0 0
      %1197 = vmatprep.subr.bf16.mxu0 0
      %1198 = vmatpush1.bf16.msra.mxu0 0
      %1199 = vmatprep.subr.bf16.mxu0 0
      %1200 = vmatpush1.bf16.msra.mxu0 0
      %1201 = vmatprep.subr.bf16.mxu0 0
      %1202 = vmatpush1.bf16.msra.mxu0 0
      %1203 = vmatprep.subr.bf16.mxu0 0
      %1204 = vmatpush1.bf16.msra.mxu0 0
      %1205 = vmatprep.subr.bf16.mxu0 0
      %1206 = vmatpush1.bf16.msra.mxu0 0
      %1207 = vmatprep.subr.bf16.mxu0 0
      %1208 = vmatpush1.bf16.msra.mxu0 0
      %1209 = vmatprep.subr.bf16.mxu0 0
      %1210 = vmatpush1.bf16.msra.mxu0 0
      %1211 = vmatprep.mubr.bf16.mxu0 0
      %1212 = vmatmul.mubr.bf16.gmra.mrb[0].mxu0 %v1123
      %v1213 = vpop.f32.mrb[0].mxu0
      %v1214 = vadd.f32 0.0, %v1213
      %v1215 = vpop.f32.mrb[0].mxu0
      %v1216 = vpop.f32.mrb[0].mxu0
      %v1217 = vadd.f32 0.0, %v1216
      %v1218 = vpop.f32.mrb[0].mxu0
      %1219 = vmatprep.mubr.bf16.mxu0 0
      %1220 = vmatmul.mubr.bf16.gmra.mrb[0].mxu0 %v1124
      %v1221 = vpop.f32.mrb[0].mxu0
      %v1222 = vadd.f32 0.0, %v1221
      %v1223 = vpop.f32.mrb[0].mxu0
      %v1224 = vpop.f32.mrb[0].mxu0
      %v1225 = vadd.f32 0.0, %v1224
      %v1226 = vpop.f32.mrb[0].mxu0
      %1227 = vmatprep.mubr.bf16.mxu0 0
      %1228 = vmatmul.mubr.bf16.gmra.mrb[0].mxu0 %v1125
      %v1229 = vpop.f32.mrb[0].mxu0
      %v1230 = vadd.f32 0.0, %v1229
      %v1231 = vpop.f32.mrb[0].mxu0
      %v1232 = vpop.f32.mrb[0].mxu0
      %v1233 = vadd.f32 0.0, %v1232
      %v1234 = vpop.f32.mrb[0].mxu0
      %1235 = vmatprep.mubr.bf16.mxu0 0
      %1236 = vmatmul.mubr.bf16.gmra.mrb[0].mxu0 %v1126
      %v1237 = vpop.f32.mrb[0].mxu0
      %v1238 = vadd.f32 0.0, %v1237
      %v1239 = vpop.f32.mrb[0].mxu0
      %v1240 = vpop.f32.mrb[0].mxu0
      %v1241 = vadd.f32 0.0, %v1240
      %v1242 = vpop.f32.mrb[0].mxu0
      %1243 = vdwg.mxu0
      %v1244 = vadd.f32 %v1096, %v1214
      %v1245 = vadd.f32 %v1097, %v1217
      %v1246 = vadd.f32 %v1098, %v1222
      %v1247 = vadd.f32 %v1099, %v1225
      %v1248 = vadd.f32 %v1100, %v1230
      %v1249 = vadd.f32 %v1101, %v1233
      %v1250 = vadd.f32 %v1102, %v1238
      %v1251 = vadd.f32 %v1103, %v1241
      %v1252 = vunpack.c.h.b16 %v475
      %v1253 = vpack.c.b16 %v1122, %v1122
      %v1254 = vpack.c.b16 %v1252, %v1252
      %v1256 = vshrl.u32 %v1253, 16
      %v1258 = vrot.slane %v1256, 4
      %v1259 = vshll.u32 %v1253, 16
      %v1261 = vrot.slane %v1259, 5
      %v1262 = vor.u32 %v1258, %v1261
      %v1263 = vrot.slane %v1262, 4
      %v1265 = vshll.u32 %v1254, 16
      %v1267 = vrot.slane %v1265, 5
      %v1268 = vsel %vm535, %v1263, %v1267
      %s1269 = scalar_lea.vmem %s324, 256
      %v1270 = vld [vmem:[%s1269] sm:$0xf]
      %v1271 = vld [vmem:[%s1269 + $0x4] sm:$0xf]
      %v1272 = vld [vmem:[%s1269 + $0x8] sm:$0xf]
      %v1273 = vld [vmem:[%s1269 + $0xc] sm:$0xf]
      %v1274 = vld [vmem:[%s1269 + $0x10] sm:$0xf]
      %v1275 = vld [vmem:[%s1269 + $0x14] sm:$0xf]
      %v1276 = vld [vmem:[%s1269 + $0x18] sm:$0xf]
      %v1277 = vld [vmem:[%s1269 + $0x1c] sm:$0xf]
      %v1278 = vld [vmem:[%s1269 + $0x20] sm:$0xf]
      %v1279 = vld [vmem:[%s1269 + $0x24] sm:$0xf]
      %v1280 = vld [vmem:[%s1269 + $0x28] sm:$0xf]
      %v1281 = vld [vmem:[%s1269 + $0x2c] sm:$0xf]
      %v1282 = vld [vmem:[%s1269 + $0x30] sm:$0xf]
      %v1283 = vld [vmem:[%s1269 + $0x34] sm:$0xf]
      %v1284 = vld [vmem:[%s1269 + $0x38] sm:$0xf]
      %v1285 = vld [vmem:[%s1269 + $0x3c] sm:$0xf]
      %v1286 = vunpack.c.l.b16 %v1268
      %v1287 = vpack.c.b16 %v667, %v666
      %v1288 = vpack.c.b16 %v669, %v668
      %v1289 = vpack.c.b16 %v671, %v670
      %v1290 = vpack.c.b16 %v1286, %v672
      %v1311 = vunpack.c.l.b16 %v1270
      %v1312 = vunpack.c.l.b16 %v1271
      %v1313 = vunpack.c.l.b16 %v1272
      %v1314 = vunpack.c.l.b16 %v1273
      %v1315 = vunpack.c.l.b16 %v1274
      %v1316 = vunpack.c.l.b16 %v1275
      %v1317 = vunpack.c.l.b16 %v1276
      %v1318 = vunpack.c.l.b16 %v1277
      %v1319 = vunpack.c.l.b16 %v1278
      %v1320 = vunpack.c.l.b16 %v1279
      %v1321 = vunpack.c.l.b16 %v1280
      %v1322 = vunpack.c.l.b16 %v1281
      %v1323 = vunpack.c.l.b16 %v1282
      %v1324 = vunpack.c.l.b16 %v1283
      %v1325 = vunpack.c.l.b16 %v1284
      %v1326 = vunpack.c.l.b16 %v1285
      %v1327 = vpack.c.b16 %v1312, %v1311
      %v1328 = vpack.c.b16 %v1314, %v1313
      %v1329 = vpack.c.b16 %v1316, %v1315
      %v1330 = vpack.c.b16 %v1318, %v1317
      %v1331 = vpack.c.b16 %v1320, %v1319
      %v1332 = vpack.c.b16 %v1322, %v1321
      %v1333 = vpack.c.b16 %v1324, %v1323
      %v1334 = vpack.c.b16 %v1326, %v1325
      %1343 = vmatprep.subr.bf16.mxu0 0
      %1344 = vmatpush1.bf16.msra.mxu0 %v1327
      %1345 = vmatprep.subr.bf16.mxu0 0
      %1346 = vmatpush1.bf16.msra.mxu0 %v1328
      %1347 = vmatprep.subr.bf16.mxu0 0
      %1348 = vmatpush1.bf16.msra.mxu0 %v1329
      %1349 = vmatprep.subr.bf16.mxu0 0
      %1350 = vmatpush1.bf16.msra.mxu0 %v1330
      %1351 = vmatprep.subr.bf16.mxu0 0
      %1352 = vmatpush1.bf16.msra.mxu0 %v1331
      %1353 = vmatprep.subr.bf16.mxu0 0
      %1354 = vmatpush1.bf16.msra.mxu0 %v1332
      %1355 = vmatprep.subr.bf16.mxu0 0
      %1356 = vmatpush1.bf16.msra.mxu0 %v1333
      %1357 = vmatprep.subr.bf16.mxu0 0
      %1358 = vmatpush1.bf16.msra.mxu0 %v1334
      %1359 = vmatprep.subr.bf16.mxu0 0
      %1360 = vmatpush1.bf16.msra.mxu0 0
      %1361 = vmatprep.subr.bf16.mxu0 0
      %1362 = vmatpush1.bf16.msra.mxu0 0
      %1363 = vmatprep.subr.bf16.mxu0 0
      %1364 = vmatpush1.bf16.msra.mxu0 0
      %1365 = vmatprep.subr.bf16.mxu0 0
      %1366 = vmatpush1.bf16.msra.mxu0 0
      %1367 = vmatprep.subr.bf16.mxu0 0
      %1368 = vmatpush1.bf16.msra.mxu0 0
      %1369 = vmatprep.subr.bf16.mxu0 0
      %1370 = vmatpush1.bf16.msra.mxu0 0
      %1371 = vmatprep.subr.bf16.mxu0 0
      %1372 = vmatpush1.bf16.msra.mxu0 0
      %1373 = vmatprep.subr.bf16.mxu0 0
      %1374 = vmatpush1.bf16.msra.mxu0 0
      %1375 = vmatprep.mubr.bf16.mxu0 0
      %1376 = vmatmul.mubr.bf16.gmra.mrb[0].mxu0 %v1287
      %v1377 = vpop.f32.mrb[0].mxu0
      %v1378 = vadd.f32 0.0, %v1377
      %v1379 = vpop.f32.mrb[0].mxu0
      %v1380 = vpop.f32.mrb[0].mxu0
      %v1381 = vadd.f32 0.0, %v1380
      %v1382 = vpop.f32.mrb[0].mxu0
      %1383 = vmatprep.mubr.bf16.mxu0 0
      %1384 = vmatmul.mubr.bf16.gmra.mrb[0].mxu0 %v1288
      %v1385 = vpop.f32.mrb[0].mxu0
      %v1386 = vadd.f32 0.0, %v1385
      %v1387 = vpop.f32.mrb[0].mxu0
      %v1388 = vpop.f32.mrb[0].mxu0
      %v1389 = vadd.f32 0.0, %v1388
      %v1390 = vpop.f32.mrb[0].mxu0
      %1391 = vmatprep.mubr.bf16.mxu0 0
      %1392 = vmatmul.mubr.bf16.gmra.mrb[0].mxu0 %v1289
      %v1393 = vpop.f32.mrb[0].mxu0
      %v1394 = vadd.f32 0.0, %v1393
      %v1395 = vpop.f32.mrb[0].mxu0
      %v1396 = vpop.f32.mrb[0].mxu0
      %v1397 = vadd.f32 0.0, %v1396
      %v1398 = vpop.f32.mrb[0].mxu0
      %1399 = vmatprep.mubr.bf16.mxu0 0
      %1400 = vmatmul.mubr.bf16.gmra.mrb[0].mxu0 %v1290
      %v1401 = vpop.f32.mrb[0].mxu0
      %v1402 = vadd.f32 0.0, %v1401
      %v1403 = vpop.f32.mrb[0].mxu0
      %v1404 = vpop.f32.mrb[0].mxu0
      %v1405 = vadd.f32 0.0, %v1404
      %v1406 = vpop.f32.mrb[0].mxu0
      %1407 = vdwg.mxu0
      %v1408 = vadd.f32 %v1244, %v1378
      %v1409 = vadd.f32 %v1245, %v1381
      %v1410 = vadd.f32 %v1246, %v1386
      %v1411 = vadd.f32 %v1247, %v1389
      %v1412 = vadd.f32 %v1248, %v1394
      %v1413 = vadd.f32 %v1249, %v1397
      %v1414 = vadd.f32 %v1250, %v1402
      %v1415 = vadd.f32 %v1251, %v1405
      %v1416 = vrot.slane %v1253, 5
      %v1417 = vrot.slane %v1416, 4
      %v1418 = vrot.slane %v1254, 5
      %v1419 = vsel %vm917, %v1417, %v1418
      %s1420 = scalar_lea.vmem %s324, 320
      %v1421 = vld [vmem:[%s1420] sm:$0xf]
      %v1422 = vld [vmem:[%s1420 + $0x4] sm:$0xf]
      %v1423 = vld [vmem:[%s1420 + $0x8] sm:$0xf]
      %v1424 = vld [vmem:[%s1420 + $0xc] sm:$0xf]
      %v1425 = vld [vmem:[%s1420 + $0x10] sm:$0xf]
      %v1426 = vld [vmem:[%s1420 + $0x14] sm:$0xf]
      %v1427 = vld [vmem:[%s1420 + $0x18] sm:$0xf]
      %v1428 = vld [vmem:[%s1420 + $0x1c] sm:$0xf]
      %v1429 = vld [vmem:[%s1420 + $0x20] sm:$0xf]
      %v1430 = vld [vmem:[%s1420 + $0x24] sm:$0xf]
      %v1431 = vld [vmem:[%s1420 + $0x28] sm:$0xf]
      %v1432 = vld [vmem:[%s1420 + $0x2c] sm:$0xf]
      %v1433 = vld [vmem:[%s1420 + $0x30] sm:$0xf]
      %v1434 = vld [vmem:[%s1420 + $0x34] sm:$0xf]
      %v1435 = vld [vmem:[%s1420 + $0x38] sm:$0xf]
      %v1436 = vld [vmem:[%s1420 + $0x3c] sm:$0xf]
      %v1437 = vunpack.c.l.b16 %v1419
      %v1438 = vpack.c.b16 %v969, %v968
      %v1439 = vpack.c.b16 %v971, %v970
      %v1440 = vpack.c.b16 %v973, %v972
      %v1441 = vpack.c.b16 %v1437, %v974
      %v1462 = vunpack.c.l.b16 %v1421
      %v1463 = vunpack.c.l.b16 %v1422
      %v1464 = vunpack.c.l.b16 %v1423
      %v1465 = vunpack.c.l.b16 %v1424
      %v1466 = vunpack.c.l.b16 %v1425
      %v1467 = vunpack.c.l.b16 %v1426
      %v1468 = vunpack.c.l.b16 %v1427
      %v1469 = vunpack.c.l.b16 %v1428
      %v1470 = vunpack.c.l.b16 %v1429
      %v1471 = vunpack.c.l.b16 %v1430
      %v1472 = vunpack.c.l.b16 %v1431
      %v1473 = vunpack.c.l.b16 %v1432
      %v1474 = vunpack.c.l.b16 %v1433
      %v1475 = vunpack.c.l.b16 %v1434
      %v1476 = vunpack.c.l.b16 %v1435
      %v1477 = vunpack.c.l.b16 %v1436
      %v1478 = vpack.c.b16 %v1463, %v1462
      %v1479 = vpack.c.b16 %v1465, %v1464
      %v1480 = vpack.c.b16 %v1467, %v1466
      %v1481 = vpack.c.b16 %v1469, %v1468
      %v1482 = vpack.c.b16 %v1471, %v1470
      %v1483 = vpack.c.b16 %v1473, %v1472
      %v1484 = vpack.c.b16 %v1475, %v1474
      %v1485 = vpack.c.b16 %v1477, %v1476
      %1494 = vmatprep.subr.bf16.mxu0 0
      %1495 = vmatpush1.bf16.msra.mxu0 %v1478
      %1496 = vmatprep.subr.bf16.mxu0 0
      %1497 = vmatpush1.bf16.msra.mxu0 %v1479
      %1498 = vmatprep.subr.bf16.mxu0 0
      %1499 = vmatpush1.bf16.msra.mxu0 %v1480
      %1500 = vmatprep.subr.bf16.mxu0 0
      %1501 = vmatpush1.bf16.msra.mxu0 %v1481
      %1502 = vmatprep.subr.bf16.mxu0 0
      %1503 = vmatpush1.bf16.msra.mxu0 %v1482
      %1504 = vmatprep.subr.bf16.mxu0 0
      %1505 = vmatpush1.bf16.msra.mxu0 %v1483
      %1506 = vmatprep.subr.bf16.mxu0 0
      %1507 = vmatpush1.bf16.msra.mxu0 %v1484
      %1508 = vmatprep.subr.bf16.mxu0 0
      %1509 = vmatpush1.bf16.msra.mxu0 %v1485
      %1510 = vmatprep.subr.bf16.mxu0 0
      %1511 = vmatpush1.bf16.msra.mxu0 0
      %1512 = vmatprep.subr.bf16.mxu0 0
      %1513 = vmatpush1.bf16.msra.mxu0 0
      %1514 = vmatprep.subr.bf16.mxu0 0
      %1515 = vmatpush1.bf16.msra.mxu0 0
      %1516 = vmatprep.subr.bf16.mxu0 0
      %1517 = vmatpush1.bf16.msra.mxu0 0
      %1518 = vmatprep.subr.bf16.mxu0 0
      %1519 = vmatpush1.bf16.msra.mxu0 0
      %1520 = vmatprep.subr.bf16.mxu0 0
      %1521 = vmatpush1.bf16.msra.mxu0 0
      %1522 = vmatprep.subr.bf16.mxu0 0
      %1523 = vmatpush1.bf16.msra.mxu0 0
      %1524 = vmatprep.subr.bf16.mxu0 0
      %1525 = vmatpush1.bf16.msra.mxu0 0
      %1526 = vmatprep.mubr.bf16.mxu0 0
      %1527 = vmatmul.mubr.bf16.gmra.mrb[0].mxu0 %v1438
      %v1528 = vpop.f32.mrb[0].mxu0
      %v1529 = vadd.f32 0.0, %v1528
      %v1530 = vpop.f32.mrb[0].mxu0
      %v1531 = vpop.f32.mrb[0].mxu0
      %v1532 = vadd.f32 0.0, %v1531
      %v1533 = vpop.f32.mrb[0].mxu0
      %1534 = vmatprep.mubr.bf16.mxu0 0
      %1535 = vmatmul.mubr.bf16.gmra.mrb[0].mxu0 %v1439
      %v1536 = vpop.f32.mrb[0].mxu0
      %v1537 = vadd.f32 0.0, %v1536
      %v1538 = vpop.f32.mrb[0].mxu0
      %v1539 = vpop.f32.mrb[0].mxu0
      %v1540 = vadd.f32 0.0, %v1539
      %v1541 = vpop.f32.mrb[0].mxu0
      %1542 = vmatprep.mubr.bf16.mxu0 0
      %1543 = vmatmul.mubr.bf16.gmra.mrb[0].mxu0 %v1440
      %v1544 = vpop.f32.mrb[0].mxu0
      %v1545 = vadd.f32 0.0, %v1544
      %v1546 = vpop.f32.mrb[0].mxu0
      %v1547 = vpop.f32.mrb[0].mxu0
      %v1548 = vadd.f32 0.0, %v1547
      %v1549 = vpop.f32.mrb[0].mxu0
      %1550 = vmatprep.mubr.bf16.mxu0 0
      %1551 = vmatmul.mubr.bf16.gmra.mrb[0].mxu0 %v1441
      %v1552 = vpop.f32.mrb[0].mxu0
      %v1553 = vadd.f32 0.0, %v1552
      %v1554 = vpop.f32.mrb[0].mxu0
      %v1555 = vpop.f32.mrb[0].mxu0
      %v1556 = vadd.f32 0.0, %v1555
      %v1557 = vpop.f32.mrb[0].mxu0
      %1558 = vdwg.mxu0
      %v1559 = vadd.f32 %v1408, %v1529
      %v1560 = vadd.f32 %v1409, %v1532
      %v1561 = vadd.f32 %v1410, %v1537
      %v1562 = vadd.f32 %v1411, %v1540
      %v1563 = vadd.f32 %v1412, %v1545
      %v1564 = vadd.f32 %v1413, %v1548
      %v1565 = vadd.f32 %v1414, %v1553
      %v1566 = vadd.f32 %v1415, %v1556
      %s1567 = scalar_lea.vmem %s324, 384
      %v1568 = vld [vmem:[%s1567] sm:$0xf]
      %v1569 = vld [vmem:[%s1567 + $0x4] sm:$0xf]
      %v1570 = vld [vmem:[%s1567 + $0x8] sm:$0xf]
      %v1571 = vld [vmem:[%s1567 + $0xc] sm:$0xf]
      %v1572 = vld [vmem:[%s1567 + $0x10] sm:$0xf]
      %v1573 = vld [vmem:[%s1567 + $0x14] sm:$0xf]
      %v1574 = vld [vmem:[%s1567 + $0x18] sm:$0xf]
      %v1575 = vld [vmem:[%s1567 + $0x1c] sm:$0xf]
      %v1576 = vld [vmem:[%s1567 + $0x20] sm:$0xf]
      %v1577 = vld [vmem:[%s1567 + $0x24] sm:$0xf]
      %v1578 = vld [vmem:[%s1567 + $0x28] sm:$0xf]
      %v1579 = vld [vmem:[%s1567 + $0x2c] sm:$0xf]
      %v1580 = vld [vmem:[%s1567 + $0x30] sm:$0xf]
      %v1581 = vld [vmem:[%s1567 + $0x34] sm:$0xf]
      %v1582 = vld [vmem:[%s1567 + $0x38] sm:$0xf]
      %v1583 = vld [vmem:[%s1567 + $0x3c] sm:$0xf]
      %v1585 = vunpack.c.l.b16 %v476
      %v1586 = vpack.c.b16 %v1585, %v1122
      %v1604 = vunpack.c.l.b16 %v1568
      %v1605 = vunpack.c.l.b16 %v1569
      %v1606 = vunpack.c.l.b16 %v1570
      %v1607 = vunpack.c.l.b16 %v1571
      %v1608 = vunpack.c.l.b16 %v1572
      %v1609 = vunpack.c.l.b16 %v1573
      %v1610 = vunpack.c.l.b16 %v1574
      %v1611 = vunpack.c.l.b16 %v1575
      %v1612 = vunpack.c.l.b16 %v1576
      %v1613 = vunpack.c.l.b16 %v1577
      %v1614 = vunpack.c.l.b16 %v1578
      %v1615 = vunpack.c.l.b16 %v1579
      %v1616 = vunpack.c.l.b16 %v1580
      %v1617 = vunpack.c.l.b16 %v1581
      %v1618 = vunpack.c.l.b16 %v1582
      %v1619 = vunpack.c.l.b16 %v1583
      %v1620 = vpack.c.b16 %v1605, %v1604
      %v1621 = vpack.c.b16 %v1607, %v1606
      %v1622 = vpack.c.b16 %v1609, %v1608
      %v1623 = vpack.c.b16 %v1611, %v1610
      %v1624 = vpack.c.b16 %v1613, %v1612
      %v1625 = vpack.c.b16 %v1615, %v1614
      %v1626 = vpack.c.b16 %v1617, %v1616
      %v1627 = vpack.c.b16 %v1619, %v1618
      %1636 = vmatprep.subr.bf16.mxu0 0
      %1637 = vmatpush1.bf16.msra.mxu0 %v1620
      %1638 = vmatprep.subr.bf16.mxu0 0
      %1639 = vmatpush1.bf16.msra.mxu0 %v1621
      %1640 = vmatprep.subr.bf16.mxu0 0
      %1641 = vmatpush1.bf16.msra.mxu0 %v1622
      %1642 = vmatprep.subr.bf16.mxu0 0
      %1643 = vmatpush1.bf16.msra.mxu0 %v1623
      %1644 = vmatprep.subr.bf16.mxu0 0
      %1645 = vmatpush1.bf16.msra.mxu0 %v1624
      %1646 = vmatprep.subr.bf16.mxu0 0
      %1647 = vmatpush1.bf16.msra.mxu0 %v1625
      %1648 = vmatprep.subr.bf16.mxu0 0
      %1649 = vmatpush1.bf16.msra.mxu0 %v1626
      %1650 = vmatprep.subr.bf16.mxu0 0
      %1651 = vmatpush1.bf16.msra.mxu0 %v1627
      %1652 = vmatprep.subr.bf16.mxu0 0
      %1653 = vmatpush1.bf16.msra.mxu0 0
      %1654 = vmatprep.subr.bf16.mxu0 0
      %1655 = vmatpush1.bf16.msra.mxu0 0
      %1656 = vmatprep.subr.bf16.mxu0 0
      %1657 = vmatpush1.bf16.msra.mxu0 0
      %1658 = vmatprep.subr.bf16.mxu0 0
      %1659 = vmatpush1.bf16.msra.mxu0 0
      %1660 = vmatprep.subr.bf16.mxu0 0
      %1661 = vmatpush1.bf16.msra.mxu0 0
      %1662 = vmatprep.subr.bf16.mxu0 0
      %1663 = vmatpush1.bf16.msra.mxu0 0
      %1664 = vmatprep.subr.bf16.mxu0 0
      %1665 = vmatpush1.bf16.msra.mxu0 0
      %1666 = vmatprep.subr.bf16.mxu0 0
      %1667 = vmatpush1.bf16.msra.mxu0 0
      %1668 = vmatprep.mubr.bf16.mxu0 0
      %1669 = vmatmul.mubr.bf16.gmra.mrb[0].mxu0 %v795
      %v1670 = vpop.f32.mrb[0].mxu0
      %v1671 = vadd.f32 0.0, %v1670
      %v1672 = vpop.f32.mrb[0].mxu0
      %v1673 = vpop.f32.mrb[0].mxu0
      %v1674 = vadd.f32 0.0, %v1673
      %v1675 = vpop.f32.mrb[0].mxu0
      %1676 = vmatprep.mubr.bf16.mxu0 0
      %1677 = vmatmul.mubr.bf16.gmra.mrb[0].mxu0 %v796
      %v1678 = vpop.f32.mrb[0].mxu0
      %v1679 = vadd.f32 0.0, %v1678
      %v1680 = vpop.f32.mrb[0].mxu0
      %v1681 = vpop.f32.mrb[0].mxu0
      %v1682 = vadd.f32 0.0, %v1681
      %v1683 = vpop.f32.mrb[0].mxu0
      %1684 = vmatprep.mubr.bf16.mxu0 0
      %1685 = vmatmul.mubr.bf16.gmra.mrb[0].mxu0 %v797
      %v1686 = vpop.f32.mrb[0].mxu0
      %v1687 = vadd.f32 0.0, %v1686
      %v1688 = vpop.f32.mrb[0].mxu0
      %v1689 = vpop.f32.mrb[0].mxu0
      %v1690 = vadd.f32 0.0, %v1689
      %v1691 = vpop.f32.mrb[0].mxu0
      %1692 = vmatprep.mubr.bf16.mxu0 0
      %1693 = vmatmul.mubr.bf16.gmra.mrb[0].mxu0 %v1586
      %v1694 = vpop.f32.mrb[0].mxu0
      %v1695 = vadd.f32 0.0, %v1694
      %v1696 = vpop.f32.mrb[0].mxu0
      %v1697 = vpop.f32.mrb[0].mxu0
      %v1698 = vadd.f32 0.0, %v1697
      %v1699 = vpop.f32.mrb[0].mxu0
      %1700 = vdwg.mxu0
      %v1701 = vadd.f32 %v1559, %v1671
      %v1702 = vadd.f32 %v1560, %v1674
      %v1703 = vadd.f32 %v1561, %v1679
      %v1704 = vadd.f32 %v1562, %v1682
      %v1705 = vadd.f32 %v1563, %v1687
      %v1706 = vadd.f32 %v1564, %v1690
      %v1707 = vadd.f32 %v1565, %v1695
      %v1708 = vadd.f32 %v1566, %v1698
      %v1709 = vunpack.c.h.b16 %v476
      %v1710 = vpack.c.b16 %v1585, %v1585
      %v1711 = vpack.c.b16 %v1709, %v1709
      %v1713 = vshrl.u32 %v1710, 16
      %v1715 = vrot.slane %v1713, 4
      %v1716 = vshll.u32 %v1710, 16
      %v1718 = vrot.slane %v1716, 5
      %v1719 = vor.u32 %v1715, %v1718
      %v1720 = vrot.slane %v1719, 4
      %v1722 = vshll.u32 %v1711, 16
      %v1724 = vrot.slane %v1722, 5
      %v1725 = vsel %vm535, %v1720, %v1724
      %s1726 = scalar_lea.vmem %s324, 448
      %v1727 = vld [vmem:[%s1726] sm:$0xf]
      %v1728 = vld [vmem:[%s1726 + $0x4] sm:$0xf]
      %v1729 = vld [vmem:[%s1726 + $0x8] sm:$0xf]
      %v1730 = vld [vmem:[%s1726 + $0xc] sm:$0xf]
      %v1731 = vld [vmem:[%s1726 + $0x10] sm:$0xf]
      %v1732 = vld [vmem:[%s1726 + $0x14] sm:$0xf]
      %v1733 = vld [vmem:[%s1726 + $0x18] sm:$0xf]
      %v1734 = vld [vmem:[%s1726 + $0x1c] sm:$0xf]
      %v1735 = vld [vmem:[%s1726 + $0x20] sm:$0xf]
      %v1736 = vld [vmem:[%s1726 + $0x24] sm:$0xf]
      %v1737 = vld [vmem:[%s1726 + $0x28] sm:$0xf]
      %v1738 = vld [vmem:[%s1726 + $0x2c] sm:$0xf]
      %v1739 = vld [vmem:[%s1726 + $0x30] sm:$0xf]
      %v1740 = vld [vmem:[%s1726 + $0x34] sm:$0xf]
      %v1741 = vld [vmem:[%s1726 + $0x38] sm:$0xf]
      %v1742 = vld [vmem:[%s1726 + $0x3c] sm:$0xf]
      %v1743 = vunpack.c.l.b16 %v1725
      %v1744 = vpack.c.b16 %v1743, %v1286
      %v1762 = vunpack.c.l.b16 %v1727
      %v1763 = vunpack.c.l.b16 %v1728
      %v1764 = vunpack.c.l.b16 %v1729
      %v1765 = vunpack.c.l.b16 %v1730
      %v1766 = vunpack.c.l.b16 %v1731
      %v1767 = vunpack.c.l.b16 %v1732
      %v1768 = vunpack.c.l.b16 %v1733
      %v1769 = vunpack.c.l.b16 %v1734
      %v1770 = vunpack.c.l.b16 %v1735
      %v1771 = vunpack.c.l.b16 %v1736
      %v1772 = vunpack.c.l.b16 %v1737
      %v1773 = vunpack.c.l.b16 %v1738
      %v1774 = vunpack.c.l.b16 %v1739
      %v1775 = vunpack.c.l.b16 %v1740
      %v1776 = vunpack.c.l.b16 %v1741
      %v1777 = vunpack.c.l.b16 %v1742
      %v1778 = vpack.c.b16 %v1763, %v1762
      %v1779 = vpack.c.b16 %v1765, %v1764
      %v1780 = vpack.c.b16 %v1767, %v1766
      %v1781 = vpack.c.b16 %v1769, %v1768
      %v1782 = vpack.c.b16 %v1771, %v1770
      %v1783 = vpack.c.b16 %v1773, %v1772
      %v1784 = vpack.c.b16 %v1775, %v1774
      %v1785 = vpack.c.b16 %v1777, %v1776
      %1794 = vmatprep.subr.bf16.mxu0 0
      %1795 = vmatpush1.bf16.msra.mxu0 %v1778
      %1796 = vmatprep.subr.bf16.mxu0 0
      %1797 = vmatpush1.bf16.msra.mxu0 %v1779
      %1798 = vmatprep.subr.bf16.mxu0 0
      %1799 = vmatpush1.bf16.msra.mxu0 %v1780
      %1800 = vmatprep.subr.bf16.mxu0 0
      %1801 = vmatpush1.bf16.msra.mxu0 %v1781
      %1802 = vmatprep.subr.bf16.mxu0 0
      %1803 = vmatpush1.bf16.msra.mxu0 %v1782
      %1804 = vmatprep.subr.bf16.mxu0 0
      %1805 = vmatpush1.bf16.msra.mxu0 %v1783
      %1806 = vmatprep.subr.bf16.mxu0 0
      %1807 = vmatpush1.bf16.msra.mxu0 %v1784
      %1808 = vmatprep.subr.bf16.mxu0 0
      %1809 = vmatpush1.bf16.msra.mxu0 %v1785
      %1810 = vmatprep.subr.bf16.mxu0 0
      %1811 = vmatpush1.bf16.msra.mxu0 0
      %1812 = vmatprep.subr.bf16.mxu0 0
      %1813 = vmatpush1.bf16.msra.mxu0 0
      %1814 = vmatprep.subr.bf16.mxu0 0
      %1815 = vmatpush1.bf16.msra.mxu0 0
      %1816 = vmatprep.subr.bf16.mxu0 0
      %1817 = vmatpush1.bf16.msra.mxu0 0
      %1818 = vmatprep.subr.bf16.mxu0 0
      %1819 = vmatpush1.bf16.msra.mxu0 0
      %1820 = vmatprep.subr.bf16.mxu0 0
      %1821 = vmatpush1.bf16.msra.mxu0 0
      %1822 = vmatprep.subr.bf16.mxu0 0
      %1823 = vmatpush1.bf16.msra.mxu0 0
      %1824 = vmatprep.subr.bf16.mxu0 0
      %1825 = vmatpush1.bf16.msra.mxu0 0
      %1826 = vmatprep.mubr.bf16.mxu0 0
      %1827 = vmatmul.mubr.bf16.gmra.mrb[0].mxu0 %v674
      %v1828 = vpop.f32.mrb[0].mxu0
      %v1829 = vadd.f32 0.0, %v1828
      %v1830 = vpop.f32.mrb[0].mxu0
      %v1831 = vpop.f32.mrb[0].mxu0
      %v1832 = vadd.f32 0.0, %v1831
      %v1833 = vpop.f32.mrb[0].mxu0
      %1834 = vmatprep.mubr.bf16.mxu0 0
      %1835 = vmatmul.mubr.bf16.gmra.mrb[0].mxu0 %v675
      %v1836 = vpop.f32.mrb[0].mxu0
      %v1837 = vadd.f32 0.0, %v1836
      %v1838 = vpop.f32.mrb[0].mxu0
      %v1839 = vpop.f32.mrb[0].mxu0
      %v1840 = vadd.f32 0.0, %v1839
      %v1841 = vpop.f32.mrb[0].mxu0
      %1842 = vmatprep.mubr.bf16.mxu0 0
      %1843 = vmatmul.mubr.bf16.gmra.mrb[0].mxu0 %v676
      %v1844 = vpop.f32.mrb[0].mxu0
      %v1845 = vadd.f32 0.0, %v1844
      %v1846 = vpop.f32.mrb[0].mxu0
      %v1847 = vpop.f32.mrb[0].mxu0
      %v1848 = vadd.f32 0.0, %v1847
      %v1849 = vpop.f32.mrb[0].mxu0
      %1850 = vmatprep.mubr.bf16.mxu0 0
      %1851 = vmatmul.mubr.bf16.gmra.mrb[0].mxu0 %v1744
      %v1852 = vpop.f32.mrb[0].mxu0
      %v1853 = vadd.f32 0.0, %v1852
      %v1854 = vpop.f32.mrb[0].mxu0
      %v1855 = vpop.f32.mrb[0].mxu0
      %v1856 = vadd.f32 0.0, %v1855
      %v1857 = vpop.f32.mrb[0].mxu0
      %1858 = vdwg.mxu0
      %v1859 = vadd.f32 %v1701, %v1829
      %v1860 = vadd.f32 %v1702, %v1832
      %v1861 = vadd.f32 %v1703, %v1837
      %v1862 = vadd.f32 %v1704, %v1840
      %v1863 = vadd.f32 %v1705, %v1845
      %v1864 = vadd.f32 %v1706, %v1848
      %v1865 = vadd.f32 %v1707, %v1853
      %v1866 = vadd.f32 %v1708, %v1856
      %v1867 = vrot.slane %v1710, 5
      %v1868 = vrot.slane %v1867, 4
      %v1869 = vrot.slane %v1711, 5
      %v1870 = vsel %vm917, %v1868, %v1869
      %s1871 = scalar_lea.vmem %s324, 512
      %v1872 = vld [vmem:[%s1871] sm:$0xf]
      %v1873 = vld [vmem:[%s1871 + $0x4] sm:$0xf]
      %v1874 = vld [vmem:[%s1871 + $0x8] sm:$0xf]
      %v1875 = vld [vmem:[%s1871 + $0xc] sm:$0xf]
      %v1876 = vld [vmem:[%s1871 + $0x10] sm:$0xf]
      %v1877 = vld [vmem:[%s1871 + $0x14] sm:$0xf]
      %v1878 = vld [vmem:[%s1871 + $0x18] sm:$0xf]
      %v1879 = vld [vmem:[%s1871 + $0x1c] sm:$0xf]
      %v1880 = vld [vmem:[%s1871 + $0x20] sm:$0xf]
      %v1881 = vld [vmem:[%s1871 + $0x24] sm:$0xf]
      %v1882 = vld [vmem:[%s1871 + $0x28] sm:$0xf]
      %v1883 = vld [vmem:[%s1871 + $0x2c] sm:$0xf]
      %v1884 = vld [vmem:[%s1871 + $0x30] sm:$0xf]
      %v1885 = vld [vmem:[%s1871 + $0x34] sm:$0xf]
      %v1886 = vld [vmem:[%s1871 + $0x38] sm:$0xf]
      %v1887 = vld [vmem:[%s1871 + $0x3c] sm:$0xf]
      %v1888 = vunpack.c.l.b16 %v1870
      %v1889 = vpack.c.b16 %v1888, %v1437
      %v1907 = vunpack.c.l.b16 %v1872
      %v1908 = vunpack.c.l.b16 %v1873
      %v1909 = vunpack.c.l.b16 %v1874
      %v1910 = vunpack.c.l.b16 %v1875
      %v1911 = vunpack.c.l.b16 %v1876
      %v1912 = vunpack.c.l.b16 %v1877
      %v1913 = vunpack.c.l.b16 %v1878
      %v1914 = vunpack.c.l.b16 %v1879
      %v1915 = vunpack.c.l.b16 %v1880
      %v1916 = vunpack.c.l.b16 %v1881
      %v1917 = vunpack.c.l.b16 %v1882
      %v1918 = vunpack.c.l.b16 %v1883
      %v1919 = vunpack.c.l.b16 %v1884
      %v1920 = vunpack.c.l.b16 %v1885
      %v1921 = vunpack.c.l.b16 %v1886
      %v1922 = vunpack.c.l.b16 %v1887
      %v1923 = vpack.c.b16 %v1908, %v1907
      %v1924 = vpack.c.b16 %v1910, %v1909
      %v1925 = vpack.c.b16 %v1912, %v1911
      %v1926 = vpack.c.b16 %v1914, %v1913
      %v1927 = vpack.c.b16 %v1916, %v1915
      %v1928 = vpack.c.b16 %v1918, %v1917
      %v1929 = vpack.c.b16 %v1920, %v1919
      %v1930 = vpack.c.b16 %v1922, %v1921
      %1939 = vmatprep.subr.bf16.mxu0 0
      %1940 = vmatpush1.bf16.msra.mxu0 %v1923
      %1941 = vmatprep.subr.bf16.mxu0 0
      %1942 = vmatpush1.bf16.msra.mxu0 %v1924
      %1943 = vmatprep.subr.bf16.mxu0 0
      %1944 = vmatpush1.bf16.msra.mxu0 %v1925
      %1945 = vmatprep.subr.bf16.mxu0 0
      %1946 = vmatpush1.bf16.msra.mxu0 %v1926
      %1947 = vmatprep.subr.bf16.mxu0 0
      %1948 = vmatpush1.bf16.msra.mxu0 %v1927
      %1949 = vmatprep.subr.bf16.mxu0 0
      %1950 = vmatpush1.bf16.msra.mxu0 %v1928
      %1951 = vmatprep.subr.bf16.mxu0 0
      %1952 = vmatpush1.bf16.msra.mxu0 %v1929
      %1953 = vmatprep.subr.bf16.mxu0 0
      %1954 = vmatpush1.bf16.msra.mxu0 %v1930
      %1955 = vmatprep.subr.bf16.mxu0 0
      %1956 = vmatpush1.bf16.msra.mxu0 0
      %1957 = vmatprep.subr.bf16.mxu0 0
      %1958 = vmatpush1.bf16.msra.mxu0 0
      %1959 = vmatprep.subr.bf16.mxu0 0
      %1960 = vmatpush1.bf16.msra.mxu0 0
      %1961 = vmatprep.subr.bf16.mxu0 0
      %1962 = vmatpush1.bf16.msra.mxu0 0
      %1963 = vmatprep.subr.bf16.mxu0 0
      %1964 = vmatpush1.bf16.msra.mxu0 0
      %1965 = vmatprep.subr.bf16.mxu0 0
      %1966 = vmatpush1.bf16.msra.mxu0 0
      %1967 = vmatprep.subr.bf16.mxu0 0
      %1968 = vmatpush1.bf16.msra.mxu0 0
      %1969 = vmatprep.subr.bf16.mxu0 0
      %1970 = vmatpush1.bf16.msra.mxu0 0
      %1971 = vmatprep.mubr.bf16.mxu0 0
      %1972 = vmatmul.mubr.bf16.gmra.mrb[0].mxu0 %v976
      %v1973 = vpop.f32.mrb[0].mxu0
      %v1974 = vadd.f32 0.0, %v1973
      %v1975 = vpop.f32.mrb[0].mxu0
      %v1976 = vpop.f32.mrb[0].mxu0
      %v1977 = vadd.f32 0.0, %v1976
      %v1978 = vpop.f32.mrb[0].mxu0
      %1979 = vmatprep.mubr.bf16.mxu0 0
      %1980 = vmatmul.mubr.bf16.gmra.mrb[0].mxu0 %v977
      %v1981 = vpop.f32.mrb[0].mxu0
      %v1982 = vadd.f32 0.0, %v1981
      %v1983 = vpop.f32.mrb[0].mxu0
      %v1984 = vpop.f32.mrb[0].mxu0
      %v1985 = vadd.f32 0.0, %v1984
      %v1986 = vpop.f32.mrb[0].mxu0
      %1987 = vmatprep.mubr.bf16.mxu0 0
      %1988 = vmatmul.mubr.bf16.gmra.mrb[0].mxu0 %v978
      %v1989 = vpop.f32.mrb[0].mxu0
      %v1990 = vadd.f32 0.0, %v1989
      %v1991 = vpop.f32.mrb[0].mxu0
      %v1992 = vpop.f32.mrb[0].mxu0
      %v1993 = vadd.f32 0.0, %v1992
      %v1994 = vpop.f32.mrb[0].mxu0
      %1995 = vmatprep.mubr.bf16.mxu0 0
      %1996 = vmatmul.mubr.bf16.gmra.mrb[0].mxu0 %v1889
      %v1997 = vpop.f32.mrb[0].mxu0
      %v1998 = vadd.f32 0.0, %v1997
      %v1999 = vpop.f32.mrb[0].mxu0
      %v2000 = vpop.f32.mrb[0].mxu0
      %v2001 = vadd.f32 0.0, %v2000
      %v2002 = vpop.f32.mrb[0].mxu0
      %2003 = vdwg.mxu0
      %v2004 = vadd.f32 %v1859, %v1974
      %v2005 = vadd.f32 %v1860, %v1977
      %v2006 = vadd.f32 %v1861, %v1982
      %v2007 = vadd.f32 %v1862, %v1985
      %v2008 = vadd.f32 %v1863, %v1990
      %v2009 = vadd.f32 %v1864, %v1993
      %v2010 = vadd.f32 %v1865, %v1998
      %v2011 = vadd.f32 %v1866, %v2001
      %v2012 = vpack.c.bf16 %v2004, %v2004
      %v2013 = vpack.c.bf16 %v2005, %v2005
      %v2014 = vpack.c.bf16 %v2006, %v2006
      %v2015 = vpack.c.bf16 %v2007, %v2007
      %v2016 = vpack.c.bf16 %v2008, %v2008
      %v2017 = vpack.c.bf16 %v2009, %v2009
      %v2018 = vpack.c.bf16 %v2010, %v2010
      %v2019 = vpack.c.bf16 %v2011, %v2011
      %2020 = vst [vmem:[%s336] sm:$0xf] %v2012
      %2021 = vst [vmem:[%s336 + $0x4] sm:$0xf] %v2013
      %2022 = vst [vmem:[%s336 + $0x8] sm:$0xf] %v2014
      %2023 = vst [vmem:[%s336 + $0xc] sm:$0xf] %v2015
      %2024 = vst [vmem:[%s336 + $0x10] sm:$0xf] %v2016
      %2025 = vst [vmem:[%s336 + $0x14] sm:$0xf] %v2017
      %2026 = vst [vmem:[%s336 + $0x18] sm:$0xf] %v2018
      %2027 = vst [vmem:[%s336 + $0x1c] sm:$0xf] %v2019
      %v2028 = vadd.f32 %v2004, %v2005
      %v2029 = vadd.f32 %v2028, %v2006
      %v2030 = vadd.f32 %v2029, %v2007
      %v2031 = vadd.f32 %v2030, %v2008
      %v2032 = vadd.f32 %v2031, %v2009
      %v2033 = vadd.f32 %v2032, %v2010
      %v2034 = vadd.f32 %v2033, %v2011
      %v2035 = vrot.slane %v2034, 4
      %v2036 = vadd.f32 %v2034, %v2035
      %v2037 = vrot.slane %v2036, 2
      %v2038 = vadd.f32 %v2036, %v2037
      %v2039 = vrot.slane %v2038, 1
      %v2040 = vadd.f32 %v2038, %v2039
      %2041 = vst [vmem:[%s346] sm:$0x1] %v2040
      %v2042 = vmul.f32 %v2004, %v2004
      %v2043 = vmul.f32 %v2005, %v2005
      %v2044 = vmul.f32 %v2006, %v2006
      %v2045 = vmul.f32 %v2007, %v2007
      %v2046 = vmul.f32 %v2008, %v2008
      %v2047 = vmul.f32 %v2009, %v2009
      %v2048 = vmul.f32 %v2010, %v2010
      %v2049 = vmul.f32 %v2011, %v2011
      %v2050 = vadd.f32 %v2042, %v2043
      %v2051 = vadd.f32 %v2050, %v2044
      %v2052 = vadd.f32 %v2051, %v2045
      %v2053 = vadd.f32 %v2052, %v2046
      %v2054 = vadd.f32 %v2053, %v2047
      %v2055 = vadd.f32 %v2054, %v2048
      %v2056 = vadd.f32 %v2055, %v2049
      %v2057 = vrot.slane %v2056, 4
      %v2058 = vadd.f32 %v2056, %v2057
      %v2059 = vrot.slane %v2058, 2
      %v2060 = vadd.f32 %v2058, %v2059
      %v2061 = vrot.slane %v2060, 1
      %v2062 = vadd.f32 %v2060, %v2061
      %2063 = vst [vmem:[%s355] sm:$0x1] %v2062
      %s2064 = smul.u32 8, %s25
      %p2065 = scmp.lt.s32.totalorder %s24, 1
      %s2066 = scalar_select %p2065, %s24, 1
      %p2067 = scmp.lt.s32.totalorder %s2064, 7
      %s2068 = scalar_select %p2067, %s2064, 7
      %p2069 = scmp.lt.s32.totalorder %s23, 0
      %s2070 = scalar_select %p2069, %s23, 0
      %s2071 = sadd.s32 %s2070, %s2068
      %s2072 = smul.addr %s2066, 8
      %s2073 = sadd.s32 %s2071, %s2072
      %s2074 = smul.addr %s2073, 4
      %s2075 = scalar_lea.vmem %s4, %s2074
      %p2076 = scmp.lt.s32.totalorder %s24, 1
      %s2077 = scalar_select %p2076, %s24, 1
      %p2078 = scmp.lt.s32.totalorder %s25, 0
      %s2079 = scalar_select %p2078, %s25, 0
      %p2080 = scmp.lt.s32.totalorder %s23, 0
      %s2081 = scalar_select %p2080, %s23, 0
      %s2082 = sadd.s32 %s2081, %s2079
      %s2083 = sadd.s32 %s2082, %s2077
      %s2084 = scalar_lea.vmem %s5, %s2083
      %p2085 = scmp.lt.s32.totalorder %s24, 1
      %s2086 = scalar_select %p2085, %s24, 1
      %p2087 = scmp.lt.s32.totalorder %s25, 0
      %s2088 = scalar_select %p2087, %s25, 0
      %p2089 = scmp.lt.s32.totalorder %s23, 0
      %s2090 = scalar_select %p2089, %s23, 0
      %s2091 = sadd.s32 %s2090, %s2088
      %s2092 = sadd.s32 %s2091, %s2086
      %s2093 = scalar_lea.vmem %s6, %s2092
      // Predicated region
      $region41: #{p4m_basic_block_fwd.5} parent=35 // pred_check
        %p2094 = pneg %p153
      $region42: #{p4m_basic_block_fwd.5} parent=35 // pred_check_branch
        %2096 = sbr.rel (%p2094) target = $region44
      $region43: #{p4m_basic_block_fwd.5} parent=35 // pred_region
        %s2097 = smul.u32 8, %s25
      $region44: #{p4m_basic_block_fwd.5} parent=35 // pred_fallthru
        _
      // Predicated region
      $region45: #{p4m_basic_block_fwd.5} parent=35 // pred_check
        %p2098 = pneg %p183
      $region46: #{p4m_basic_block_fwd.5} parent=35 // pred_check_branch
        %2100 = sbr.rel (%p2098) target = $region48
      $region47: #{p4m_basic_block_fwd.5} parent=35 // pred_region
        _
      $region48: #{p4m_basic_block_fwd.5} parent=35 // pred_fallthru
        _
      // Predicated region
      $region49: #{p4m_basic_block_fwd.5} parent=35 // pred_check
        %p2101 = pneg %p213
      $region50: #{p4m_basic_block_fwd.5} parent=35 // pred_check_branch
        %2103 = sbr.rel (%p2101) target = $region52
      $region51: #{p4m_basic_block_fwd.5} parent=35 // pred_region
        _
      $region52: #{p4m_basic_block_fwd.5} parent=35 // pred_fallthru
        _
    $region36: #{p4m_basic_block_fwd.5} parent=5 // pred_fallthru
      _
    %p2104 = scmp.le.s32.totalorder 2, %s13
    // Predicated region
    $region53: #{p4m_basic_block_fwd.5} parent=5 // pred_check
      %p2105 = pneg %p2104
    $region54: #{p4m_basic_block_fwd.5} parent=5 // pred_check_branch
      %2107 = sbr.rel (%p2105) target = $region56
    $region55: #{p4m_basic_block_fwd.5} parent=5 // pred_region
      %s2108 = ssub.s32 %s13, 2
      // Predicated region
      $region57: #{p4m_basic_block_fwd.5} parent=55 // pred_check
        %p2109 = pneg %p159
      $region58: #{p4m_basic_block_fwd.5} parent=55 // pred_check_branch
        %2111 = sbr.rel (%p2109) target = $region60
      $region59: #{p4m_basic_block_fwd.5} parent=55 // pred_region
        %s2112 = smul.u32 8, %s28
        %p2113 = scmp.lt.s32.totalorder %s27, 1
        %s2114 = scalar_select %p2113, %s27, 1
        %p2115 = scmp.lt.s32.totalorder %s2112, 7
        %s2116 = scalar_select %p2115, %s2112, 7
        %p2117 = scmp.lt.s32.totalorder %s26, 0
        %s2118 = scalar_select %p2117, %s26, 0
        %s2119 = sadd.s32 %s2118, %s2116
        %s2120 = smul.addr %s2114, 8
        %s2121 = sadd.s32 %s2119, %s2120
        %s2122 = smul.addr %s2121, 4
        %s2123 = scalar_lea.vmem %s4, %s2122
      $region60: #{p4m_basic_block_fwd.5} parent=55 // pred_fallthru
        _
      // Predicated region
      $region61: #{p4m_basic_block_fwd.5} parent=55 // pred_check
        %p2124 = pneg %p189
      $region62: #{p4m_basic_block_fwd.5} parent=55 // pred_check_branch
        %2126 = sbr.rel (%p2124) target = $region64
      $region63: #{p4m_basic_block_fwd.5} parent=55 // pred_region
        %p2127 = scmp.lt.s32.totalorder %s27, 1
        %s2128 = scalar_select %p2127, %s27, 1
        %p2129 = scmp.lt.s32.totalorder %s28, 0
        %s2130 = scalar_select %p2129, %s28, 0
        %p2131 = scmp.lt.s32.totalorder %s26, 0
        %s2132 = scalar_select %p2131, %s26, 0
        %s2133 = sadd.s32 %s2132, %s2130
        %s2134 = sadd.s32 %s2133, %s2128
        %s2135 = scalar_lea.vmem %s5, %s2134
      $region64: #{p4m_basic_block_fwd.5} parent=55 // pred_fallthru
        _
      // Predicated region
      $region65: #{p4m_basic_block_fwd.5} parent=55 // pred_check
        %p2136 = pneg %p219
      $region66: #{p4m_basic_block_fwd.5} parent=55 // pred_check_branch
        %2138 = sbr.rel (%p2136) target = $region68
      $region67: #{p4m_basic_block_fwd.5} parent=55 // pred_region
        %p2139 = scmp.lt.s32.totalorder %s27, 1
        %s2140 = scalar_select %p2139, %s27, 1
        %p2141 = scmp.lt.s32.totalorder %s28, 0
        %s2142 = scalar_select %p2141, %s28, 0
        %p2143 = scmp.lt.s32.totalorder %s26, 0
        %s2144 = scalar_select %p2143, %s26, 0
        %s2145 = sadd.s32 %s2144, %s2142
        %s2146 = sadd.s32 %s2145, %s2140
        %s2147 = scalar_lea.vmem %s6, %s2146
      $region68: #{p4m_basic_block_fwd.5} parent=55 // pred_fallthru
        _
    $region56: #{p4m_basic_block_fwd.5} parent=5 // pred_fallthru
      _
  $region6: #{p4m_basic_block_fwd.5} parent=0 // loop_footer
    %s17 = sadd.s32 1, %s13
  $region7: #{p4m_basic_block_fwd.5} parent=0 // loop_footer_branch
    %12 = sbr.rel target = $region3
  $region8: #{p4m_basic_block_fwd.5} parent=0 // loop_exit
    _

</llo_original>
